<compile_context>
chip_gen: v7x
topology: tpu7x:2x2x1
jax: 0.10.0
libtpu: 0.0.40
codegen_flags: <defaults>
</compile_context>

<pallas_src>
import math
from functools import partial

import jax
import jax.numpy as jnp
from jax import lax
from jax.experimental import pallas as pl
from jax.experimental.pallas import tpu as pltpu


# ----------------------------- small helpers --------------------------------

_VMEM_BUDGET_CACHE = None


def _vmem_budget():
    """Generation-aware VMEM budget (v7x TC: 64 MiB, v5e/v6e: 128 MiB)."""
    global _VMEM_BUDGET_CACHE
    if _VMEM_BUDGET_CACHE is None:
        try:
            phys = int(pltpu.get_tpu_info().vmem_capacity_bytes)
        except Exception:
            phys = 64 * 1024 * 1024            # conservative (v7x per-TC VMEM)
        _VMEM_BUDGET_CACHE = min(phys * 3 // 4, 96 * 1024 * 1024)
    return _VMEM_BUDGET_CACHE


def _compiler_params(ndims):
    return pltpu.CompilerParams(
        dimension_semantics=("parallel",) * ndims,   # feed both v7x TCs
        vmem_limit_bytes=_vmem_budget())


def _activate(acc, act):
    if act == "leaky_relu":
        return jnp.where(acc >= 0.0, acc, 0.01 * acc)
    if act == "tanh":
        return jnp.tanh(acc)
    return acc


def _cout_tile(cout):
    # lane-dense 128-wide output tiles when Cout is large; otherwise one tile
    if cout > 128 and cout % 128 == 0:
        return 128
    return cout


def _pick_tile_h(oh, est_fn, max_tile_h=None):
    """Largest row tile dividing `oh` whose estimated VMEM footprint fits."""
    cap = min(oh, 128 if max_tile_h is None else max_tile_h)
    budget = int(0.6 * _vmem_budget())
    cands = [d for d in range(cap, 0, -1)
             if oh % d == 0 and (d % 8 == 0 or d == oh or d < 8)]
    for d in cands:
        if est_fn(d) <= budget:
            return d
    return cands[-1]


def _lerp_matrix(n_src, n_out, pad=False):
    """Dense 1-D 2x bilinear (align_corners=True) interpolation matrix.
    pad=True adds a zero row at both ends (doubles as conv zero padding)."""
    rows = n_out + 2 if pad else n_out
    off = 1 if pad else 0
    m = [[0.0] * n_src for _ in range(rows)]
    for r in range(n_out):
        src = 0.0 if n_out <= 1 else r * (n_src - 1) / (n_out - 1)
        lo = min(int(math.floor(src)), n_src - 1)
        hi = min(lo + 1, n_src - 1)
        f = src - lo
        m[r + off][lo] += 1.0 - f
        m[r + off][hi] += f
    return jnp.asarray(m, jnp.float32)


def _h_taps_padded(n_src, n_out):
    """Per padded-output-row 2-tap H-upsample tables (align_corners=True).
    Rows 0 and n_out+1 have zero weights and act as the conv's zero padding."""
    lo = [0] * (n_out + 2)
    hi = [0] * (n_out + 2)
    wlo = [0.0] * (n_out + 2)
    whi = [0.0] * (n_out + 2)
    for r in range(n_out):
        src = 0.0 if n_out <= 1 else r * (n_src - 1) / (n_out - 1)
        l = min(int(math.floor(src)), n_src - 1)
        u = min(l + 1, n_src - 1)
        f = src - l
        lo[r + 1], hi[r + 1], wlo[r + 1], whi[r + 1] = l, u, 1.0 - f, f
    return (jnp.asarray(lo, jnp.int32), jnp.asarray(hi, jnp.int32),
            jnp.asarray(wlo, jnp.float32), jnp.asarray(whi, jnp.float32))


def _upsample2x_ref(x):
    """XLA (non-Pallas) bilinear 2x upsample, align_corners=True, NHWC f32."""
    _, h, w, _ = x.shape
    ry = _lerp_matrix(h, 2 * h)
    rx = _lerp_matrix(w, 2 * w)
    x = jnp.einsum("Oh,bhwc->bOwc", ry, x.astype(jnp.float32))
    return jnp.einsum("Pw,bOwc->bOPc", rx, x)


# ----------------------------- kernel bodies ---------------------------------

def _conv_core(xpad, w_ref, b_ref, o_ref, *, act):
    """3x3 valid conv on an already zero-padded bf16 tile.

    xpad : (tileH+2, W+2, Cin) bf16
    w_ref: (9*Cin, Cout_tile) bf16, row order (tap, cin), tap = 3*dy + dx
    b_ref: (1, Cout_tile) f32
    o_ref: (1, tileH, W, Cout_tile)
    """
    hp, wp, cin = xpad.shape
    h, w = hp - 2, wp - 2
    cout = o_ref.shape[-1]
    if cin >= 128:
        # K = Cin already fills the MXU: nine K=Cin dots, no 9x patch in VMEM.
        acc = jnp.zeros((h * w, cout), jnp.float32)
        for dy in range(3):
            for dx in range(3):
                t = 3 * dy + dx
                p = xpad[dy:dy + h, dx:dx + w, :].reshape(h * w, cin)
                acc = acc + jnp.dot(p, w_ref[t * cin:(t + 1) * cin, :],
                                    preferred_element_type=jnp.float32)
    else:
        # small Cin: fold the nine taps into the contraction dim (K = 9*Cin)
        taps = [xpad[dy:dy + h, dx:dx + w, :]
                for dy in range(3) for dx in range(3)]
        patch = jnp.concatenate(taps, axis=-1).reshape(h * w, 9 * cin)
        acc = jnp.dot(patch, w_ref[...], preferred_element_type=jnp.float32)
    acc = _activate(acc + b_ref[...], act)
    o_ref[0] = acc.reshape(h, w, cout).astype(o_ref.dtype)


def _halo_rows(xm_ref, xt_ref, xb_ref):
    """(tileH+2, W, Cin) tile with one-row halos; halo rows falling outside the
    image are zeroed in-kernel (they are the conv's zero padding)."""
    i = pl.program_id(2)
    nh = pl.num_programs(2)
    dt = xm_ref.dtype
    top = xt_ref[0] * (i > 0).astype(dt)
    bot = xb_ref[0] * (i < nh - 1).astype(dt)
    return jnp.concatenate([top, xm_ref[0], bot], axis=0)


def _pad_w(x):
    hp, _, c = x.shape
    z = jnp.zeros((hp, 1, c), x.dtype)
    return jnp.concatenate([z, x, z], axis=1)


def _conv3x3_kernel(xm_ref, xt_ref, xb_ref, w_ref, b_ref, o_ref, *, act):
    xh = _halo_rows(xm_ref, xt_ref, xb_ref)          # (tileH+2, W, Cin) bf16
    _conv_core(_pad_w(xh), w_ref, b_ref, o_ref, act=act)


def _up_cat_conv_kernel(lo_ref, hi_ref, wlo_ref, whi_ref,      # scalar prefetch
                        rx_ref, prev_ref, skm_ref, skt_ref, skb_ref,
                        w_ref, b_ref, o_ref, *, tile_h, act):
    """Fused: bilinear 2x upsample (align_corners=True) of `prev`, channel
    concat with the `skip` tile (skip first, matching torch.cat), 3x3 conv."""
    i = pl.program_id(2)
    # skip half: one-row halos + fused W zero padding (stays bf16, in VMEM)
    sk = _pad_w(_halo_rows(skm_ref, skt_ref, skb_ref))   # (Hp, OW+2, Csk)
    hp = sk.shape[0]
    # upsample half: per-row 2-tap H blend driven by SMEM tap tables, then one
    # (OW+2, w) MXU matmul per row for the W pass.  Zero rows of the tables /
    # W matrix double as the conv's zero padding.
    rx = rx_ref[...].astype(jnp.bfloat16)                # (OW+2, w)
    rows = []
    for r in range(hp):
        idx = i * tile_h + r                             # padded output row
        r_lo = prev_ref[0, pl.ds(lo_ref[idx], 1)]        # (1, w, Cup) bf16
        r_hi = prev_ref[0, pl.ds(hi_ref[idx], 1)]
        row = (r_lo * wlo_ref[idx] + r_hi * whi_ref[idx])[0]   # (w, Cup) f32
        up_r = jnp.dot(rx, row.astype(jnp.bfloat16),
                       preferred_element_type=jnp.float32)     # (OW+2, Cup)
        rows.append(up_r.astype(jnp.bfloat16)[None])
    up = jnp.concatenate(rows, axis=0)                   # (Hp, OW+2, Cup) bf16
    _conv_core(jnp.concatenate([sk, up], axis=-1), w_ref, b_ref, o_ref, act=act)


# ----------------------------- pallas_call wrappers --------------------------

def conv3x3(x, w, b, act, out_dtype, max_tile_h=None):
    """3x3 stride-1 pad-1 conv, NHWC.  w: (9*Cin, Cout) bf16, b: (1, Cout) f32."""
    B, H, W, Cin = x.shape
    Cout = w.shape[-1]
    assert w.shape[0] == 9 * Cin
    tC = _cout_tile(Cout)

    def est(th):
        m = th * W
        bts = 2 * (m * Cin * 2) + 4 * (W * Cin * 2)          # main + halo blocks
        bts += (th + 2) * (W + 2) * Cin * 2                  # padded tile
        if Cin < 128:
            bts += m * 9 * Cin * 2                           # im2col patch
        bts += m * tC * 4                                    # f32 acc
        bts += 2 * m * tC * jnp.dtype(out_dtype).itemsize    # out blocks
        bts += 2 * (9 * Cin * tC * 2 + tC * 4)               # weights + bias
        return bts

    th = _pick_tile_h(H, est, max_tile_h)
    grid = (B, Cout // tC, H // th)                          # H innermost
    return pl.pallas_call(
        partial(_conv3x3_kernel, act=act),
        out_shape=jax.ShapeDtypeStruct((B, H, W, Cout), out_dtype),
        grid=grid,
        in_specs=[
            pl.BlockSpec((1, th, W, Cin), lambda bb, j, i: (bb, i, 0, 0)),
            pl.BlockSpec((1, 1, W, Cin),
                         lambda bb, j, i: (bb, jnp.maximum(i * th - 1, 0), 0, 0)),
            pl.BlockSpec((1, 1, W, Cin),
                         lambda bb, j, i: (bb, jnp.minimum((i + 1) * th, H - 1), 0, 0)),
            pl.BlockSpec((9 * Cin, tC), lambda bb, j, i: (0, j)),
            pl.BlockSpec((1, tC), lambda bb, j, i: (0, j)),
        ],
        out_specs=pl.BlockSpec((1, th, W, tC), lambda bb, j, i: (bb, i, 0, j)),
        compiler_params=_compiler_params(3),
    )(x, x, x, w, b)


def up_cat_conv3x3(prev, skip, w, b, act, out_dtype, max_tile_h=None):
    """Fused Upsample(2x, bilinear, align_corners=True) -> cat((skip, up), C)
    -> Conv3x3 -> activation."""
    B, h, wsp, Cup = prev.shape
    Bs, OH, OW, Csk = skip.shape
    assert Bs == B and OH == 2 * h and OW == 2 * wsp
    Cin = Csk + Cup
    Cout = w.shape[-1]
    assert w.shape[0] == 9 * Cin
    tC = _cout_tile(Cout)
    lo, hi, wlo, whi = _h_taps_padded(h, OH)
    rx_pad = _lerp_matrix(wsp, OW, pad=True)                 # (OW+2, wsp) f32

    def est(th):
        m = th * OW
        bts = 2 * (m * Csk * 2) + 4 * (OW * Csk * 2)         # skip blocks
        bts += (th + 2) * (OW + 2) * (Csk + 2 * Cup) * 2     # padded skip + up
        bts += (th + 2) * (OW + 2) * Cin * 2                 # concatenated xin
        bts += 2 * (h * wsp * Cup * 2)                       # resident prev
        bts += 2 * ((OW + 2) * wsp * 4)                      # rx matrix
        if Cin < 128:
            bts += m * 9 * Cin * 2                           # im2col patch
        bts += m * tC * 4                                    # f32 acc
        bts += 2 * m * tC * jnp.dtype(out_dtype).itemsize    # out blocks
        bts += 2 * (9 * Cin * tC * 2 + tC * 4)               # weights + bias
        return bts

    th = _pick_tile_h(OH, est, max_tile_h)
    grid = (B, Cout // tC, OH // th)                         # H innermost
    gs = pltpu.PrefetchScalarGridSpec(
        num_scalar_prefetch=4, grid=grid,
        in_specs=[
            pl.BlockSpec((OW + 2, wsp), lambda bb, j, i, *_: (0, 0)),
            pl.BlockSpec((1, h, wsp, Cup), lambda bb, j, i, *_: (bb, 0, 0, 0)),
            pl.BlockSpec((1, th, OW, Csk), lambda bb, j, i, *_: (bb, i, 0, 0)),
            pl.BlockSpec((1, 1, OW, Csk),
                         lambda bb, j, i, *_: (bb, jnp.maximum(i * th - 1, 0), 0, 0)),
            pl.BlockSpec((1, 1, OW, Csk),
                         lambda bb, j, i, *_: (bb, jnp.minimum((i + 1) * th, OH - 1), 0, 0)),
            pl.BlockSpec((9 * Cin, tC), lambda bb, j, i, *_: (0, j)),
            pl.BlockSpec((1, tC), lambda bb, j, i, *_: (0, j)),
        ],
        out_specs=pl.BlockSpec((1, th, OW, tC), lambda bb, j, i, *_: (bb, i, 0, j)))
    return pl.pallas_call(
        partial(_up_cat_conv_kernel, tile_h=th, act=act),
        out_shape=jax.ShapeDtypeStruct((B, OH, OW, Cout), out_dtype),
        grid_spec=gs,
        compiler_params=_compiler_params(3),
    )(lo, hi, wlo, whi, rx_pad, prev, skip, skip, skip, w, b)


# ------------------------- conservative fallback path ------------------------

def _conv3x3_taps_kernel(x_ref, w_ref, b_ref, o_ref, *, act):
    """Fallback conv: pre-padded input, one spatial block, nine K=Cin dots."""
    _, hp, wp, cin = x_ref.shape
    h, w = hp - 2, wp - 2
    cout = o_ref.shape[-1]
    acc = jnp.zeros((h * w, cout), jnp.float32)
    for dy in range(3):
        for dx in range(3):
            t = 3 * dy + dx
            p = x_ref[0, dy:dy + h, dx:dx + w, :].reshape(h * w, cin)
            acc = acc + jnp.dot(p.astype(jnp.bfloat16),
                                w_ref[t * cin:(t + 1) * cin, :],
                                preferred_element_type=jnp.float32)
    acc = _activate(acc + b_ref[...], act)
    o_ref[0] = acc.reshape(h, w, cout).astype(o_ref.dtype)


def conv3x3_fallback(x, w, b, act, out_dtype):
    B, H, W, Cin = x.shape
    Cout = w.shape[-1]
    tC = _cout_tile(Cout)
    xp = jnp.pad(x, ((0, 0), (1, 1), (1, 1), (0, 0)))
    return pl.pallas_call(
        partial(_conv3x3_taps_kernel, act=act),
        out_shape=jax.ShapeDtypeStruct((B, H, W, Cout), out_dtype),
        grid=(B, Cout // tC),
        in_specs=[
            pl.BlockSpec((1, H + 2, W + 2, Cin), lambda bb, j: (bb, 0, 0, 0)),
            pl.BlockSpec((9 * Cin, tC), lambda bb, j: (0, j)),
            pl.BlockSpec((1, tC), lambda bb, j: (0, j)),
        ],
        out_specs=pl.BlockSpec((1, H, W, tC), lambda bb, j: (bb, 0, 0, j)),
        compiler_params=_compiler_params(2),
    )(xp, w, b)


def up_cat_conv3x3_fallback(prev, skip, w, b, act, out_dtype):
    up = _upsample2x_ref(prev)
    xin = jnp.concatenate([skip.astype(jnp.float32), up], axis=-1)
    return conv3x3_fallback(xin.astype(jnp.bfloat16), w, b, act, out_dtype)


# ----------------------------- decoder module --------------------------------

def _init_conv_params(key, cin, cout):
    """Conv2d-like init.  Weight packed as (9*Cin, Cout) bf16, row = (tap, cin)
    with tap = 3*dy + dx, matching the in-kernel im2col column order."""
    k1, k2 = jax.random.split(key)
    bound = 1.0 / math.sqrt(cin * 9)
    w = jax.random.uniform(k1, (cout, cin, 3, 3), jnp.float32, -bound, bound)
    bias = jax.random.uniform(k2, (cout,), jnp.float32, -bound, bound)
    w_k = jnp.transpose(w, (2, 3, 1, 0)).reshape(9 * cin, cout)   # (ky,kx,ci)
    return w_k.astype(jnp.bfloat16), bias.reshape(1, cout)


class ConvUNetDecoderPallas:
    """Mirrors models/ConvUNet.py::ConvUNetDecoder forward semantics."""

    def __init__(self, output_shape, scale=3, num_filters=32,
                 key=jax.random.PRNGKey(0), fused=True, max_tile_h=None):
        H, W, C = output_shape
        nf = num_filters
        self.fused = fused
        self.max_tile_h = max_tile_h
        keys = iter(jax.random.split(key, 4 * scale + 8))
        # entries: (kind, weight, bias, activation, output dtype)
        #   'conv'        : Conv3x3 + act
        #   'up_cat_conv' : Upsample + cat(skip, .) + Conv3x3 + act (fused)
        self.layers = []

        def add(kind, cin, cout, act, out_dtype=jnp.bfloat16):
            wk, bk = _init_conv_params(next(keys), cin, cout)
            self.layers.append((kind, wk, bk, act, out_dtype))

        # first module: Conv -> LeakyReLU (its Upsample+cat folds into the
        # next module's first conv)
        add("conv", nf * 2 ** (scale - 1), nf * 2 ** (scale - 2), "leaky_relu")
        for k in reversed(range(2, scale)):
            add("up_cat_conv", nf * 2 ** k, nf * 2 ** (k - 1), "leaky_relu")
            add("conv", nf * 2 ** (k - 1), nf * 2 ** (k - 2), "leaky_relu")
        # last module: (Upsample+cat+)Conv -> LeakyReLU -> Conv -> Tanh
        add("up_cat_conv", nf * 2, nf, "leaky_relu")
        add("conv", nf, C, "tanh", jnp.float32)

    def __call__(self, x_nchw, skip_connections_nchw):
        out = jnp.transpose(x_nchw, (0, 2, 3, 1)).astype(jnp.bfloat16)
        skips = [jnp.transpose(s, (0, 2, 3, 1)).astype(jnp.bfloat16)
                 for s in skip_connections_nchw]
        sid = len(skips) - 1
        for kind, wk, bk, act, od in self.layers:
            if kind == "conv":
                out = (conv3x3(out, wk, bk, act, od, self.max_tile_h)
                       if self.fused else
                       conv3x3_fallback(out, wk, bk, act, od))
            else:
                out = (up_cat_conv3x3(out, skips[sid], wk, bk, act, od,
                                      self.max_tile_h)
                       if self.fused else
                       up_cat_conv3x3_fallback(out, skips[sid], wk, bk, act, od))
                sid -= 1
        return jnp.transpose(out, (0, 3, 1, 2))     # back to NCHW

    def reference(self, x_nchw, skip_connections_nchw):
        """Pure-XLA f32 reference using the same (bf16-rounded) parameters."""
        out = jnp.transpose(x_nchw, (0, 2, 3, 1)).astype(jnp.float32)
        skips = [jnp.transpose(s, (0, 2, 3, 1)).astype(jnp.float32)
                 for s in skip_connections_nchw]
        sid = len(skips) - 1
        for kind, wk, bk, act, _ in self.layers:
            if kind == "up_cat_conv":
                out = jnp.concatenate([skips[sid], _upsample2x_ref(out)], -1)
                sid -= 1
            cin = out.shape[-1]
            whwio = wk.astype(jnp.float32).reshape(3, 3, cin, -1)
            out = lax.conv_general_dilated(
                out, whwio, (1, 1), "SAME",
                dimension_numbers=("NHWC", "HWIO", "NHWC"))
            out = _activate(out + bk.astype(jnp.float32).reshape(1, 1, 1, -1),
                            act)
        return jnp.transpose(out, (0, 3, 1, 2))


# --------------------------------- main ---------------------------------------

if __name__ == "__main__":
    B, nf, scale, Himg, Wimg, C = 2, 8, 3, 32, 32, 3
    key = jax.random.PRNGKey(0)
    kx, ks0, ks1, kp = jax.random.split(key, 4)

    # decoder input at 1/2^(scale-1) = 1/4 resolution with nf*2^(scale-1) ch;
    # skip_connections consumed from the end (skip[1] first, then skip[0]).
    x = jax.random.normal(kx, (B, nf * 2 ** (scale - 1), Himg // 4, Wimg // 4),
                          jnp.float32)
    skip0 = jax.random.normal(ks0, (B, nf, Himg, Wimg), jnp.float32)
    skip1 = jax.random.normal(ks1, (B, nf * 2, Himg // 2, Wimg // 2),
                              jnp.float32)

    # max_tile_h=8 exercises the multi-tile halo path even at these small shapes
    model = ConvUNetDecoderPallas((Himg, Wimg, C), scale=scale, num_filters=nf,
                                  key=kp, fused=True, max_tile_h=8)
    try:
        out = jax.block_until_ready(model(x, [skip0, skip1]))
    except Exception:
        # safety net for Mosaic builds lacking a needed lowering: same
        # numerics, less in-kernel fusion.
        model.fused = False
        out = jax.block_until_ready(model(x, [skip0, skip1]))

    ref = jax.block_until_ready(model.reference(x, [skip0, skip1]))
    assert out.shape == (B, C, Himg, Wimg), out.shape
    err = float(jnp.max(jnp.abs(out.astype(jnp.float32) - ref)))
    assert err < 0.1, f"max |pallas - reference| too large: {err}"
    print("KERNEL_OK")
</pallas_src>

<mosaic_0001>
module attributes {stable_mosaic.version = 11 : i64} {
  func.func @_conv3x3_kernel(%arg0: i32, %arg1: i32, %arg2: i32, %arg3: memref<1x8x8x32xbf16, #tpu.memory_space<vmem>>, %arg4: memref<1x1x8x32xbf16, #tpu.memory_space<vmem>>, %arg5: memref<1x1x8x32xbf16, #tpu.memory_space<vmem>>, %arg6: memref<288x16xbf16, #tpu.memory_space<vmem>>, %arg7: memref<1x16xf32, #tpu.memory_space<vmem>>, %arg8: memref<1x8x8x16xbf16, #tpu.memory_space<vmem>>) attributes {dimension_semantics = [#tpu.dimension_semantics<parallel>, #tpu.dimension_semantics<parallel>, #tpu.dimension_semantics<parallel>], iteration_bounds = array<i64: 2, 1, 1>, scalar_prefetch = 0 : i64, scratch_operands = 0 : i64, tpu.core_type = #tpu.core_type<tc>, window_params = [{transform_indices = @transform_0, window_bounds = array<i64: 1, 8, 8, 32>}, {transform_indices = @transform_1, window_bounds = array<i64: 1, 1, 8, 32>}, {transform_indices = @transform_2, window_bounds = array<i64: 1, 1, 8, 32>}, {transform_indices = @transform_3, window_bounds = array<i64: 288, 16>}, {transform_indices = @transform_4, window_bounds = array<i64: 1, 16>}, {transform_indices = @transform_5, window_bounds = array<i64: 1, 8, 8, 16>}]} {
    %c0 = arith.constant 0 : index
    %c0_0 = arith.constant 0 : index
    %c0_1 = arith.constant 0 : index
    %c0_2 = arith.constant 0 : index
    %0 = vector.load %arg4[%c0, %c0_0, %c0_1, %c0_2] : memref<1x1x8x32xbf16, #tpu.memory_space<vmem>>, vector<1x1x8x32xbf16>
    %1 = vector.shape_cast %0 : vector<1x1x8x32xbf16> to vector<1x8x32xbf16>
    %c0_i32 = arith.constant 0 : i32
    %2 = arith.cmpi sgt, %arg2, %c0_i32 : i32
    %3 = arith.extui %2 : i1 to i32
    %4 = arith.sitofp %3 : i32 to f32
    %5 = arith.truncf %4 : f32 to bf16
    %6 = vector.broadcast %5 : bf16 to vector<1x8x32xbf16>
    %7 = arith.mulf %1, %6 : vector<1x8x32xbf16>
    %c0_3 = arith.constant 0 : index
    %c0_4 = arith.constant 0 : index
    %c0_5 = arith.constant 0 : index
    %c0_6 = arith.constant 0 : index
    %8 = vector.load %arg5[%c0_3, %c0_4, %c0_5, %c0_6] : memref<1x1x8x32xbf16, #tpu.memory_space<vmem>>, vector<1x1x8x32xbf16>
    %9 = vector.shape_cast %8 : vector<1x1x8x32xbf16> to vector<1x8x32xbf16>
    %c0_i32_7 = arith.constant 0 : i32
    %10 = arith.cmpi slt, %arg2, %c0_i32_7 : i32
    %11 = arith.extui %10 : i1 to i32
    %12 = arith.sitofp %11 : i32 to f32
    %13 = arith.truncf %12 : f32 to bf16
    %14 = vector.broadcast %13 : bf16 to vector<1x8x32xbf16>
    %15 = arith.mulf %9, %14 : vector<1x8x32xbf16>
    %c0_8 = arith.constant 0 : index
    %c0_9 = arith.constant 0 : index
    %c0_10 = arith.constant 0 : index
    %c0_11 = arith.constant 0 : index
    %16 = vector.load %arg3[%c0_8, %c0_9, %c0_10, %c0_11] : memref<1x8x8x32xbf16, #tpu.memory_space<vmem>>, vector<1x8x8x32xbf16>
    %17 = vector.shape_cast %16 : vector<1x8x8x32xbf16> to vector<8x8x32xbf16>
    %18 = tpu.concatenate %7, %17, %15 in 0 : vector<1x8x32xbf16>, vector<8x8x32xbf16>, vector<1x8x32xbf16> -> vector<10x8x32xbf16>
    %cst = arith.constant 0.000000e+00 : bf16
    %19 = vector.broadcast %cst : bf16 to vector<10x1x32xbf16>
    %20 = tpu.concatenate %19, %18, %19 in 1 : vector<10x1x32xbf16>, vector<10x8x32xbf16>, vector<10x1x32xbf16> -> vector<10x10x32xbf16>
    %21 = vector.extract_strided_slice %20 {offsets = [0, 0, 0], sizes = [8, 8, 32], strides = [1, 1, 1]} : vector<10x10x32xbf16> to vector<8x8x32xbf16>
    %22 = vector.extract_strided_slice %20 {offsets = [0, 1, 0], sizes = [8, 8, 32], strides = [1, 1, 1]} : vector<10x10x32xbf16> to vector<8x8x32xbf16>
    %23 = vector.extract_strided_slice %20 {offsets = [0, 2, 0], sizes = [8, 8, 32], strides = [1, 1, 1]} : vector<10x10x32xbf16> to vector<8x8x32xbf16>
    %24 = vector.extract_strided_slice %20 {offsets = [1, 0, 0], sizes = [8, 8, 32], strides = [1, 1, 1]} : vector<10x10x32xbf16> to vector<8x8x32xbf16>
    %25 = vector.extract_strided_slice %20 {offsets = [1, 1, 0], sizes = [8, 8, 32], strides = [1, 1, 1]} : vector<10x10x32xbf16> to vector<8x8x32xbf16>
    %26 = vector.extract_strided_slice %20 {offsets = [1, 2, 0], sizes = [8, 8, 32], strides = [1, 1, 1]} : vector<10x10x32xbf16> to vector<8x8x32xbf16>
    %27 = vector.extract_strided_slice %20 {offsets = [2, 0, 0], sizes = [8, 8, 32], strides = [1, 1, 1]} : vector<10x10x32xbf16> to vector<8x8x32xbf16>
    %28 = vector.extract_strided_slice %20 {offsets = [2, 1, 0], sizes = [8, 8, 32], strides = [1, 1, 1]} : vector<10x10x32xbf16> to vector<8x8x32xbf16>
    %29 = vector.extract_strided_slice %20 {offsets = [2, 2, 0], sizes = [8, 8, 32], strides = [1, 1, 1]} : vector<10x10x32xbf16> to vector<8x8x32xbf16>
    %30 = tpu.concatenate %21, %22, %23, %24, %25, %26, %27, %28, %29 in 2 : vector<8x8x32xbf16>, vector<8x8x32xbf16>, vector<8x8x32xbf16>, vector<8x8x32xbf16>, vector<8x8x32xbf16>, vector<8x8x32xbf16>, vector<8x8x32xbf16>, vector<8x8x32xbf16>, vector<8x8x32xbf16> -> vector<8x8x288xbf16>
    %31 = vector.shape_cast %30 : vector<8x8x288xbf16> to vector<64x288xbf16>
    %c0_12 = arith.constant 0 : index
    %c0_13 = arith.constant 0 : index
    %32 = vector.load %arg6[%c0_12, %c0_13] : memref<288x16xbf16, #tpu.memory_space<vmem>>, vector<288x16xbf16>
    %cst_14 = arith.constant dense<0.000000e+00> : vector<64x16xf32>
    %33 = tpu.matmul %31, %32, %cst_14 {dimension_numbers = #tpu.dot_dimension_numbers<[1], [0], [0], [1], [0, 0, 1, 1], [], []>} : vector<64x288xbf16>, vector<288x16xbf16>, vector<64x16xf32> -> vector<64x16xf32>
    %c0_15 = arith.constant 0 : index
    %c0_16 = arith.constant 0 : index
    %34 = vector.load %arg7[%c0_15, %c0_16] : memref<1x16xf32, #tpu.memory_space<vmem>>, vector<1x16xf32>
    %35 = vector.broadcast %34 : vector<1x16xf32> to vector<64x16xf32>
    %36 = arith.addf %33, %35 : vector<64x16xf32>
    %cst_17 = arith.constant 0.000000e+00 : f32
    %37 = vector.broadcast %cst_17 : f32 to vector<64x16xf32>
    %38 = arith.cmpf oge, %36, %37 : vector<64x16xf32>
    %cst_18 = arith.constant 0.00999999977 : f32
    %39 = vector.broadcast %cst_18 : f32 to vector<64x16xf32>
    %40 = arith.mulf %39, %36 : vector<64x16xf32>
    %41 = arith.select %38, %36, %40 : vector<64x16xi1>, vector<64x16xf32>
    %42 = vector.shape_cast %41 : vector<64x16xf32> to vector<8x8x16xf32>
    %43 = arith.truncf %42 : vector<8x8x16xf32> to vector<8x8x16xbf16>
    %c0_19 = arith.constant 0 : index
    %c0_20 = arith.constant 0 : index
    %c0_21 = arith.constant 0 : index
    %c0_22 = arith.constant 0 : index
    %44 = vector.load %arg8[%c0_19, %c0_20, %c0_21, %c0_22] : memref<1x8x8x16xbf16, #tpu.memory_space<vmem>>, vector<1x8x8x16xbf16>
    %45 = vector.shape_cast %44 : vector<1x8x8x16xbf16> to vector<8x8x16xbf16>
    %46 = vector.shape_cast %43 : vector<8x8x16xbf16> to vector<1x8x8x16xbf16>
    tpu.vector_store %arg8[%c0_19, %c0_20, %c0_21, %c0_22], %46 {strides = array<i32>} : memref<1x8x8x16xbf16, #tpu.memory_space<vmem>>, vector<1x8x8x16xbf16>,
    return
  }
  func.func @transform_0(%arg0: i32, %arg1: i32, %arg2: i32) -> (i32, i32, i32, i32) {
    %c0_i32 = arith.constant 0 : i32
    %c0_i32_0 = arith.constant 0 : i32
    %c0_i32_1 = arith.constant 0 : i32
    return %arg0, %arg2, %c0_i32, %c0_i32_0 : i32, i32, i32, i32
  }
  func.func @transform_1(%arg0: i32, %arg1: i32, %arg2: i32) -> (i32, i32, i32, i32) {
    %c8_i32 = arith.constant 8 : i32
    %0 = arith.muli %arg2, %c8_i32 : i32
    %c1_i32 = arith.constant 1 : i32
    %1 = arith.subi %0, %c1_i32 : i32
    %c0_i32 = arith.constant 0 : i32
    %2 = arith.maxsi %1, %c0_i32 : i32
    %c0_i32_0 = arith.constant 0 : i32
    %c0_i32_1 = arith.constant 0 : i32
    %c0_i32_2 = arith.constant 0 : i32
    return %arg0, %2, %c0_i32_0, %c0_i32_1 : i32, i32, i32, i32
  }
  func.func @transform_2(%arg0: i32, %arg1: i32, %arg2: i32) -> (i32, i32, i32, i32) {
    %c1_i32 = arith.constant 1 : i32
    %0 = arith.addi %arg2, %c1_i32 : i32
    %c8_i32 = arith.constant 8 : i32
    %1 = arith.muli %0, %c8_i32 : i32
    %c7_i32 = arith.constant 7 : i32
    %2 = arith.minsi %1, %c7_i32 : i32
    %c0_i32 = arith.constant 0 : i32
    %c0_i32_0 = arith.constant 0 : i32
    %c0_i32_1 = arith.constant 0 : i32
    return %arg0, %2, %c0_i32, %c0_i32_0 : i32, i32, i32, i32
  }
  func.func @transform_3(%arg0: i32, %arg1: i32, %arg2: i32) -> (i32, i32) {
    %c0_i32 = arith.constant 0 : i32
    %c0_i32_0 = arith.constant 0 : i32
    return %c0_i32, %arg1 : i32, i32
  }
  func.func @transform_4(%arg0: i32, %arg1: i32, %arg2: i32) -> (i32, i32) {
    %c0_i32 = arith.constant 0 : i32
    %c0_i32_0 = arith.constant 0 : i32
    return %c0_i32, %arg1 : i32, i32
  }
  func.func @transform_5(%arg0: i32, %arg1: i32, %arg2: i32) -> (i32, i32, i32, i32) {
    %c0_i32 = arith.constant 0 : i32
    %c0_i32_0 = arith.constant 0 : i32
    return %arg0, %arg2, %c0_i32, %arg1 : i32, i32, i32, i32
  }
}

module attributes {stable_mosaic.version = 11 : i64} {
  func.func @_conv3x3_taps_kernel(%arg0: i32, %arg1: i32, %arg2: memref<1x10x10x32xbf16, #tpu.memory_space<vmem>>, %arg3: memref<288x16xbf16, #tpu.memory_space<vmem>>, %arg4: memref<1x16xf32, #tpu.memory_space<vmem>>, %arg5: memref<1x8x8x16xbf16, #tpu.memory_space<vmem>>) attributes {dimension_semantics = [#tpu.dimension_semantics<parallel>, #tpu.dimension_semantics<parallel>], iteration_bounds = array<i64: 2, 1>, scalar_prefetch = 0 : i64, scratch_operands = 0 : i64, tpu.core_type = #tpu.core_type<tc>, window_params = [{transform_indices = @transform_0, window_bounds = array<i64: 1, 10, 10, 32>}, {transform_indices = @transform_1, window_bounds = array<i64: 288, 16>}, {transform_indices = @transform_2, window_bounds = array<i64: 1, 16>}, {transform_indices = @transform_3, window_bounds = array<i64: 1, 8, 8, 16>}]} {
    %cst = arith.constant 0.000000e+00 : f32
    %0 = vector.broadcast %cst : f32 to vector<64x16xf32>
    %c0 = arith.constant 0 : index
    %c0_0 = arith.constant 0 : index
    %c0_1 = arith.constant 0 : index
    %c0_2 = arith.constant 0 : index
    %1 = vector.load %arg2[%c0, %c0_0, %c0_1, %c0_2] : memref<1x10x10x32xbf16, #tpu.memory_space<vmem>>, vector<1x8x8x32xbf16>
    %2 = vector.shape_cast %1 : vector<1x8x8x32xbf16> to vector<8x8x32xbf16>
    %3 = vector.shape_cast %2 : vector<8x8x32xbf16> to vector<64x32xbf16>
    %c0_3 = arith.constant 0 : index
    %c0_4 = arith.constant 0 : index
    %4 = vector.load %arg3[%c0_3, %c0_4] : memref<288x16xbf16, #tpu.memory_space<vmem>>, vector<32x16xbf16>
    %cst_5 = arith.constant dense<0.000000e+00> : vector<64x16xf32>
    %5 = tpu.matmul %3, %4, %cst_5 {dimension_numbers = #tpu.dot_dimension_numbers<[1], [0], [0], [1], [0, 0, 1, 1], [], []>} : vector<64x32xbf16>, vector<32x16xbf16>, vector<64x16xf32> -> vector<64x16xf32>
    %6 = arith.addf %0, %5 : vector<64x16xf32>
    %c0_6 = arith.constant 0 : index
    %c0_7 = arith.constant 0 : index
    %c1 = arith.constant 1 : index
    %c0_8 = arith.constant 0 : index
    %7 = vector.load %arg2[%c0_6, %c0_7, %c1, %c0_8] : memref<1x10x10x32xbf16, #tpu.memory_space<vmem>>, vector<1x8x8x32xbf16>
    %8 = vector.shape_cast %7 : vector<1x8x8x32xbf16> to vector<8x8x32xbf16>
    %9 = vector.shape_cast %8 : vector<8x8x32xbf16> to vector<64x32xbf16>
    %c32 = arith.constant 32 : index
    %c0_9 = arith.constant 0 : index
    %10 = vector.load %arg3[%c32, %c0_9] : memref<288x16xbf16, #tpu.memory_space<vmem>>, vector<32x16xbf16>
    %cst_10 = arith.constant dense<0.000000e+00> : vector<64x16xf32>
    %11 = tpu.matmul %9, %10, %cst_10 {dimension_numbers = #tpu.dot_dimension_numbers<[1], [0], [0], [1], [0, 0, 1, 1], [], []>} : vector<64x32xbf16>, vector<32x16xbf16>, vector<64x16xf32> -> vector<64x16xf32>
    %12 = arith.addf %6, %11 : vector<64x16xf32>
    %c0_11 = arith.constant 0 : index
    %c0_12 = arith.constant 0 : index
    %c2 = arith.constant 2 : index
    %c0_13 = arith.constant 0 : index
    %13 = vector.load %arg2[%c0_11, %c0_12, %c2, %c0_13] : memref<1x10x10x32xbf16, #tpu.memory_space<vmem>>, vector<1x8x8x32xbf16>
    %14 = vector.shape_cast %13 : vector<1x8x8x32xbf16> to vector<8x8x32xbf16>
    %15 = vector.shape_cast %14 : vector<8x8x32xbf16> to vector<64x32xbf16>
    %c64 = arith.constant 64 : index
    %c0_14 = arith.constant 0 : index
    %16 = vector.load %arg3[%c64, %c0_14] : memref<288x16xbf16, #tpu.memory_space<vmem>>, vector<32x16xbf16>
    %cst_15 = arith.constant dense<0.000000e+00> : vector<64x16xf32>
    %17 = tpu.matmul %15, %16, %cst_15 {dimension_numbers = #tpu.dot_dimension_numbers<[1], [0], [0], [1], [0, 0, 1, 1], [], []>} : vector<64x32xbf16>, vector<32x16xbf16>, vector<64x16xf32> -> vector<64x16xf32>
    %18 = arith.addf %12, %17 : vector<64x16xf32>
    %c0_16 = arith.constant 0 : index
    %c1_17 = arith.constant 1 : index
    %c0_18 = arith.constant 0 : index
    %c0_19 = arith.constant 0 : index
    %19 = vector.load %arg2[%c0_16, %c1_17, %c0_18, %c0_19] : memref<1x10x10x32xbf16, #tpu.memory_space<vmem>>, vector<1x8x8x32xbf16>
    %20 = vector.shape_cast %19 : vector<1x8x8x32xbf16> to vector<8x8x32xbf16>
    %21 = vector.shape_cast %20 : vector<8x8x32xbf16> to vector<64x32xbf16>
    %c96 = arith.constant 96 : index
    %c0_20 = arith.constant 0 : index
    %22 = vector.load %arg3[%c96, %c0_20] : memref<288x16xbf16, #tpu.memory_space<vmem>>, vector<32x16xbf16>
    %cst_21 = arith.constant dense<0.000000e+00> : vector<64x16xf32>
    %23 = tpu.matmul %21, %22, %cst_21 {dimension_numbers = #tpu.dot_dimension_numbers<[1], [0], [0], [1], [0, 0, 1, 1], [], []>} : vector<64x32xbf16>, vector<32x16xbf16>, vector<64x16xf32> -> vector<64x16xf32>
    %24 = arith.addf %18, %23 : vector<64x16xf32>
    %c0_22 = arith.constant 0 : index
    %c1_23 = arith.constant 1 : index
    %c1_24 = arith.constant 1 : index
    %c0_25 = arith.constant 0 : index
    %25 = vector.load %arg2[%c0_22, %c1_23, %c1_24, %c0_25] : memref<1x10x10x32xbf16, #tpu.memory_space<vmem>>, vector<1x8x8x32xbf16>
    %26 = vector.shape_cast %25 : vector<1x8x8x32xbf16> to vector<8x8x32xbf16>
    %27 = vector.shape_cast %26 : vector<8x8x32xbf16> to vector<64x32xbf16>
    %c128 = arith.constant 128 : index
    %c0_26 = arith.constant 0 : index
    %28 = vector.load %arg3[%c128, %c0_26] : memref<288x16xbf16, #tpu.memory_space<vmem>>, vector<32x16xbf16>
    %cst_27 = arith.constant dense<0.000000e+00> : vector<64x16xf32>
    %29 = tpu.matmul %27, %28, %cst_27 {dimension_numbers = #tpu.dot_dimension_numbers<[1], [0], [0], [1], [0, 0, 1, 1], [], []>} : vector<64x32xbf16>, vector<32x16xbf16>, vector<64x16xf32> -> vector<64x16xf32>
    %30 = arith.addf %24, %29 : vector<64x16xf32>
    %c0_28 = arith.constant 0 : index
    %c1_29 = arith.constant 1 : index
    %c2_30 = arith.constant 2 : index
    %c0_31 = arith.constant 0 : index
    %31 = vector.load %arg2[%c0_28, %c1_29, %c2_30, %c0_31] : memref<1x10x10x32xbf16, #tpu.memory_space<vmem>>, vector<1x8x8x32xbf16>
    %32 = vector.shape_cast %31 : vector<1x8x8x32xbf16> to vector<8x8x32xbf16>
    %33 = vector.shape_cast %32 : vector<8x8x32xbf16> to vector<64x32xbf16>
    %c160 = arith.constant 160 : index
    %c0_32 = arith.constant 0 : index
    %34 = vector.load %arg3[%c160, %c0_32] : memref<288x16xbf16, #tpu.memory_space<vmem>>, vector<32x16xbf16>
    %cst_33 = arith.constant dense<0.000000e+00> : vector<64x16xf32>
    %35 = tpu.matmul %33, %34, %cst_33 {dimension_numbers = #tpu.dot_dimension_numbers<[1], [0], [0], [1], [0, 0, 1, 1], [], []>} : vector<64x32xbf16>, vector<32x16xbf16>, vector<64x16xf32> -> vector<64x16xf32>
    %36 = arith.addf %30, %35 : vector<64x16xf32>
    %c0_34 = arith.constant 0 : index
    %c2_35 = arith.constant 2 : index
    %c0_36 = arith.constant 0 : index
    %c0_37 = arith.constant 0 : index
    %37 = vector.load %arg2[%c0_34, %c2_35, %c0_36, %c0_37] : memref<1x10x10x32xbf16, #tpu.memory_space<vmem>>, vector<1x8x8x32xbf16>
    %38 = vector.shape_cast %37 : vector<1x8x8x32xbf16> to vector<8x8x32xbf16>
    %39 = vector.shape_cast %38 : vector<8x8x32xbf16> to vector<64x32xbf16>
    %c192 = arith.constant 192 : index
    %c0_38 = arith.constant 0 : index
    %40 = vector.load %arg3[%c192, %c0_38] : memref<288x16xbf16, #tpu.memory_space<vmem>>, vector<32x16xbf16>
    %cst_39 = arith.constant dense<0.000000e+00> : vector<64x16xf32>
    %41 = tpu.matmul %39, %40, %cst_39 {dimension_numbers = #tpu.dot_dimension_numbers<[1], [0], [0], [1], [0, 0, 1, 1], [], []>} : vector<64x32xbf16>, vector<32x16xbf16>, vector<64x16xf32> -> vector<64x16xf32>
    %42 = arith.addf %36, %41 : vector<64x16xf32>
    %c0_40 = arith.constant 0 : index
    %c2_41 = arith.constant 2 : index
    %c1_42 = arith.constant 1 : index
    %c0_43 = arith.constant 0 : index
    %43 = vector.load %arg2[%c0_40, %c2_41, %c1_42, %c0_43] : memref<1x10x10x32xbf16, #tpu.memory_space<vmem>>, vector<1x8x8x32xbf16>
    %44 = vector.shape_cast %43 : vector<1x8x8x32xbf16> to vector<8x8x32xbf16>
    %45 = vector.shape_cast %44 : vector<8x8x32xbf16> to vector<64x32xbf16>
    %c224 = arith.constant 224 : index
    %c0_44 = arith.constant 0 : index
    %46 = vector.load %arg3[%c224, %c0_44] : memref<288x16xbf16, #tpu.memory_space<vmem>>, vector<32x16xbf16>
    %cst_45 = arith.constant dense<0.000000e+00> : vector<64x16xf32>
    %47 = tpu.matmul %45, %46, %cst_45 {dimension_numbers = #tpu.dot_dimension_numbers<[1], [0], [0], [1], [0, 0, 1, 1], [], []>} : vector<64x32xbf16>, vector<32x16xbf16>, vector<64x16xf32> -> vector<64x16xf32>
    %48 = arith.addf %42, %47 : vector<64x16xf32>
    %c0_46 = arith.constant 0 : index
    %c2_47 = arith.constant 2 : index
    %c2_48 = arith.constant 2 : index
    %c0_49 = arith.constant 0 : index
    %49 = vector.load %arg2[%c0_46, %c2_47, %c2_48, %c0_49] : memref<1x10x10x32xbf16, #tpu.memory_space<vmem>>, vector<1x8x8x32xbf16>
    %50 = vector.shape_cast %49 : vector<1x8x8x32xbf16> to vector<8x8x32xbf16>
    %51 = vector.shape_cast %50 : vector<8x8x32xbf16> to vector<64x32xbf16>
    %c256 = arith.constant 256 : index
    %c0_50 = arith.constant 0 : index
    %52 = vector.load %arg3[%c256, %c0_50] : memref<288x16xbf16, #tpu.memory_space<vmem>>, vector<32x16xbf16>
    %cst_51 = arith.constant dense<0.000000e+00> : vector<64x16xf32>
    %53 = tpu.matmul %51, %52, %cst_51 {dimension_numbers = #tpu.dot_dimension_numbers<[1], [0], [0], [1], [0, 0, 1, 1], [], []>} : vector<64x32xbf16>, vector<32x16xbf16>, vector<64x16xf32> -> vector<64x16xf32>
    %54 = arith.addf %48, %53 : vector<64x16xf32>
    %c0_52 = arith.constant 0 : index
    %c0_53 = arith.constant 0 : index
    %55 = vector.load %arg4[%c0_52, %c0_53] : memref<1x16xf32, #tpu.memory_space<vmem>>, vector<1x16xf32>
    %56 = vector.broadcast %55 : vector<1x16xf32> to vector<64x16xf32>
    %57 = arith.addf %54, %56 : vector<64x16xf32>
    %cst_54 = arith.constant 0.000000e+00 : f32
    %58 = vector.broadcast %cst_54 : f32 to vector<64x16xf32>
    %59 = arith.cmpf oge, %57, %58 : vector<64x16xf32>
    %cst_55 = arith.constant 0.00999999977 : f32
    %60 = vector.broadcast %cst_55 : f32 to vector<64x16xf32>
    %61 = arith.mulf %60, %57 : vector<64x16xf32>
    %62 = arith.select %59, %57, %61 : vector<64x16xi1>, vector<64x16xf32>
    %63 = vector.shape_cast %62 : vector<64x16xf32> to vector<8x8x16xf32>
    %64 = arith.truncf %63 : vector<8x8x16xf32> to vector<8x8x16xbf16>
    %c0_56 = arith.constant 0 : index
    %c0_57 = arith.constant 0 : index
    %c0_58 = arith.constant 0 : index
    %c0_59 = arith.constant 0 : index
    %65 = vector.load %arg5[%c0_56, %c0_57, %c0_58, %c0_59] : memref<1x8x8x16xbf16, #tpu.memory_space<vmem>>, vector<1x8x8x16xbf16>
    %66 = vector.shape_cast %65 : vector<1x8x8x16xbf16> to vector<8x8x16xbf16>
    %67 = vector.shape_cast %64 : vector<8x8x16xbf16> to vector<1x8x8x16xbf16>
    tpu.vector_store %arg5[%c0_56, %c0_57, %c0_58, %c0_59], %67 {strides = array<i32>} : memref<1x8x8x16xbf16, #tpu.memory_space<vmem>>, vector<1x8x8x16xbf16>,
    return
  }
  func.func @transform_0(%arg0: i32, %arg1: i32) -> (i32, i32, i32, i32) {
    %c0_i32 = arith.constant 0 : i32
    %c0_i32_0 = arith.constant 0 : i32
    %c0_i32_1 = arith.constant 0 : i32
    %c0_i32_2 = arith.constant 0 : i32
    return %arg0, %c0_i32, %c0_i32_0, %c0_i32_1 : i32, i32, i32, i32
  }
  func.func @transform_1(%arg0: i32, %arg1: i32) -> (i32, i32) {
    %c0_i32 = arith.constant 0 : i32
    %c0_i32_0 = arith.constant 0 : i32
    return %c0_i32, %arg1 : i32, i32
  }
  func.func @transform_2(%arg0: i32, %arg1: i32) -> (i32, i32) {
    %c0_i32 = arith.constant 0 : i32
    %c0_i32_0 = arith.constant 0 : i32
    return %c0_i32, %arg1 : i32, i32
  }
  func.func @transform_3(%arg0: i32, %arg1: i32) -> (i32, i32, i32, i32) {
    %c0_i32 = arith.constant 0 : i32
    %c0_i32_0 = arith.constant 0 : i32
    %c0_i32_1 = arith.constant 0 : i32
    return %arg0, %c0_i32, %c0_i32_0, %arg1 : i32, i32, i32, i32
  }
}

</mosaic_0001>

<llo_original>
// kernel: tpu_custom_call.1
$region0: #{tpu_custom_call.1}
  #allocation0 [shape = 'u32[]', space=smem, size = 0x4, offset = 0x4, fixed_abs, tag = 'smem constant byte address 0x4 - core index']
  #allocation1 [shape = 'u32[144,128]{1,0:T(1,128)}', space=vmem, size = 0x12000, scoped, tag = 'internal scratch']
  %s0 = inlined_call_operand.vmem [shape: bf16[2,8,8,32], index: 0, kind: input, shape index: {}]
  %s1 = inlined_call_operand.vmem [shape: bf16[2,8,8,32], index: 1, kind: input, shape index: {}]
  %s2 = inlined_call_operand.hbm [shape: bf16[2,8,8,32], index: 2, kind: input, shape index: {}]
  %s3 = inlined_call_operand.vmem [shape: bf16[288,16], index: 3, kind: input, shape index: {}]
  %s4 = inlined_call_operand.vmem [shape: f32[1,16], index: 4, kind: input, shape index: {}]
  %s5 = inlined_call_operand.hbm [shape: bf16[2,8,8,16], index: 5, kind: output, shape index: {}]
  %s6 = sld [smem:[#allocation0]]
  $region57: #{tpu_custom_call.1} parent=0
    _
  %s8 = ssub.s32 1, %s6
  %s9 = scalar_select 0, %s8, %s6
  $region1: #{tpu_custom_call.1} parent=0
    #allocation2 [shape = 'u8[4096]{0}', space=vmem, size = 0x1000, scoped, tag = 'input window, operand 2']
    #allocation3 [shape = 's32[2]{0}', space=sflag, size = 0x8, scoped, tag = 'scoped memory for tpu_custom_call.1']
    #allocation4 [shape = 's32[2]{0}', space=sflag, size = 0x8, scoped, tag = 'scoped memory for tpu_custom_call.1']
    #allocation5 [shape = 'u8[32768]{0}', space=vmem, size = 0x8000, scoped, tag = 'output window, operand 0']
    %10 = vsyncpa [#allocation3], 0
    %s11 = scalar_lea.sflag [#allocation3], 1
    %12 = vsyncpa %s11, 0
    %13 = vsyncpa [#allocation4], 0
    %s14 = scalar_lea.sflag [#allocation4], 1
    %15 = vsyncpa %s14, 0
    loop: start=0, step=1, limit=4
    $region2: #{tpu_custom_call.1} parent=1 // loop_pre_header
      _
    $region3: #{tpu_custom_call.1} parent=1 // loop_header
      %s17 = sphi 0, %s21
      %p18 = scmp.ge.s32.totalorder %s17, 4
      %s24 = sphi 0, %s43
      %s25 = sphi 0, %s39
      %s26 = sphi 0, %s35
      %s27 = sphi 0, %s24
      %s28 = sphi 0, %s25
      %s29 = sphi 0, %s26
      %s30 = sphi 0, %s27
      %s31 = sphi 0, %s28
      %s32 = sphi 0, %s29
      %s48 = sphi 0, %s50
      %s51 = sphi 0, %s48
      %s52 = sphi 0, %s51
      %s68 = sphi 0, %s52
      %s84 = sphi 0, %s86
      %s87 = sphi 0, %s84
      %s88 = sphi 0, %s87
      %s104 = sphi 0, %s88
      %s120 = sphi 0, %s122
      %s123 = sphi 0, %s120
      %s124 = sphi 0, %s123
      %s140 = sphi 0, %s124
      %s146 = sphi 0, %s148
      %s149 = sphi 0, %s146
      %s150 = sphi 0, %s149
      %s166 = sphi 0, %s150
      %s172 = sphi 0, %s174
      %s175 = sphi 0, %s172
      %s176 = sphi 0, %s175
      %s192 = sphi 0, %s176
      %s202 = sphi 0, %s204
      %s205 = sphi 0, %s202
      %s206 = sphi 0, %s205
      %s222 = sphi 0, %s206
    $region4: #{tpu_custom_call.1} parent=1 // loop_header_branch
      %20 = sbr.rel (%p18) target = $region8
    $region5: #{tpu_custom_call.1} parent=1 // loop_body
      %s22 = ssub.s32 %s17, 1
      %s23 = ssub.s32 %s17, 2
      %s33 = sadd.s32 1, %s26
      %p34 = scmp.ge.s32.totalorder %s33, 1
      %s35 = scalar_select %p34, 0, %s33
      %s36 = sadd.s32 1, %s25
      %s37 = scalar_select %p34, %s36, %s25
      %p38 = scmp.ge.s32.totalorder %s37, 1
      %s39 = scalar_select %p38, 0, %s37
      %s40 = sadd.s32 1, %s24
      %s41 = scalar_select %p38, %s40, %s24
      %p42 = scmp.ge.s32.totalorder %s41, 2
      %s43 = scalar_select %p42, 0, %s41
      %s44 = ssub.s32 %s24, %s43
      %s45 = ssub.s32 %s26, %s35
      %s46 = sor.u32 %s44, %s45
      %p47 = scmp.eq.s32.totalorder %s46, 0
      %s49 = sadd.s32 %s48, 1
      %s50 = scalar_select %p47, %s48, %s49
      %p53 = pneg %p47
      %p54 = scmp.eq.s32.totalorder %s17, 1
      %p55 = por %p53, %p54
      %p56 = scmp.ne.s32.totalorder %s48, %s51
      %p57 = scmp.eq.s32.totalorder %s17, 0
      %p58 = por %p56, %p57
      %p59 = scmp.ne.s32.totalorder %s48, %s51
      %p60 = scmp.eq.s32.totalorder %s22, 1
      %p61 = por %p59, %p60
      %p62 = scmp.ne.s32.totalorder %s51, %s52
      %p63 = scmp.eq.s32.totalorder %s22, 0
      %p64 = por %p62, %p63
      %p65 = scmp.ne.s32.totalorder %s51, %s52
      %p66 = scmp.eq.s32.totalorder %s23, 1
      %p67 = por %p65, %p66
      %p69 = scmp.ne.s32.totalorder %s52, %s68
      %p70 = scmp.eq.s32.totalorder %s23, 0
      %p71 = por %p69, %p70
      %s72 = smul.u32 %s26, 8
      %s73 = ssub.s32 %s72, 1
      %p74 = scmp.gt.s32.totalorder %s73, 0
      %s75 = scalar_select %p74, %s73, 0
      %s76 = smul.u32 %s35, 8
      %s77 = ssub.s32 %s76, 1
      %p78 = scmp.gt.s32.totalorder %s77, 0
      %s79 = scalar_select %p78, %s77, 0
      %s80 = ssub.s32 %s24, %s43
      %s81 = ssub.s32 %s75, %s79
      %s82 = sor.u32 %s80, %s81
      %p83 = scmp.eq.s32.totalorder %s82, 0
      %s85 = sadd.s32 %s84, 1
      %s86 = scalar_select %p83, %s84, %s85
      %p89 = pneg %p83
      %p90 = scmp.eq.s32.totalorder %s17, 1
      %p91 = por %p89, %p90
      %p92 = scmp.ne.s32.totalorder %s84, %s87
      %p93 = scmp.eq.s32.totalorder %s17, 0
      %p94 = por %p92, %p93
      %p95 = scmp.ne.s32.totalorder %s84, %s87
      %p96 = scmp.eq.s32.totalorder %s22, 1
      %p97 = por %p95, %p96
      %p98 = scmp.ne.s32.totalorder %s87, %s88
      %p99 = scmp.eq.s32.totalorder %s22, 0
      %p100 = por %p98, %p99
      %p101 = scmp.ne.s32.totalorder %s87, %s88
      %p102 = scmp.eq.s32.totalorder %s23, 1
      %p103 = por %p101, %p102
      %p105 = scmp.ne.s32.totalorder %s88, %s104
      %p106 = scmp.eq.s32.totalorder %s23, 0
      %p107 = por %p105, %p106
      %s108 = sadd.s32 %s26, 1
      %s109 = smul.u32 %s108, 8
      %p110 = scmp.lt.s32.totalorder %s109, 7
      %s111 = scalar_select %p110, %s109, 7
      %s112 = sadd.s32 %s35, 1
      %s113 = smul.u32 %s112, 8
      %p114 = scmp.lt.s32.totalorder %s113, 7
      %s115 = scalar_select %p114, %s113, 7
      %s116 = ssub.s32 %s24, %s43
      %s117 = ssub.s32 %s111, %s115
      %s118 = sor.u32 %s116, %s117
      %p119 = scmp.eq.s32.totalorder %s118, 0
      %s121 = sadd.s32 %s120, 1
      %s122 = scalar_select %p119, %s120, %s121
      %p125 = pneg %p119
      %p126 = scmp.eq.s32.totalorder %s17, 1
      %p127 = por %p125, %p126
      %p128 = scmp.ne.s32.totalorder %s120, %s123
      %p129 = scmp.eq.s32.totalorder %s17, 0
      %p130 = por %p128, %p129
      %p131 = scmp.ne.s32.totalorder %s120, %s123
      %p132 = scmp.eq.s32.totalorder %s22, 1
      %p133 = por %p131, %p132
      %p134 = scmp.ne.s32.totalorder %s123, %s124
      %p135 = scmp.eq.s32.totalorder %s22, 0
      %p136 = por %p134, %p135
      %p137 = scmp.ne.s32.totalorder %s123, %s124
      %p138 = scmp.eq.s32.totalorder %s23, 1
      %p139 = por %p137, %p138
      %p141 = scmp.ne.s32.totalorder %s124, %s140
      %p142 = scmp.eq.s32.totalorder %s23, 0
      %p143 = por %p141, %p142
      %s144 = ssub.s32 %s25, %s39
      %p145 = scmp.eq.s32.totalorder %s144, 0
      %s147 = sadd.s32 %s146, 1
      %s148 = scalar_select %p145, %s146, %s147
      %p151 = pneg %p145
      %p152 = scmp.eq.s32.totalorder %s17, 1
      %p153 = por %p151, %p152
      %p154 = scmp.ne.s32.totalorder %s146, %s149
      %p155 = scmp.eq.s32.totalorder %s17, 0
      %p156 = por %p154, %p155
      %p157 = scmp.ne.s32.totalorder %s146, %s149
      %p158 = scmp.eq.s32.totalorder %s22, 1
      %p159 = por %p157, %p158
      %p160 = scmp.ne.s32.totalorder %s149, %s150
      %p161 = scmp.eq.s32.totalorder %s22, 0
      %p162 = por %p160, %p161
      %p163 = scmp.ne.s32.totalorder %s149, %s150
      %p164 = scmp.eq.s32.totalorder %s23, 1
      %p165 = por %p163, %p164
      %p167 = scmp.ne.s32.totalorder %s150, %s166
      %p168 = scmp.eq.s32.totalorder %s23, 0
      %p169 = por %p167, %p168
      %s170 = ssub.s32 %s25, %s39
      %p171 = scmp.eq.s32.totalorder %s170, 0
      %s173 = sadd.s32 %s172, 1
      %s174 = scalar_select %p171, %s172, %s173
      %p177 = pneg %p171
      %p178 = scmp.eq.s32.totalorder %s17, 1
      %p179 = por %p177, %p178
      %p180 = scmp.ne.s32.totalorder %s172, %s175
      %p181 = scmp.eq.s32.totalorder %s17, 0
      %p182 = por %p180, %p181
      %p183 = scmp.ne.s32.totalorder %s172, %s175
      %p184 = scmp.eq.s32.totalorder %s22, 1
      %p185 = por %p183, %p184
      %p186 = scmp.ne.s32.totalorder %s175, %s176
      %p187 = scmp.eq.s32.totalorder %s22, 0
      %p188 = por %p186, %p187
      %p189 = scmp.ne.s32.totalorder %s175, %s176
      %p190 = scmp.eq.s32.totalorder %s23, 1
      %p191 = por %p189, %p190
      %p193 = scmp.ne.s32.totalorder %s176, %s192
      %p194 = scmp.eq.s32.totalorder %s23, 0
      %p195 = por %p193, %p194
      %s196 = ssub.s32 %s24, %s43
      %s197 = ssub.s32 %s26, %s35
      %s198 = sor.u32 %s196, %s197
      %s199 = ssub.s32 %s25, %s39
      %s200 = sor.u32 %s198, %s199
      %p201 = scmp.eq.s32.totalorder %s200, 0
      %s203 = sadd.s32 %s202, 1
      %s204 = scalar_select %p201, %s202, %s203
      %p207 = pneg %p201
      %p208 = scmp.eq.s32.totalorder %s17, 1
      %p209 = por %p207, %p208
      %p210 = scmp.ne.s32.totalorder %s202, %s205
      %p211 = scmp.eq.s32.totalorder %s17, 0
      %p212 = por %p210, %p211
      %p213 = scmp.ne.s32.totalorder %s202, %s205
      %p214 = scmp.eq.s32.totalorder %s22, 1
      %p215 = por %p213, %p214
      %p216 = scmp.ne.s32.totalorder %s205, %s206
      %p217 = scmp.eq.s32.totalorder %s22, 0
      %p218 = por %p216, %p217
      %p219 = scmp.ne.s32.totalorder %s205, %s206
      %p220 = scmp.eq.s32.totalorder %s23, 1
      %p221 = por %p219, %p220
      %p223 = scmp.ne.s32.totalorder %s206, %s222
      %p224 = scmp.eq.s32.totalorder %s23, 0
      %p225 = por %p223, %p224
      %p226 = scmp.le.s32.totalorder 1, %s17
      %p227 = scmp.lt.s32.totalorder %s17, 3
      %p228 = pnand %p226, %p227
      %p229 = pneg %p228
      // Predicated region
      $region9: #{tpu_custom_call.1} parent=5 // pred_check
        _
      $region10: #{tpu_custom_call.1} parent=5 // pred_check_branch
        %231 = sbr.rel (%p228) target = $region12
      $region11: #{tpu_custom_call.1} parent=5 // pred_region
        %s232 = ssub.s32 %s17, 1
        // Predicated region
        $region13: #{tpu_custom_call.1} parent=11 // pred_check
          %p233 = pneg %p162
        $region14: #{tpu_custom_call.1} parent=11 // pred_check_branch
          %235 = sbr.rel (%p233) target = $region16
        $region15: #{tpu_custom_call.1} parent=11 // pred_region
          %p236 = scmp.lt.s32.totalorder %s28, 0
          %s237 = scalar_select %p236, %s28, 0
          %s238 = smul.addr %s237, 4
          %s239 = scalar_lea.vmem %s3, %s238
        $region16: #{tpu_custom_call.1} parent=11 // pred_fallthru
          _
        // Predicated region
        $region17: #{tpu_custom_call.1} parent=11 // pred_check
          %p240 = pneg %p188
        $region18: #{tpu_custom_call.1} parent=11 // pred_check_branch
          %242 = sbr.rel (%p240) target = $region20
        $region19: #{tpu_custom_call.1} parent=11 // pred_region
          %p243 = scmp.lt.s32.totalorder %s28, 0
          %s244 = scalar_select %p243, %s28, 0
          %s245 = scalar_lea.vmem %s4, %s244
        $region20: #{tpu_custom_call.1} parent=11 // pred_fallthru
          _
      $region12: #{tpu_custom_call.1} parent=5 // pred_fallthru
        _
      %p246 = scmp.lt.s32.totalorder %s17, 2
      // Predicated region
      $region21: #{tpu_custom_call.1} parent=5 // pred_check
        %p247 = pneg %p246
      $region22: #{tpu_custom_call.1} parent=5 // pred_check_branch
        %249 = sbr.rel (%p247) target = $region24
      $region23: #{tpu_custom_call.1} parent=5 // pred_region
        // Predicated region
        $region25: #{tpu_custom_call.1} parent=23 // pred_check
          %p250 = pneg %p58
        $region26: #{tpu_custom_call.1} parent=23 // pred_check_branch
          %252 = sbr.rel (%p250) target = $region28
        $region27: #{tpu_custom_call.1} parent=23 // pred_region
          %s253 = smul.u32 8, %s26
          %p254 = scmp.lt.s32.totalorder %s24, 1
          %s255 = scalar_select %p254, %s24, 1
          %p256 = scmp.lt.s32.totalorder %s253, 7
          %s257 = scalar_select %p256, %s253, 7
          %s258 = smul.addr %s255, 8
          %s259 = sadd.s32 %s257, %s258
          %s260 = smul.addr %s259, 4
          %s261 = scalar_lea.vmem %s0, %s260
          %s262 = smul.u32 8, %s26
        $region28: #{tpu_custom_call.1} parent=23 // pred_fallthru
          _
        // Predicated region
        $region29: #{tpu_custom_call.1} parent=23 // pred_check
          %p263 = pneg %p94
        $region30: #{tpu_custom_call.1} parent=23 // pred_check_branch
          %265 = sbr.rel (%p263) target = $region32
        $region31: #{tpu_custom_call.1} parent=23 // pred_region
          %s266 = smul.u32 %s26, 8
          %s267 = ssub.s32 %s266, 1
          %p268 = scmp.gt.s32.totalorder %s267, 0
          %s269 = scalar_select %p268, %s267, 0
          %p270 = scmp.lt.s32.totalorder %s24, 1
          %s271 = scalar_select %p270, %s24, 1
          %p272 = scmp.lt.s32.totalorder %s269, 7
          %s273 = scalar_select %p272, %s269, 7
          %s274 = smul.addr %s271, 8
          %s275 = sadd.s32 %s273, %s274
          %s276 = smul.addr %s275, 4
          %s277 = scalar_lea.vmem %s1, %s276
          %s278 = smul.u32 %s26, 8
          %s279 = ssub.s32 %s278, 1
          %p280 = scmp.gt.s32.totalorder %s279, 0
          %s281 = scalar_select %p280, %s279, 0
        $region32: #{tpu_custom_call.1} parent=23 // pred_fallthru
          _
        // Predicated region
        $region33: #{tpu_custom_call.1} parent=23 // pred_check
          %p282 = pneg %p130
        $region34: #{tpu_custom_call.1} parent=23 // pred_check_branch
          %284 = sbr.rel (%p282) target = $region36
        $region35: #{tpu_custom_call.1} parent=23 // pred_region
          %s285 = sand.u32 %s120, 1
          %s286 = scalar_lea.sflag [#allocation3], %s285
          %s287 = sand.u32 %s120, 1
          %s288 = smul.addr %s287, 4
          %s289 = scalar_lea.vmem [#allocation2], %s288
          %s290 = sadd.s32 %s26, 1
          %s291 = smul.u32 %s290, 8
          %p292 = scmp.lt.s32.totalorder %s291, 7
          %s293 = scalar_select %p292, %s291, 7
          %s295 = ssub.s32 64, 64
          %296 = vsyncadd %s286, %s295
          %s297 = smul.addr %s24, 8
          %s298 = sadd.s32 %s293, %s297
          %s299 = smul.addr %s298, 64
          %s300 = scalar_lea.hbm %s2, %s299
          %s302 = sshll.u32 %s289, 4
          %s303 = int_to_ptr.vmem [resolvable:$true] %s302
          %305 = dma.hbm_to_vmem [thread:$0]  %s300, 64, %s303, %s286
        $region36: #{tpu_custom_call.1} parent=23 // pred_fallthru
          _
      $region24: #{tpu_custom_call.1} parent=5 // pred_fallthru
        _
      %p306 = scmp.le.s32.totalorder 1, %s17
      %p307 = scmp.lt.s32.totalorder %s17, 3
      %p308 = pnand %p306, %p307
      %p309 = pneg %p308
      // Predicated region
      $region37: #{tpu_custom_call.1} parent=5 // pred_check
        _
      $region38: #{tpu_custom_call.1} parent=5 // pred_check_branch
        %311 = sbr.rel (%p308) target = $region40
      $region39: #{tpu_custom_call.1} parent=5 // pred_region
        %s312 = ssub.s32 %s17, 1
        %s313 = sand.u32 %s123, 1
        %s314 = scalar_lea.sflag [#allocation3], %s313
        %s315 = sand.u32 %s123, 1
        %s316 = smul.addr %s315, 4
        %s317 = scalar_lea.vmem [#allocation2], %s316
        // Predicated region
        $region41: #{tpu_custom_call.1} parent=39 // pred_check
          %p318 = pneg %p136
        $region42: #{tpu_custom_call.1} parent=39 // pred_check_branch
          %320 = sbr.rel (%p318) target = $region44
        $region43: #{tpu_custom_call.1} parent=39 // pred_region
          %321 = dma.done %s314, 64
        $region44: #{tpu_custom_call.1} parent=39 // pred_fallthru
          _
        %s322 = smul.u32 8, %s29
        %p323 = scmp.lt.s32.totalorder %s27, 1
        %s324 = scalar_select %p323, %s27, 1
        %p325 = scmp.lt.s32.totalorder %s322, 7
        %s326 = scalar_select %p325, %s322, 7
        %s327 = smul.addr %s324, 8
        %s328 = sadd.s32 %s326, %s327
        %s329 = smul.addr %s328, 4
        %s330 = scalar_lea.vmem %s0, %s329
        %p331 = pneg %p64
        %p332 = pneg %p61
        %s333 = smul.u32 %s29, 8
        %s334 = ssub.s32 %s333, 1
        %p335 = scmp.gt.s32.totalorder %s334, 0
        %s336 = scalar_select %p335, %s334, 0
        %p337 = scmp.lt.s32.totalorder %s27, 1
        %s338 = scalar_select %p337, %s27, 1
        %p339 = scmp.lt.s32.totalorder %s336, 7
        %s340 = scalar_select %p339, %s336, 7
        %s341 = smul.addr %s338, 8
        %s342 = sadd.s32 %s340, %s341
        %s343 = smul.addr %s342, 4
        %s344 = scalar_lea.vmem %s1, %s343
        %p345 = pneg %p100
        %p346 = pneg %p97
        %s347 = sand.u32 %s123, 1
        %s348 = scalar_lea.sflag [#allocation3], %s347
        %s349 = sand.u32 %s123, 1
        %s350 = smul.addr %s349, 4
        %s351 = scalar_lea.vmem [#allocation2], %s350
        %p352 = pneg %p136
        %p353 = pneg %p133
        %p354 = scmp.lt.s32.totalorder %s28, 0
        %s355 = scalar_select %p354, %s28, 0
        %s356 = smul.addr %s355, 4
        %s357 = scalar_lea.vmem %s3, %s356
        %p358 = pneg %p162
        %p359 = pneg %p159
        %p360 = scmp.lt.s32.totalorder %s28, 0
        %s361 = scalar_select %p360, %s28, 0
        %s362 = scalar_lea.vmem %s4, %s361
        %p363 = pneg %p188
        %p364 = pneg %p185
        %p365 = pneg %p218
        %p366 = pneg %p215
        %s367 = sand.u32 %s205, 1
        %s368 = scalar_lea.sflag [#allocation4], %s367
        %s369 = sand.u32 %s205, 1
        %s370 = smul.addr %s369, 32
        %s371 = scalar_lea.vmem [#allocation5], %s370
        %s372 = smul.u32 8, %s29
        %p373 = scmp.lt.s32.totalorder %s27, 1
        %s374 = scalar_select %p373, %s27, 1
        %p375 = scmp.lt.s32.totalorder %s372, 7
        %s376 = scalar_select %p375, %s372, 7
        %s377 = smul.addr %s374, 8
        %s378 = sadd.s32 %s376, %s377
        %s379 = smul.addr %s378, 4
        %s380 = scalar_lea.vmem %s0, %s379
        %s381 = smul.u32 8, %s29
        %s382 = smul.u32 %s29, 8
        %s383 = ssub.s32 %s382, 1
        %p384 = scmp.gt.s32.totalorder %s383, 0
        %s385 = scalar_select %p384, %s383, 0
        %p386 = scmp.lt.s32.totalorder %s27, 1
        %s387 = scalar_select %p386, %s27, 1
        %p388 = scmp.lt.s32.totalorder %s385, 7
        %s389 = scalar_select %p388, %s385, 7
        %s390 = smul.addr %s387, 8
        %s391 = sadd.s32 %s389, %s390
        %s392 = smul.addr %s391, 4
        %s393 = scalar_lea.vmem %s1, %s392
        %s394 = smul.u32 %s29, 8
        %s395 = ssub.s32 %s394, 1
        %p396 = scmp.gt.s32.totalorder %s395, 0
        %s397 = scalar_select %p396, %s395, 0
        %s398 = sadd.s32 %s29, 1
        %s399 = smul.u32 %s398, 8
        %p400 = scmp.lt.s32.totalorder %s399, 7
        %s401 = scalar_select %p400, %s399, 7
        %p402 = scmp.lt.s32.totalorder %s28, 0
        %s403 = scalar_select %p402, %s28, 0
        %s404 = smul.addr %s403, 4
        %s405 = scalar_lea.vmem %s3, %s404
        %p406 = scmp.lt.s32.totalorder %s28, 0
        %s407 = scalar_select %p406, %s28, 0
        %s408 = scalar_lea.vmem %s4, %s407
        %s409 = smul.u32 8, %s29
        %v411 = vld [vmem:[%s393] sm:$0xf]
        %p412 = scmp.gt.s32.totalorder %s29, 0
        %s413 = scalar_select %p412, 1, 0
        %s414 = scvt.s32.f32 %s413
        %p416 = scmp.ne.f32.partialorder %s414, %s414
        %s417 = sshrl.u32 %s414, 16
        %s418 = sand.u32 %s417, 1
        %s419 = sadd.s32 32767, %s418
        %s420 = sadd.s32 %s414, %s419
        %s421 = sand.u32 %s420, 4294901760
        %s422 = scalar_select %p416, 2143289344, %s421
        %s424 = sshrl.u32 %s422, 16
        %s425 = sshll.u32 %s424, 16
        %s426 = sor.u32 %s424, %s425
        %v427 = vstv %s426
        %v429 = vmul.bf16 %v411, %v427
        %v430 = vld [vmem:[%s317] sm:$0xf]
        %p431 = scmp.lt.s32.totalorder %s29, 0
        %s432 = scalar_select %p431, 1, 0
        %s433 = scvt.s32.f32 %s432
        %p435 = scmp.ne.f32.partialorder %s433, %s433
        %s436 = sshrl.u32 %s433, 16
        %s437 = sand.u32 %s436, 1
        %s438 = sadd.s32 32767, %s437
        %s439 = sadd.s32 %s433, %s438
        %s440 = sand.u32 %s439, 4294901760
        %s441 = scalar_select %p435, 2143289344, %s440
        %s443 = sshrl.u32 %s441, 16
        %s444 = sshll.u32 %s443, 16
        %s445 = sor.u32 %s443, %s444
        %v446 = vstv %s445
        %v448 = vmul.bf16 %v430, %v446
        %v449 = vld [vmem:[%s380] sm:$0xf]
        %v450 = vld [vmem:[%s380 + $0x4] sm:$0xf]
        %v451 = vld [vmem:[%s380 + $0x8] sm:$0xf]
        %v452 = vld [vmem:[%s380 + $0xc] sm:$0xf]
        %v453 = vld [vmem:[%s380 + $0x10] sm:$0xf]
        %v454 = vld [vmem:[%s380 + $0x14] sm:$0xf]
        %v455 = vld [vmem:[%s380 + $0x18] sm:$0xf]
        %v456 = vld [vmem:[%s380 + $0x1c] sm:$0xf]
        %v467 = vunpack.c.l.b16 %v429
        %v468 = vunpack.c.l.b16 %v449
        %v469 = vunpack.c.l.b16 %v450
        %v470 = vunpack.c.l.b16 %v451
        %v471 = vunpack.c.l.b16 %v452
        %v472 = vunpack.c.l.b16 %v453
        %v473 = vunpack.c.l.b16 %v454
        %v474 = vunpack.c.l.b16 %v455
        %v475 = vunpack.c.l.b16 %v456
        %v476 = vunpack.c.l.b16 %v448
        %v477 = vpack.c.b16 %v467, %v467
        %v478 = vpack.c.b16 %v468, %v468
        %v479 = vpack.c.b16 %v469, %v469
        %v480 = vpack.c.b16 %v470, %v470
        %v481 = vpack.c.b16 %v471, %v471
        %v482 = vpack.c.b16 %v472, %v472
        %v483 = vpack.c.b16 %v473, %v473
        %v484 = vpack.c.b16 %v474, %v474
        %v485 = vpack.c.b16 %v475, %v475
        %v486 = vpack.c.b16 %v476, %v476
        %v488 = vshrl.u32 %v477, 16
        %v490 = vrot.slane %v488, 7
        %v491 = vshll.u32 %v477, 16
        %v493 = vor.u32 %v490, %v491
        %v495 = vshrl.u32 %v478, 16
        %v497 = vrot.slane %v495, 7
        %v498 = vshll.u32 %v478, 16
        %v500 = vor.u32 %v497, %v498
        %v502 = vshrl.u32 %v479, 16
        %v504 = vrot.slane %v502, 7
        %v505 = vshll.u32 %v479, 16
        %v507 = vor.u32 %v504, %v505
        %v509 = vshrl.u32 %v480, 16
        %v511 = vrot.slane %v509, 7
        %v512 = vshll.u32 %v480, 16
        %v514 = vor.u32 %v511, %v512
        %v516 = vshrl.u32 %v481, 16
        %v518 = vrot.slane %v516, 7
        %v519 = vshll.u32 %v481, 16
        %v521 = vor.u32 %v518, %v519
        %v523 = vshrl.u32 %v482, 16
        %v525 = vrot.slane %v523, 7
        %v526 = vshll.u32 %v482, 16
        %v528 = vor.u32 %v525, %v526
        %v530 = vshrl.u32 %v483, 16
        %v532 = vrot.slane %v530, 7
        %v533 = vshll.u32 %v483, 16
        %v535 = vor.u32 %v532, %v533
        %v537 = vshrl.u32 %v484, 16
        %v539 = vrot.slane %v537, 7
        %v540 = vshll.u32 %v484, 16
        %v542 = vor.u32 %v539, %v540
        %v544 = vshrl.u32 %v485, 16
        %v546 = vrot.slane %v544, 7
        %v547 = vshll.u32 %v485, 16
        %v549 = vor.u32 %v546, %v547
        %v551 = vshrl.u32 %v486, 16
        %v553 = vrot.slane %v551, 7
        %v554 = vshll.u32 %v486, 16
        %v556 = vor.u32 %v553, %v554
        %vm567 = vcmask 1040384
        %vm568 = vsmask.f32 256
        %vm569 = vmand %vm567, %vm568
        %v570 = vsel %vm569, 0, %v493
        %v571 = vsel %vm569, 0, %v500
        %v572 = vsel %vm569, 0, %v507
        %v573 = vsel %vm569, 0, %v514
        %v574 = vsel %vm569, 0, %v521
        %v575 = vsel %vm569, 0, %v528
        %v576 = vsel %vm569, 0, %v535
        %v577 = vsel %vm569, 0, %v542
        %v578 = vsel %vm569, 0, %v549
        %v579 = vsel %vm569, 0, %v556
        %vm580 = vcmask 1044480
        %vm581 = vsmask.f32 4352
        %vm582 = vmand %vm580, %vm581
        %v583 = vsel %vm582, %v570, 0
        %v584 = vsel %vm582, %v571, 0
        %v585 = vsel %vm582, %v572, 0
        %v586 = vsel %vm582, %v573, 0
        %v587 = vsel %vm582, %v574, 0
        %v588 = vsel %vm582, %v575, 0
        %v589 = vsel %vm582, %v576, 0
        %v590 = vsel %vm582, %v577, 0
        %v591 = vsel %vm582, %v578, 0
        %v592 = vsel %vm582, %v579, 0
        %v594 = vshrl.u32 %v583, 16
        %v596 = vshll.u32 %v583, 16
        %v598 = vrot.slane %v596, 1
        %v599 = vor.u32 %v594, %v598
        %v601 = vshrl.u32 %v584, 16
        %v603 = vshll.u32 %v584, 16
        %v605 = vrot.slane %v603, 1
        %v606 = vor.u32 %v601, %v605
        %v608 = vshrl.u32 %v585, 16
        %v610 = vshll.u32 %v585, 16
        %v612 = vrot.slane %v610, 1
        %v613 = vor.u32 %v608, %v612
        %v615 = vshrl.u32 %v586, 16
        %v617 = vshll.u32 %v586, 16
        %v619 = vrot.slane %v617, 1
        %v620 = vor.u32 %v615, %v619
        %v622 = vshrl.u32 %v587, 16
        %v624 = vshll.u32 %v587, 16
        %v626 = vrot.slane %v624, 1
        %v627 = vor.u32 %v622, %v626
        %v629 = vshrl.u32 %v588, 16
        %v631 = vshll.u32 %v588, 16
        %v633 = vrot.slane %v631, 1
        %v634 = vor.u32 %v629, %v633
        %v636 = vshrl.u32 %v589, 16
        %v638 = vshll.u32 %v589, 16
        %v640 = vrot.slane %v638, 1
        %v641 = vor.u32 %v636, %v640
        %v643 = vshrl.u32 %v590, 16
        %v645 = vshll.u32 %v590, 16
        %v647 = vrot.slane %v645, 1
        %v648 = vor.u32 %v643, %v647
        %649 = vrot.lane.b32.xlu0 %v599, 32
        %v650 = vpop.permute.xlu0 %649
        %651 = vrot.lane.b32.xlu0 %v606, 32
        %v652 = vpop.permute.xlu0 %651
        %653 = vrot.lane.b32.xlu0 %v613, 32
        %v654 = vpop.permute.xlu0 %653
        %655 = vrot.lane.b32.xlu0 %v620, 32
        %v656 = vpop.permute.xlu0 %655
        %657 = vrot.lane.b32.xlu0 %v627, 32
        %v658 = vpop.permute.xlu0 %657
        %659 = vrot.lane.b32.xlu0 %v634, 32
        %v660 = vpop.permute.xlu0 %659
        %661 = vrot.lane.b32.xlu0 %v641, 32
        %v662 = vpop.permute.xlu0 %661
        %663 = vrot.lane.b32.xlu0 %v648, 32
        %v664 = vpop.permute.xlu0 %663
        %v673 = vrot.slane %v583, 1
        %v674 = vrot.slane %v584, 1
        %v675 = vrot.slane %v585, 1
        %v676 = vrot.slane %v586, 1
        %v677 = vrot.slane %v587, 1
        %v678 = vrot.slane %v588, 1
        %v679 = vrot.slane %v589, 1
        %v680 = vrot.slane %v590, 1
        %681 = vrot.lane.b32.xlu0 %v673, 64
        %v682 = vpop.permute.xlu0 %681
        %683 = vrot.lane.b32.xlu0 %v674, 64
        %v684 = vpop.permute.xlu0 %683
        %685 = vrot.lane.b32.xlu0 %v675, 64
        %v686 = vpop.permute.xlu0 %685
        %687 = vrot.lane.b32.xlu0 %v676, 64
        %v688 = vpop.permute.xlu0 %687
        %689 = vrot.lane.b32.xlu0 %v677, 64
        %v690 = vpop.permute.xlu0 %689
        %691 = vrot.lane.b32.xlu0 %v678, 64
        %v692 = vpop.permute.xlu0 %691
        %693 = vrot.lane.b32.xlu0 %v679, 64
        %v694 = vpop.permute.xlu0 %693
        %695 = vrot.lane.b32.xlu0 %v680, 64
        %v696 = vpop.permute.xlu0 %695
        %698 = vrot.lane.b32.xlu0 %v584, 96
        %v699 = vpop.permute.xlu0 %698
        %700 = vrot.lane.b32.xlu0 %v585, 96
        %v701 = vpop.permute.xlu0 %700
        %702 = vrot.lane.b32.xlu0 %v586, 96
        %v703 = vpop.permute.xlu0 %702
        %704 = vrot.lane.b32.xlu0 %v587, 96
        %v705 = vpop.permute.xlu0 %704
        %706 = vrot.lane.b32.xlu0 %v588, 96
        %v707 = vpop.permute.xlu0 %706
        %708 = vrot.lane.b32.xlu0 %v589, 96
        %v709 = vpop.permute.xlu0 %708
        %710 = vrot.lane.b32.xlu0 %v590, 96
        %v711 = vpop.permute.xlu0 %710
        %712 = vrot.lane.b32.xlu0 %v591, 96
        %v713 = vpop.permute.xlu0 %712
        %v715 = vshrl.u32 %v591, 16
        %v717 = vshll.u32 %v591, 16
        %v719 = vrot.slane %v717, 1
        %v720 = vor.u32 %v715, %v719
        %v721 = vrot.slane %v591, 1
        %722 = vrot.lane.b32.xlu0 %v674, 32
        %v723 = vpop.permute.xlu0 %722
        %724 = vrot.lane.b32.xlu0 %v675, 32
        %v725 = vpop.permute.xlu0 %724
        %726 = vrot.lane.b32.xlu0 %v676, 32
        %v727 = vpop.permute.xlu0 %726
        %728 = vrot.lane.b32.xlu0 %v677, 32
        %v729 = vpop.permute.xlu0 %728
        %730 = vrot.lane.b32.xlu0 %v678, 32
        %v731 = vpop.permute.xlu0 %730
        %732 = vrot.lane.b32.xlu0 %v679, 32
        %v733 = vpop.permute.xlu0 %732
        %734 = vrot.lane.b32.xlu0 %v680, 32
        %v735 = vpop.permute.xlu0 %734
        %736 = vrot.lane.b32.xlu0 %v721, 32
        %v737 = vpop.permute.xlu0 %736
        %739 = vrot.lane.b32.xlu0 %v585, 64
        %v740 = vpop.permute.xlu0 %739
        %741 = vrot.lane.b32.xlu0 %v586, 64
        %v742 = vpop.permute.xlu0 %741
        %743 = vrot.lane.b32.xlu0 %v587, 64
        %v744 = vpop.permute.xlu0 %743
        %745 = vrot.lane.b32.xlu0 %v588, 64
        %v746 = vpop.permute.xlu0 %745
        %747 = vrot.lane.b32.xlu0 %v589, 64
        %v748 = vpop.permute.xlu0 %747
        %749 = vrot.lane.b32.xlu0 %v590, 64
        %v750 = vpop.permute.xlu0 %749
        %751 = vrot.lane.b32.xlu0 %v591, 64
        %v752 = vpop.permute.xlu0 %751
        %753 = vrot.lane.b32.xlu0 %v592, 64
        %v754 = vpop.permute.xlu0 %753
        %v756 = vshrl.u32 %v592, 16
        %v758 = vshll.u32 %v592, 16
        %v760 = vrot.slane %v758, 1
        %v761 = vor.u32 %v756, %v760
        %762 = vrot.lane.b32.xlu0 %v613, 96
        %v763 = vpop.permute.xlu0 %762
        %764 = vrot.lane.b32.xlu0 %v620, 96
        %v765 = vpop.permute.xlu0 %764
        %766 = vrot.lane.b32.xlu0 %v627, 96
        %v767 = vpop.permute.xlu0 %766
        %768 = vrot.lane.b32.xlu0 %v634, 96
        %v769 = vpop.permute.xlu0 %768
        %770 = vrot.lane.b32.xlu0 %v641, 96
        %v771 = vpop.permute.xlu0 %770
        %772 = vrot.lane.b32.xlu0 %v648, 96
        %v773 = vpop.permute.xlu0 %772
        %774 = vrot.lane.b32.xlu0 %v720, 96
        %v775 = vpop.permute.xlu0 %774
        %776 = vrot.lane.b32.xlu0 %v761, 96
        %v777 = vpop.permute.xlu0 %776
        %v778 = vrot.slane %v592, 1
        %vm779 = vcmask 261120
        %v781 = vsel %vm779, %v583, %v650
        %v783 = vsel %vm779, %v584, %v652
        %v785 = vsel %vm779, %v585, %v654
        %v787 = vsel %vm779, %v586, %v656
        %v789 = vsel %vm779, %v587, %v658
        %v791 = vsel %vm779, %v588, %v660
        %v793 = vsel %vm779, %v589, %v662
        %v795 = vsel %vm779, %v590, %v664
        %vm796 = vcmask 523264
        %v798 = vsel %vm796, %v781, %v682
        %v800 = vsel %vm796, %v783, %v684
        %v802 = vsel %vm796, %v785, %v686
        %v804 = vsel %vm796, %v787, %v688
        %v806 = vsel %vm796, %v789, %v690
        %v808 = vsel %vm796, %v791, %v692
        %v810 = vsel %vm796, %v793, %v694
        %v812 = vsel %vm796, %v795, %v696
        %vm813 = vcmask 785408
        %v815 = vsel %vm813, %v798, %v699
        %v817 = vsel %vm813, %v800, %v701
        %v819 = vsel %vm813, %v802, %v703
        %v821 = vsel %vm813, %v804, %v705
        %v823 = vsel %vm813, %v806, %v707
        %v825 = vsel %vm813, %v808, %v709
        %v827 = vsel %vm813, %v810, %v711
        %v829 = vsel %vm813, %v812, %v713
        %v832 = vsel %vm779, %v606, %v723
        %v835 = vsel %vm779, %v613, %v725
        %v838 = vsel %vm779, %v620, %v727
        %v841 = vsel %vm779, %v627, %v729
        %v844 = vsel %vm779, %v634, %v731
        %v847 = vsel %vm779, %v641, %v733
        %v850 = vsel %vm779, %v648, %v735
        %v853 = vsel %vm779, %v720, %v737
        %v855 = vsel %vm796, %v832, %v740
        %v857 = vsel %vm796, %v835, %v742
        %v859 = vsel %vm796, %v838, %v744
        %v861 = vsel %vm796, %v841, %v746
        %v863 = vsel %vm796, %v844, %v748
        %v865 = vsel %vm796, %v847, %v750
        %v867 = vsel %vm796, %v850, %v752
        %v869 = vsel %vm796, %v853, %v754
        %v871 = vsel %vm813, %v855, %v763
        %v873 = vsel %vm813, %v857, %v765
        %v875 = vsel %vm813, %v859, %v767
        %v877 = vsel %vm813, %v861, %v769
        %v879 = vsel %vm813, %v863, %v771
        %v881 = vsel %vm813, %v865, %v773
        %v883 = vsel %vm813, %v867, %v775
        %v885 = vsel %vm813, %v869, %v777
        %v902 = vunpack.c.l.b16 %v815
        %v903 = vunpack.c.l.b16 %v871
        %v904 = vunpack.c.l.b16 %v675
        %v905 = vunpack.c.l.b16 %v817
        %v906 = vunpack.c.l.b16 %v873
        %v907 = vunpack.c.l.b16 %v676
        %v908 = vunpack.c.l.b16 %v819
        %v909 = vunpack.c.l.b16 %v875
        %v910 = vunpack.c.l.b16 %v677
        %v911 = vunpack.c.l.b16 %v821
        %v912 = vunpack.c.l.b16 %v877
        %v913 = vunpack.c.l.b16 %v678
        %v914 = vunpack.c.l.b16 %v823
        %v915 = vunpack.c.l.b16 %v879
        %v916 = vunpack.c.l.b16 %v679
        %v917 = vunpack.c.l.b16 %v825
        %v918 = vunpack.c.l.b16 %v881
        %v919 = vunpack.c.l.b16 %v680
        %v920 = vunpack.c.l.b16 %v827
        %v921 = vunpack.c.l.b16 %v883
        %v922 = vunpack.c.l.b16 %v721
        %v923 = vunpack.c.l.b16 %v829
        %v924 = vunpack.c.l.b16 %v885
        %v925 = vunpack.c.l.b16 %v778
        %v926 = vld [vmem:[%s405] sm:$0xf]
        %v927 = vld [vmem:[%s405 + $0x4] sm:$0xf]
        %v928 = vld [vmem:[%s405 + $0x8] sm:$0xf]
        %v929 = vld [vmem:[%s405 + $0xc] sm:$0xf]
        %v930 = vld [vmem:[%s405 + $0x10] sm:$0xf]
        %v931 = vld [vmem:[%s405 + $0x14] sm:$0xf]
        %v932 = vld [vmem:[%s405 + $0x18] sm:$0xf]
        %v933 = vld [vmem:[%s405 + $0x1c] sm:$0xf]
        %v934 = vld [vmem:[%s405 + $0x20] sm:$0xf]
        %v935 = vld [vmem:[%s405 + $0x24] sm:$0xf]
        %v936 = vld [vmem:[%s405 + $0x28] sm:$0xf]
        %v937 = vld [vmem:[%s405 + $0x2c] sm:$0xf]
        %v938 = vld [vmem:[%s405 + $0x30] sm:$0xf]
        %v939 = vld [vmem:[%s405 + $0x34] sm:$0xf]
        %v940 = vld [vmem:[%s405 + $0x38] sm:$0xf]
        %v941 = vld [vmem:[%s405 + $0x3c] sm:$0xf]
        %v942 = vld [vmem:[%s405 + $0x40] sm:$0xf]
        %v943 = vld [vmem:[%s405 + $0x44] sm:$0xf]
        %v944 = vld [vmem:[%s405 + $0x48] sm:$0xf]
        %v945 = vld [vmem:[%s405 + $0x4c] sm:$0xf]
        %v946 = vld [vmem:[%s405 + $0x50] sm:$0xf]
        %v947 = vld [vmem:[%s405 + $0x54] sm:$0xf]
        %v948 = vld [vmem:[%s405 + $0x58] sm:$0xf]
        %v949 = vld [vmem:[%s405 + $0x5c] sm:$0xf]
        %v950 = vld [vmem:[%s405 + $0x60] sm:$0xf]
        %v951 = vld [vmem:[%s405 + $0x64] sm:$0xf]
        %v952 = vld [vmem:[%s405 + $0x68] sm:$0xf]
        %v953 = vld [vmem:[%s405 + $0x6c] sm:$0xf]
        %v954 = vld [vmem:[%s405 + $0x70] sm:$0xf]
        %v955 = vld [vmem:[%s405 + $0x74] sm:$0xf]
        %v956 = vld [vmem:[%s405 + $0x78] sm:$0xf]
        %v957 = vld [vmem:[%s405 + $0x7c] sm:$0xf]
        %v958 = vld [vmem:[%s405 + $0x80] sm:$0xf]
        %v959 = vld [vmem:[%s405 + $0x84] sm:$0xf]
        %v960 = vld [vmem:[%s405 + $0x88] sm:$0xf]
        %v961 = vld [vmem:[%s405 + $0x8c] sm:$0xf]
        %v962 = vld [vmem:[%s408] sm:$0x1]
        %v964 = vlaneseq
        %v965 = vshrl.u32 %v964, 7
        %v966 = vsub.s32 0, %v965
        %v967 = vrot.slane %v962, %v966
        %v969 = vpack.c.b16 %v905, %v902
        %v970 = vpack.c.b16 %v906, %v903
        %v971 = vpack.c.b16 %v907, %v904
        %v972 = vpack.c.b16 %v911, %v908
        %v973 = vpack.c.b16 %v912, %v909
        %v974 = vpack.c.b16 %v913, %v910
        %v975 = vpack.c.b16 %v917, %v914
        %v976 = vpack.c.b16 %v918, %v915
        %v977 = vpack.c.b16 %v919, %v916
        %v978 = vpack.c.b16 %v923, %v920
        %v979 = vpack.c.b16 %v924, %v921
        %v980 = vpack.c.b16 %v925, %v922
        %v1025 = vunpack.c.l.b16 %v926
        %v1026 = vunpack.c.l.b16 %v927
        %v1027 = vunpack.c.l.b16 %v928
        %v1028 = vunpack.c.l.b16 %v929
        %v1029 = vunpack.c.l.b16 %v930
        %v1030 = vunpack.c.l.b16 %v931
        %v1031 = vunpack.c.l.b16 %v932
        %v1032 = vunpack.c.l.b16 %v933
        %v1033 = vunpack.c.l.b16 %v934
        %v1034 = vunpack.c.l.b16 %v935
        %v1035 = vunpack.c.l.b16 %v936
        %v1036 = vunpack.c.l.b16 %v937
        %v1037 = vunpack.c.l.b16 %v938
        %v1038 = vunpack.c.l.b16 %v939
        %v1039 = vunpack.c.l.b16 %v940
        %v1040 = vunpack.c.l.b16 %v941
        %v1041 = vunpack.c.l.b16 %v942
        %v1042 = vunpack.c.l.b16 %v943
        %v1043 = vunpack.c.l.b16 %v944
        %v1044 = vunpack.c.l.b16 %v945
        %v1045 = vunpack.c.l.b16 %v946
        %v1046 = vunpack.c.l.b16 %v947
        %v1047 = vunpack.c.l.b16 %v948
        %v1048 = vunpack.c.l.b16 %v949
        %v1049 = vunpack.c.l.b16 %v950
        %v1050 = vunpack.c.l.b16 %v951
        %v1051 = vunpack.c.l.b16 %v952
        %v1052 = vunpack.c.l.b16 %v953
        %v1053 = vunpack.c.l.b16 %v954
        %v1054 = vunpack.c.l.b16 %v955
        %v1055 = vunpack.c.l.b16 %v956
        %v1056 = vunpack.c.l.b16 %v957
        %v1057 = vunpack.c.l.b16 %v958
        %v1058 = vunpack.c.l.b16 %v959
        %v1059 = vunpack.c.l.b16 %v960
        %v1060 = vunpack.c.l.b16 %v961
        %v1061 = vpack.c.b16 %v1026, %v1025
        %v1062 = vpack.c.b16 %v1028, %v1027
        %v1063 = vpack.c.b16 %v1030, %v1029
        %v1064 = vpack.c.b16 %v1032, %v1031
        %v1065 = vpack.c.b16 %v1034, %v1033
        %v1066 = vpack.c.b16 %v1036, %v1035
        %v1067 = vpack.c.b16 %v1038, %v1037
        %v1068 = vpack.c.b16 %v1040, %v1039
        %v1069 = vpack.c.b16 %v1042, %v1041
        %v1070 = vpack.c.b16 %v1044, %v1043
        %v1071 = vpack.c.b16 %v1046, %v1045
        %v1072 = vpack.c.b16 %v1048, %v1047
        %v1073 = vpack.c.b16 %v1050, %v1049
        %v1074 = vpack.c.b16 %v1052, %v1051
        %v1075 = vpack.c.b16 %v1054, %v1053
        %v1076 = vpack.c.b16 %v1056, %v1055
        %v1077 = vpack.c.b16 %v1058, %v1057
        %v1078 = vpack.c.b16 %v1060, %v1059
        %v1098 = vsel %vm779, %v971, 0
        %v1101 = vsel %vm779, %v974, 0
        %v1104 = vsel %vm779, %v977, 0
        %v1107 = vsel %vm779, %v980, 0
        %1109 = vmatprep.subr.bf16.mxu0 0
        %1110 = vmatpush1.bf16.msra.mxu0 %v1061
        %1111 = vmatprep.subr.bf16.mxu0 0
        %1112 = vmatpush1.bf16.msra.mxu0 %v1062
        %1113 = vmatprep.subr.bf16.mxu0 0
        %1114 = vmatpush1.bf16.msra.mxu0 %v1063
        %1115 = vmatprep.subr.bf16.mxu0 0
        %1116 = vmatpush1.bf16.msra.mxu0 %v1064
        %1117 = vmatprep.subr.bf16.mxu0 0
        %1118 = vmatpush1.bf16.msra.mxu0 %v1065
        %1119 = vmatprep.subr.bf16.mxu0 0
        %1120 = vmatpush1.bf16.msra.mxu0 %v1066
        %1121 = vmatprep.subr.bf16.mxu0 0
        %1122 = vmatpush1.bf16.msra.mxu0 %v1067
        %1123 = vmatprep.subr.bf16.mxu0 0
        %1124 = vmatpush1.bf16.msra.mxu0 %v1068
        %1125 = vmatprep.subr.bf16.mxu0 0
        %1126 = vmatpush1.bf16.msra.mxu0 %v1069
        %1127 = vmatprep.subr.bf16.mxu0 0
        %1128 = vmatpush1.bf16.msra.mxu0 %v1070
        %1129 = vmatprep.subr.bf16.mxu0 0
        %1130 = vmatpush1.bf16.msra.mxu0 %v1071
        %1131 = vmatprep.subr.bf16.mxu0 0
        %1132 = vmatpush1.bf16.msra.mxu0 %v1072
        %1133 = vmatprep.subr.bf16.mxu0 0
        %1134 = vmatpush1.bf16.msra.mxu0 %v1073
        %1135 = vmatprep.subr.bf16.mxu0 0
        %1136 = vmatpush1.bf16.msra.mxu0 %v1074
        %1137 = vmatprep.subr.bf16.mxu0 0
        %1138 = vmatpush1.bf16.msra.mxu0 %v1075
        %1139 = vmatprep.subr.bf16.mxu0 0
        %1140 = vmatpush1.bf16.msra.mxu0 %v1076
        %1141 = vmatprep.mubr.bf16.mxu0 %v970
        %1142 = vmatmul.mubr.bf16.gmra.mrb[0].mxu0 %v969
        %v1143 = vpop.f32.mrb[0].mxu0
        %v1144 = vadd.f32 %v967, %v1143
        %v1145 = vpop.f32.mrb[0].mxu0
        %v1146 = vpop.f32.mrb[0].mxu0
        %v1147 = vadd.f32 %v967, %v1146
        %v1148 = vpop.f32.mrb[0].mxu0
        %1149 = vmatprep.mubr.bf16.mxu0 %v973
        %1150 = vmatmul.mubr.bf16.gmra.mrb[0].mxu0 %v972
        %v1151 = vpop.f32.mrb[0].mxu0
        %v1152 = vadd.f32 %v967, %v1151
        %v1153 = vpop.f32.mrb[0].mxu0
        %v1154 = vpop.f32.mrb[0].mxu0
        %v1155 = vadd.f32 %v967, %v1154
        %v1156 = vpop.f32.mrb[0].mxu0
        %1157 = vmatprep.mubr.bf16.mxu0 %v976
        %1158 = vmatmul.mubr.bf16.gmra.mrb[0].mxu0 %v975
        %v1159 = vpop.f32.mrb[0].mxu0
        %v1160 = vadd.f32 %v967, %v1159
        %v1161 = vpop.f32.mrb[0].mxu0
        %v1162 = vpop.f32.mrb[0].mxu0
        %v1163 = vadd.f32 %v967, %v1162
        %v1164 = vpop.f32.mrb[0].mxu0
        %1165 = vmatprep.mubr.bf16.mxu0 %v979
        %1166 = vmatmul.mubr.bf16.gmra.mrb[0].mxu0 %v978
        %v1167 = vpop.f32.mrb[0].mxu0
        %v1168 = vadd.f32 %v967, %v1167
        %v1169 = vpop.f32.mrb[0].mxu0
        %v1170 = vpop.f32.mrb[0].mxu0
        %v1171 = vadd.f32 %v967, %v1170
        %v1172 = vpop.f32.mrb[0].mxu0
        %1173 = vdwg.mxu0
        %1174 = vmatprep.subr.bf16.mxu0 0
        %1175 = vmatpush1.bf16.msra.mxu0 %v1077
        %1176 = vmatprep.subr.bf16.mxu0 0
        %1177 = vmatpush1.bf16.msra.mxu0 %v1078
        %1178 = vmatprep.subr.bf16.mxu0 0
        %1179 = vmatpush1.bf16.msra.mxu0 0
        %1180 = vmatprep.subr.bf16.mxu0 0
        %1181 = vmatpush1.bf16.msra.mxu0 0
        %1182 = vmatprep.subr.bf16.mxu0 0
        %1183 = vmatpush1.bf16.msra.mxu0 0
        %1184 = vmatprep.subr.bf16.mxu0 0
        %1185 = vmatpush1.bf16.msra.mxu0 0
        %1186 = vmatprep.subr.bf16.mxu0 0
        %1187 = vmatpush1.bf16.msra.mxu0 0
        %1188 = vmatprep.subr.bf16.mxu0 0
        %1189 = vmatpush1.bf16.msra.mxu0 0
        %1190 = vmatprep.subr.bf16.mxu0 0
        %1191 = vmatpush1.bf16.msra.mxu0 0
        %1192 = vmatprep.subr.bf16.mxu0 0
        %1193 = vmatpush1.bf16.msra.mxu0 0
        %1194 = vmatprep.subr.bf16.mxu0 0
        %1195 = vmatpush1.bf16.msra.mxu0 0
        %1196 = vmatprep.subr.bf16.mxu0 0
        %1197 = vmatpush1.bf16.msra.mxu0 0
        %1198 = vmatprep.subr.bf16.mxu0 0
        %1199 = vmatpush1.bf16.msra.mxu0 0
        %1200 = vmatprep.subr.bf16.mxu0 0
        %1201 = vmatpush1.bf16.msra.mxu0 0
        %1202 = vmatprep.subr.bf16.mxu0 0
        %1203 = vmatpush1.bf16.msra.mxu0 0
        %1204 = vmatprep.subr.bf16.mxu0 0
        %1205 = vmatpush1.bf16.msra.mxu0 0
        %1206 = vmatprep.mubr.bf16.mxu0 0
        %1207 = vmatmul.mubr.bf16.gmra.mrb[0].mxu0 %v1098
        %v1208 = vpop.f32.mrb[0].mxu0
        %v1209 = vadd.f32 %v1144, %v1208
        %v1210 = vpop.f32.mrb[0].mxu0
        %v1211 = vpop.f32.mrb[0].mxu0
        %v1212 = vadd.f32 %v1147, %v1211
        %v1213 = vpop.f32.mrb[0].mxu0
        %1214 = vmatprep.mubr.bf16.mxu0 0
        %1215 = vmatmul.mubr.bf16.gmra.mrb[0].mxu0 %v1101
        %v1216 = vpop.f32.mrb[0].mxu0
        %v1217 = vadd.f32 %v1152, %v1216
        %v1218 = vpop.f32.mrb[0].mxu0
        %v1219 = vpop.f32.mrb[0].mxu0
        %v1220 = vadd.f32 %v1155, %v1219
        %v1221 = vpop.f32.mrb[0].mxu0
        %1222 = vmatprep.mubr.bf16.mxu0 0
        %1223 = vmatmul.mubr.bf16.gmra.mrb[0].mxu0 %v1104
        %v1224 = vpop.f32.mrb[0].mxu0
        %v1225 = vadd.f32 %v1160, %v1224
        %v1226 = vpop.f32.mrb[0].mxu0
        %v1227 = vpop.f32.mrb[0].mxu0
        %v1228 = vadd.f32 %v1163, %v1227
        %v1229 = vpop.f32.mrb[0].mxu0
        %1230 = vmatprep.mubr.bf16.mxu0 0
        %1231 = vmatmul.mubr.bf16.gmra.mrb[0].mxu0 %v1107
        %v1232 = vpop.f32.mrb[0].mxu0
        %v1233 = vadd.f32 %v1168, %v1232
        %v1234 = vpop.f32.mrb[0].mxu0
        %v1235 = vpop.f32.mrb[0].mxu0
        %v1236 = vadd.f32 %v1171, %v1235
        %v1237 = vpop.f32.mrb[0].mxu0
        %1238 = vdwg.mxu0
        %vm1239 = vcmp.ge.f32.partialorder %v1209, 0.0
        %vm1240 = vcmp.ge.f32.partialorder %v1212, 0.0
        %vm1241 = vcmp.ge.f32.partialorder %v1217, 0.0
        %vm1242 = vcmp.ge.f32.partialorder %v1220, 0.0
        %vm1243 = vcmp.ge.f32.partialorder %v1225, 0.0
        %vm1244 = vcmp.ge.f32.partialorder %v1228, 0.0
        %vm1245 = vcmp.ge.f32.partialorder %v1233, 0.0
        %vm1246 = vcmp.ge.f32.partialorder %v1236, 0.0
        %v1247 = vmul.f32 %v1209, 0.01
        %v1248 = vmul.f32 %v1212, 0.01
        %v1249 = vmul.f32 %v1217, 0.01
        %v1250 = vmul.f32 %v1220, 0.01
        %v1251 = vmul.f32 %v1225, 0.01
        %v1252 = vmul.f32 %v1228, 0.01
        %v1253 = vmul.f32 %v1233, 0.01
        %v1254 = vmul.f32 %v1236, 0.01
        %v1255 = vsel %vm1239, %v1209, %v1247
        %v1256 = vsel %vm1240, %v1212, %v1248
        %v1257 = vsel %vm1241, %v1217, %v1249
        %v1258 = vsel %vm1242, %v1220, %v1250
        %v1259 = vsel %vm1243, %v1225, %v1251
        %v1260 = vsel %vm1244, %v1228, %v1252
        %v1261 = vsel %vm1245, %v1233, %v1253
        %v1262 = vsel %vm1246, %v1236, %v1254
        %v1263 = vpack.c.bf16 %v1255, %v1255
        %v1264 = vpack.c.bf16 %v1256, %v1256
        %v1265 = vpack.c.bf16 %v1257, %v1257
        %v1266 = vpack.c.bf16 %v1258, %v1258
        %v1267 = vpack.c.bf16 %v1259, %v1259
        %v1268 = vpack.c.bf16 %v1260, %v1260
        %v1269 = vpack.c.bf16 %v1261, %v1261
        %v1270 = vpack.c.bf16 %v1262, %v1262
        %vm1271 = vcmask 125952
        %1272 = vst.msk [vmem:[%s371] sm:$0xf] %vm1271, %v1263
        %1273 = vst.msk [vmem:[%s371 + $0x4] sm:$0xf] %vm1271, %v1264
        %1274 = vst.msk [vmem:[%s371 + $0x8] sm:$0xf] %vm1271, %v1265
        %1275 = vst.msk [vmem:[%s371 + $0xc] sm:$0xf] %vm1271, %v1266
        %1276 = vst.msk [vmem:[%s371 + $0x10] sm:$0xf] %vm1271, %v1267
        %1277 = vst.msk [vmem:[%s371 + $0x14] sm:$0xf] %vm1271, %v1268
        %1278 = vst.msk [vmem:[%s371 + $0x18] sm:$0xf] %vm1271, %v1269
        %1279 = vst.msk [vmem:[%s371 + $0x1c] sm:$0xf] %vm1271, %v1270
        %s1280 = sand.u32 %s205, 1
        %s1281 = scalar_lea.sflag [#allocation4], %s1280
        %s1282 = sand.u32 %s205, 1
        %s1283 = smul.addr %s1282, 32
        %s1284 = scalar_lea.vmem [#allocation5], %s1283
        // Predicated region
        $region45: #{tpu_custom_call.1} parent=39 // pred_check
          %p1285 = pneg %p215
        $region46: #{tpu_custom_call.1} parent=39 // pred_check_branch
          %1287 = sbr.rel (%p1285) target = $region48
        $region47: #{tpu_custom_call.1} parent=39 // pred_region
          %s1288 = smul.u32 8, %s29
          %s1290 = ssub.s32 512, 512
          %1291 = vsyncadd %s1281, %s1290
          %s1292 = sadd.s32 %s28, %s1288
          %s1293 = smul.addr %s27, 8
          %s1294 = sadd.s32 %s1292, %s1293
          %s1295 = smul.addr %s1294, 64
          %s1296 = scalar_lea.hbm %s5, %s1295
          %s1297 = sshll.u32 %s1284, 4
          %s1298 = int_to_ptr.vmem [resolvable:$true] %s1297
          %1303 = dma.vmem_to_hbm [thread:$0]  %s1298, 512, %s1296, %s1281, 64, 64, 4
        $region48: #{tpu_custom_call.1} parent=39 // pred_fallthru
          _
      $region40: #{tpu_custom_call.1} parent=5 // pred_fallthru
        _
      %p1304 = scmp.le.s32.totalorder 2, %s17
      // Predicated region
      $region49: #{tpu_custom_call.1} parent=5 // pred_check
        %p1305 = pneg %p1304
      $region50: #{tpu_custom_call.1} parent=5 // pred_check_branch
        %1307 = sbr.rel (%p1305) target = $region52
      $region51: #{tpu_custom_call.1} parent=5 // pred_region
        %s1308 = ssub.s32 %s17, 2
        // Predicated region
        $region53: #{tpu_custom_call.1} parent=51 // pred_check
          %p1309 = pneg %p221
        $region54: #{tpu_custom_call.1} parent=51 // pred_check_branch
          %1311 = sbr.rel (%p1309) target = $region56
        $region55: #{tpu_custom_call.1} parent=51 // pred_region
          %s1312 = sand.u32 %s206, 1
          %s1313 = scalar_lea.sflag [#allocation4], %s1312
          %s1314 = sand.u32 %s206, 1
          %s1315 = smul.addr %s1314, 32
          %s1316 = scalar_lea.vmem [#allocation5], %s1315
          %1317 = dma.done %s1313, 512
        $region56: #{tpu_custom_call.1} parent=51 // pred_fallthru
          _
      $region52: #{tpu_custom_call.1} parent=5 // pred_fallthru
        _
    $region6: #{tpu_custom_call.1} parent=1 // loop_footer
      %s21 = sadd.s32 1, %s17
    $region7: #{tpu_custom_call.1} parent=1 // loop_footer_branch
      %16 = sbr.rel target = $region3
    $region8: #{tpu_custom_call.1} parent=1 // loop_exit
      _
    %1318 = vsyncpa [#allocation3], 1
    %s1319 = scalar_lea.sflag [#allocation3], 1
    %1320 = vsyncpa %s1319, 1
    %1321 = vsyncpa [#allocation4], 1
    %s1322 = scalar_lea.sflag [#allocation4], 1
    %1323 = vsyncpa %s1322, 1

// kernel: tpu_custom_call.1
$region0: #{tpu_custom_call.1}
  #allocation0 [shape = 'u32[]', space=smem, size = 0x4, offset = 0x4, fixed_abs, tag = 'smem constant byte address 0x4 - core index']
  #allocation1 [shape = 'u32[144,128]{1,0:T(1,128)}', space=vmem, size = 0x12000, scoped, tag = 'internal scratch']
  %s0 = inlined_call_operand.vmem [shape: bf16[2,10,10,32], index: 0, kind: input, shape index: {}]
  %s1 = inlined_call_operand.vmem [shape: bf16[288,16], index: 1, kind: input, shape index: {}]
  %s2 = inlined_call_operand.vmem [shape: f32[1,16], index: 2, kind: input, shape index: {}]
  %s3 = inlined_call_operand.hbm [shape: bf16[2,8,8,16], index: 3, kind: output, shape index: {}]
  %s4 = sld [smem:[#allocation0]]
  $region45: #{tpu_custom_call.1} parent=0
    _
  %s6 = ssub.s32 1, %s4
  %s7 = scalar_select 0, %s6, %s4
  $region1: #{tpu_custom_call.1} parent=0
    #allocation2 [shape = 'u8[32768]{0}', space=vmem, size = 0x8000, scoped, tag = 'output window, operand 0']
    #allocation3 [shape = 's32[2]{0}', space=sflag, size = 0x8, scoped, tag = 'scoped memory for tpu_custom_call.1']
    %8 = vsyncpa [#allocation3], 0
    %s9 = scalar_lea.sflag [#allocation3], 1
    %10 = vsyncpa %s9, 0
    loop: start=0, step=1, limit=4
    $region2: #{tpu_custom_call.1} parent=1 // loop_pre_header
      _
    $region3: #{tpu_custom_call.1} parent=1 // loop_header
      %s12 = sphi 0, %s16
      %p13 = scmp.ge.s32.totalorder %s12, 4
      %s19 = sphi 0, %s31
      %s20 = sphi 0, %s27
      %s21 = sphi 0, %s19
      %s22 = sphi 0, %s20
      %s23 = sphi 0, %s21
      %s24 = sphi 0, %s22
      %s34 = sphi 0, %s36
      %s37 = sphi 0, %s34
      %s38 = sphi 0, %s37
      %s54 = sphi 0, %s38
      %s60 = sphi 0, %s62
      %s63 = sphi 0, %s60
      %s64 = sphi 0, %s63
      %s80 = sphi 0, %s64
      %s86 = sphi 0, %s88
      %s89 = sphi 0, %s86
      %s90 = sphi 0, %s89
      %s106 = sphi 0, %s90
      %s114 = sphi 0, %s116
      %s117 = sphi 0, %s114
      %s118 = sphi 0, %s117
      %s134 = sphi 0, %s118
    $region4: #{tpu_custom_call.1} parent=1 // loop_header_branch
      %15 = sbr.rel (%p13) target = $region8
    $region5: #{tpu_custom_call.1} parent=1 // loop_body
      %s17 = ssub.s32 %s12, 1
      %s18 = ssub.s32 %s12, 2
      %s25 = sadd.s32 1, %s20
      %p26 = scmp.ge.s32.totalorder %s25, 1
      %s27 = scalar_select %p26, 0, %s25
      %s28 = sadd.s32 1, %s19
      %s29 = scalar_select %p26, %s28, %s19
      %p30 = scmp.ge.s32.totalorder %s29, 2
      %s31 = scalar_select %p30, 0, %s29
      %s32 = ssub.s32 %s19, %s31
      %p33 = scmp.eq.s32.totalorder %s32, 0
      %s35 = sadd.s32 %s34, 1
      %s36 = scalar_select %p33, %s34, %s35
      %p39 = pneg %p33
      %p40 = scmp.eq.s32.totalorder %s12, 1
      %p41 = por %p39, %p40
      %p42 = scmp.ne.s32.totalorder %s34, %s37
      %p43 = scmp.eq.s32.totalorder %s12, 0
      %p44 = por %p42, %p43
      %p45 = scmp.ne.s32.totalorder %s34, %s37
      %p46 = scmp.eq.s32.totalorder %s17, 1
      %p47 = por %p45, %p46
      %p48 = scmp.ne.s32.totalorder %s37, %s38
      %p49 = scmp.eq.s32.totalorder %s17, 0
      %p50 = por %p48, %p49
      %p51 = scmp.ne.s32.totalorder %s37, %s38
      %p52 = scmp.eq.s32.totalorder %s18, 1
      %p53 = por %p51, %p52
      %p55 = scmp.ne.s32.totalorder %s38, %s54
      %p56 = scmp.eq.s32.totalorder %s18, 0
      %p57 = por %p55, %p56
      %s58 = ssub.s32 %s20, %s27
      %p59 = scmp.eq.s32.totalorder %s58, 0
      %s61 = sadd.s32 %s60, 1
      %s62 = scalar_select %p59, %s60, %s61
      %p65 = pneg %p59
      %p66 = scmp.eq.s32.totalorder %s12, 1
      %p67 = por %p65, %p66
      %p68 = scmp.ne.s32.totalorder %s60, %s63
      %p69 = scmp.eq.s32.totalorder %s12, 0
      %p70 = por %p68, %p69
      %p71 = scmp.ne.s32.totalorder %s60, %s63
      %p72 = scmp.eq.s32.totalorder %s17, 1
      %p73 = por %p71, %p72
      %p74 = scmp.ne.s32.totalorder %s63, %s64
      %p75 = scmp.eq.s32.totalorder %s17, 0
      %p76 = por %p74, %p75
      %p77 = scmp.ne.s32.totalorder %s63, %s64
      %p78 = scmp.eq.s32.totalorder %s18, 1
      %p79 = por %p77, %p78
      %p81 = scmp.ne.s32.totalorder %s64, %s80
      %p82 = scmp.eq.s32.totalorder %s18, 0
      %p83 = por %p81, %p82
      %s84 = ssub.s32 %s20, %s27
      %p85 = scmp.eq.s32.totalorder %s84, 0
      %s87 = sadd.s32 %s86, 1
      %s88 = scalar_select %p85, %s86, %s87
      %p91 = pneg %p85
      %p92 = scmp.eq.s32.totalorder %s12, 1
      %p93 = por %p91, %p92
      %p94 = scmp.ne.s32.totalorder %s86, %s89
      %p95 = scmp.eq.s32.totalorder %s12, 0
      %p96 = por %p94, %p95
      %p97 = scmp.ne.s32.totalorder %s86, %s89
      %p98 = scmp.eq.s32.totalorder %s17, 1
      %p99 = por %p97, %p98
      %p100 = scmp.ne.s32.totalorder %s89, %s90
      %p101 = scmp.eq.s32.totalorder %s17, 0
      %p102 = por %p100, %p101
      %p103 = scmp.ne.s32.totalorder %s89, %s90
      %p104 = scmp.eq.s32.totalorder %s18, 1
      %p105 = por %p103, %p104
      %p107 = scmp.ne.s32.totalorder %s90, %s106
      %p108 = scmp.eq.s32.totalorder %s18, 0
      %p109 = por %p107, %p108
      %s110 = ssub.s32 %s19, %s31
      %s111 = ssub.s32 %s20, %s27
      %s112 = sor.u32 %s110, %s111
      %p113 = scmp.eq.s32.totalorder %s112, 0
      %s115 = sadd.s32 %s114, 1
      %s116 = scalar_select %p113, %s114, %s115
      %p119 = pneg %p113
      %p120 = scmp.eq.s32.totalorder %s12, 1
      %p121 = por %p119, %p120
      %p122 = scmp.ne.s32.totalorder %s114, %s117
      %p123 = scmp.eq.s32.totalorder %s12, 0
      %p124 = por %p122, %p123
      %p125 = scmp.ne.s32.totalorder %s114, %s117
      %p126 = scmp.eq.s32.totalorder %s17, 1
      %p127 = por %p125, %p126
      %p128 = scmp.ne.s32.totalorder %s117, %s118
      %p129 = scmp.eq.s32.totalorder %s17, 0
      %p130 = por %p128, %p129
      %p131 = scmp.ne.s32.totalorder %s117, %s118
      %p132 = scmp.eq.s32.totalorder %s18, 1
      %p133 = por %p131, %p132
      %p135 = scmp.ne.s32.totalorder %s118, %s134
      %p136 = scmp.eq.s32.totalorder %s18, 0
      %p137 = por %p135, %p136
      %p138 = scmp.le.s32.totalorder 1, %s12
      %p139 = scmp.lt.s32.totalorder %s12, 3
      %p140 = pnand %p138, %p139
      %p141 = pneg %p140
      // Predicated region
      $region9: #{tpu_custom_call.1} parent=5 // pred_check
        _
      $region10: #{tpu_custom_call.1} parent=5 // pred_check_branch
        %143 = sbr.rel (%p140) target = $region12
      $region11: #{tpu_custom_call.1} parent=5 // pred_region
        %s144 = ssub.s32 %s12, 1
        // Predicated region
        $region13: #{tpu_custom_call.1} parent=11 // pred_check
          %p145 = pneg %p76
        $region14: #{tpu_custom_call.1} parent=11 // pred_check_branch
          %147 = sbr.rel (%p145) target = $region16
        $region15: #{tpu_custom_call.1} parent=11 // pred_region
          %p148 = scmp.lt.s32.totalorder %s22, 0
          %s149 = scalar_select %p148, %s22, 0
          %s150 = smul.addr %s149, 4
          %s151 = scalar_lea.vmem %s1, %s150
        $region16: #{tpu_custom_call.1} parent=11 // pred_fallthru
          _
        // Predicated region
        $region17: #{tpu_custom_call.1} parent=11 // pred_check
          %p152 = pneg %p102
        $region18: #{tpu_custom_call.1} parent=11 // pred_check_branch
          %154 = sbr.rel (%p152) target = $region20
        $region19: #{tpu_custom_call.1} parent=11 // pred_region
          %p155 = scmp.lt.s32.totalorder %s22, 0
          %s156 = scalar_select %p155, %s22, 0
          %s157 = scalar_lea.vmem %s2, %s156
        $region20: #{tpu_custom_call.1} parent=11 // pred_fallthru
          _
      $region12: #{tpu_custom_call.1} parent=5 // pred_fallthru
        _
      %p158 = scmp.lt.s32.totalorder %s12, 2
      // Predicated region
      $region21: #{tpu_custom_call.1} parent=5 // pred_check
        %p159 = pneg %p158
      $region22: #{tpu_custom_call.1} parent=5 // pred_check_branch
        %161 = sbr.rel (%p159) target = $region24
      $region23: #{tpu_custom_call.1} parent=5 // pred_region
        // Predicated region
        $region25: #{tpu_custom_call.1} parent=23 // pred_check
          %p162 = pneg %p44
        $region26: #{tpu_custom_call.1} parent=23 // pred_check_branch
          %164 = sbr.rel (%p162) target = $region28
        $region27: #{tpu_custom_call.1} parent=23 // pred_region
          %p165 = scmp.lt.s32.totalorder %s19, 1
          %s166 = scalar_select %p165, %s19, 1
          %s167 = smul.addr %s166, 20
          %s168 = smul.addr %s167, 4
          %s169 = scalar_lea.vmem %s0, %s168
        $region28: #{tpu_custom_call.1} parent=23 // pred_fallthru
          _
      $region24: #{tpu_custom_call.1} parent=5 // pred_fallthru
        _
      %p170 = scmp.le.s32.totalorder 1, %s12
      %p171 = scmp.lt.s32.totalorder %s12, 3
      %p172 = pnand %p170, %p171
      %p173 = pneg %p172
      // Predicated region
      $region29: #{tpu_custom_call.1} parent=5 // pred_check
        _
      $region30: #{tpu_custom_call.1} parent=5 // pred_check_branch
        %175 = sbr.rel (%p172) target = $region32
      $region31: #{tpu_custom_call.1} parent=5 // pred_region
        %s176 = ssub.s32 %s12, 1
        %p177 = scmp.lt.s32.totalorder %s21, 1
        %s178 = scalar_select %p177, %s21, 1
        %s179 = smul.addr %s178, 20
        %s180 = smul.addr %s179, 4
        %s181 = scalar_lea.vmem %s0, %s180
        %p182 = pneg %p50
        %p183 = pneg %p47
        %p184 = scmp.lt.s32.totalorder %s22, 0
        %s185 = scalar_select %p184, %s22, 0
        %s186 = smul.addr %s185, 4
        %s187 = scalar_lea.vmem %s1, %s186
        %p188 = pneg %p76
        %p189 = pneg %p73
        %p190 = scmp.lt.s32.totalorder %s22, 0
        %s191 = scalar_select %p190, %s22, 0
        %s192 = scalar_lea.vmem %s2, %s191
        %p193 = pneg %p102
        %p194 = pneg %p99
        %p195 = pneg %p130
        %p196 = pneg %p127
        %s197 = sand.u32 %s117, 1
        %s198 = scalar_lea.sflag [#allocation3], %s197
        %s199 = sand.u32 %s117, 1
        %s200 = smul.addr %s199, 32
        %s201 = scalar_lea.vmem [#allocation2], %s200
        %p202 = scmp.lt.s32.totalorder %s21, 1
        %s203 = scalar_select %p202, %s21, 1
        %s204 = smul.addr %s203, 20
        %s205 = smul.addr %s204, 4
        %s206 = scalar_lea.vmem %s0, %s205
        %p207 = scmp.lt.s32.totalorder %s22, 0
        %s208 = scalar_select %p207, %s22, 0
        %s209 = smul.addr %s208, 4
        %s210 = scalar_lea.vmem %s1, %s209
        %p211 = scmp.lt.s32.totalorder %s22, 0
        %s212 = scalar_select %p211, %s22, 0
        %s213 = scalar_lea.vmem %s2, %s212
        %v215 = vld [vmem:[%s206] sm:$0xf]
        %v216 = vld [vmem:[%s206 + $0x8] sm:$0xf]
        %v217 = vld [vmem:[%s206 + $0x10] sm:$0xf]
        %v218 = vld [vmem:[%s206 + $0x18] sm:$0xf]
        %v219 = vld [vmem:[%s206 + $0x20] sm:$0xf]
        %v220 = vld [vmem:[%s206 + $0x28] sm:$0xf]
        %v221 = vld [vmem:[%s206 + $0x30] sm:$0xf]
        %v222 = vld [vmem:[%s206 + $0x38] sm:$0xf]
        %v223 = vld [vmem:[%s210] sm:$0xf]
        %v224 = vld [vmem:[%s210 + $0x4] sm:$0xf]
        %v225 = vld [vmem:[%s210 + $0x8] sm:$0xf]
        %v226 = vld [vmem:[%s210 + $0xc] sm:$0xf]
        %v227 = vld [vmem:[%s206 + $0x4] sm:$0x1]
        %v228 = vld [vmem:[%s206 + $0xc] sm:$0x1]
        %v229 = vld [vmem:[%s206 + $0x14] sm:$0x1]
        %v230 = vld [vmem:[%s206 + $0x1c] sm:$0x1]
        %v231 = vld [vmem:[%s206 + $0x24] sm:$0x1]
        %v232 = vld [vmem:[%s206 + $0x2c] sm:$0x1]
        %v233 = vld [vmem:[%s206 + $0x34] sm:$0x1]
        %v234 = vld [vmem:[%s206 + $0x3c] sm:$0x1]
        %vm235 = vsmask.f32 3328
        %vm236 = vsmask.f32 7440
        %vm237 = vmor %vm235, %vm236
        %v239 = vshrl.u32 %v215, 16
        %v241 = vrot.slane %v239, 4
        %v242 = vshll.u32 %v215, 16
        %v244 = vrot.slane %v242, 5
        %v245 = vor.u32 %v241, %v244
        %v246 = vrot.slane %v245, 4
        %v248 = vshll.u32 %v227, 16
        %v250 = vrot.slane %v248, 5
        %v251 = vsel %vm237, %v246, %v250
        %v253 = vshrl.u32 %v216, 16
        %v255 = vrot.slane %v253, 4
        %v256 = vshll.u32 %v216, 16
        %v258 = vrot.slane %v256, 5
        %v259 = vor.u32 %v255, %v258
        %v260 = vrot.slane %v259, 4
        %v262 = vshll.u32 %v228, 16
        %v264 = vrot.slane %v262, 5
        %v265 = vsel %vm237, %v260, %v264
        %v267 = vshrl.u32 %v217, 16
        %v269 = vrot.slane %v267, 4
        %v270 = vshll.u32 %v217, 16
        %v272 = vrot.slane %v270, 5
        %v273 = vor.u32 %v269, %v272
        %v274 = vrot.slane %v273, 4
        %v276 = vshll.u32 %v229, 16
        %v278 = vrot.slane %v276, 5
        %v279 = vsel %vm237, %v274, %v278
        %v281 = vshrl.u32 %v218, 16
        %v283 = vrot.slane %v281, 4
        %v284 = vshll.u32 %v218, 16
        %v286 = vrot.slane %v284, 5
        %v287 = vor.u32 %v283, %v286
        %v288 = vrot.slane %v287, 4
        %v290 = vshll.u32 %v230, 16
        %v292 = vrot.slane %v290, 5
        %v293 = vsel %vm237, %v288, %v292
        %v295 = vshrl.u32 %v219, 16
        %v297 = vrot.slane %v295, 4
        %v298 = vshll.u32 %v219, 16
        %v300 = vrot.slane %v298, 5
        %v301 = vor.u32 %v297, %v300
        %v302 = vrot.slane %v301, 4
        %v304 = vshll.u32 %v231, 16
        %v306 = vrot.slane %v304, 5
        %v307 = vsel %vm237, %v302, %v306
        %v309 = vshrl.u32 %v220, 16
        %v311 = vrot.slane %v309, 4
        %v312 = vshll.u32 %v220, 16
        %v314 = vrot.slane %v312, 5
        %v315 = vor.u32 %v311, %v314
        %v316 = vrot.slane %v315, 4
        %v318 = vshll.u32 %v232, 16
        %v320 = vrot.slane %v318, 5
        %v321 = vsel %vm237, %v316, %v320
        %v323 = vshrl.u32 %v221, 16
        %v325 = vrot.slane %v323, 4
        %v326 = vshll.u32 %v221, 16
        %v328 = vrot.slane %v326, 5
        %v329 = vor.u32 %v325, %v328
        %v330 = vrot.slane %v329, 4
        %v332 = vshll.u32 %v233, 16
        %v334 = vrot.slane %v332, 5
        %v335 = vsel %vm237, %v330, %v334
        %v337 = vshrl.u32 %v222, 16
        %v339 = vrot.slane %v337, 4
        %v340 = vshll.u32 %v222, 16
        %v342 = vrot.slane %v340, 5
        %v343 = vor.u32 %v339, %v342
        %v344 = vrot.slane %v343, 4
        %v346 = vshll.u32 %v234, 16
        %v348 = vrot.slane %v346, 5
        %v349 = vsel %vm237, %v344, %v348
        %v350 = vld [vmem:[%s210 + $0x10] sm:$0xf]
        %v351 = vld [vmem:[%s210 + $0x14] sm:$0xf]
        %v352 = vld [vmem:[%s210 + $0x18] sm:$0xf]
        %v353 = vld [vmem:[%s210 + $0x1c] sm:$0xf]
        %v354 = vunpack.c.l.b16 %v251
        %v355 = vunpack.c.l.b16 %v265
        %v356 = vunpack.c.l.b16 %v279
        %v357 = vunpack.c.l.b16 %v293
        %v358 = vunpack.c.l.b16 %v307
        %v359 = vunpack.c.l.b16 %v321
        %v360 = vunpack.c.l.b16 %v335
        %v361 = vunpack.c.l.b16 %v349
        %v362 = vpack.c.b16 %v355, %v354
        %v363 = vpack.c.b16 %v357, %v356
        %v364 = vpack.c.b16 %v359, %v358
        %v365 = vpack.c.b16 %v361, %v360
        %v370 = vunpack.c.l.b16 %v350
        %v371 = vunpack.c.l.b16 %v351
        %v372 = vunpack.c.l.b16 %v352
        %v373 = vunpack.c.l.b16 %v353
        %v374 = vpack.c.b16 %v371, %v370
        %v375 = vpack.c.b16 %v373, %v372
        %vm378 = vcmask 261120
        %v380 = vsel %vm378, %v362, 0
        %v383 = vsel %vm378, %v363, 0
        %v386 = vsel %vm378, %v364, 0
        %v389 = vsel %vm378, %v365, 0
        %391 = vmatprep.subr.bf16.mxu0 0
        %392 = vmatpush1.bf16.msra.mxu0 %v374
        %393 = vmatprep.subr.bf16.mxu0 0
        %394 = vmatpush1.bf16.msra.mxu0 %v375
        %395 = vmatprep.subr.bf16.mxu0 0
        %396 = vmatpush1.bf16.msra.mxu0 0
        %397 = vmatprep.subr.bf16.mxu0 0
        %398 = vmatpush1.bf16.msra.mxu0 0
        %399 = vmatprep.subr.bf16.mxu0 0
        %400 = vmatpush1.bf16.msra.mxu0 0
        %401 = vmatprep.subr.bf16.mxu0 0
        %402 = vmatpush1.bf16.msra.mxu0 0
        %403 = vmatprep.subr.bf16.mxu0 0
        %404 = vmatpush1.bf16.msra.mxu0 0
        %405 = vmatprep.subr.bf16.mxu0 0
        %406 = vmatpush1.bf16.msra.mxu0 0
        %407 = vmatprep.subr.bf16.mxu0 0
        %408 = vmatpush1.bf16.msra.mxu0 0
        %409 = vmatprep.subr.bf16.mxu0 0
        %410 = vmatpush1.bf16.msra.mxu0 0
        %411 = vmatprep.subr.bf16.mxu0 0
        %412 = vmatpush1.bf16.msra.mxu0 0
        %413 = vmatprep.subr.bf16.mxu0 0
        %414 = vmatpush1.bf16.msra.mxu0 0
        %415 = vmatprep.subr.bf16.mxu0 0
        %416 = vmatpush1.bf16.msra.mxu0 0
        %417 = vmatprep.subr.bf16.mxu0 0
        %418 = vmatpush1.bf16.msra.mxu0 0
        %419 = vmatprep.subr.bf16.mxu0 0
        %420 = vmatpush1.bf16.msra.mxu0 0
        %421 = vmatprep.subr.bf16.mxu0 0
        %422 = vmatpush1.bf16.msra.mxu0 0
        %423 = vmatprep.mubr.bf16.mxu0 0
        %424 = vmatmul.mubr.bf16.gmra.mrb[0].mxu0 %v380
        %v425 = vpop.f32.mrb[0].mxu0
        %v426 = vadd.f32 0.0, %v425
        %v427 = vpop.f32.mrb[0].mxu0
        %v428 = vpop.f32.mrb[0].mxu0
        %v429 = vadd.f32 0.0, %v428
        %v430 = vpop.f32.mrb[0].mxu0
        %431 = vmatprep.mubr.bf16.mxu0 0
        %432 = vmatmul.mubr.bf16.gmra.mrb[0].mxu0 %v383
        %v433 = vpop.f32.mrb[0].mxu0
        %v434 = vadd.f32 0.0, %v433
        %v435 = vpop.f32.mrb[0].mxu0
        %v436 = vpop.f32.mrb[0].mxu0
        %v437 = vadd.f32 0.0, %v436
        %v438 = vpop.f32.mrb[0].mxu0
        %439 = vmatprep.mubr.bf16.mxu0 0
        %440 = vmatmul.mubr.bf16.gmra.mrb[0].mxu0 %v386
        %v441 = vpop.f32.mrb[0].mxu0
        %v442 = vadd.f32 0.0, %v441
        %v443 = vpop.f32.mrb[0].mxu0
        %v444 = vpop.f32.mrb[0].mxu0
        %v445 = vadd.f32 0.0, %v444
        %v446 = vpop.f32.mrb[0].mxu0
        %447 = vmatprep.mubr.bf16.mxu0 0
        %448 = vmatmul.mubr.bf16.gmra.mrb[0].mxu0 %v389
        %v449 = vpop.f32.mrb[0].mxu0
        %v450 = vadd.f32 0.0, %v449
        %v451 = vpop.f32.mrb[0].mxu0
        %v452 = vpop.f32.mrb[0].mxu0
        %v453 = vadd.f32 0.0, %v452
        %v454 = vpop.f32.mrb[0].mxu0
        %455 = vdwg.mxu0
        %v464 = vunpack.c.l.b16 %v215
        %v465 = vunpack.c.l.b16 %v216
        %v466 = vunpack.c.l.b16 %v217
        %v467 = vunpack.c.l.b16 %v218
        %v468 = vunpack.c.l.b16 %v219
        %v469 = vunpack.c.l.b16 %v220
        %v470 = vunpack.c.l.b16 %v221
        %v471 = vunpack.c.l.b16 %v222
        %v472 = vpack.c.b16 %v465, %v464
        %v473 = vpack.c.b16 %v467, %v466
        %v474 = vpack.c.b16 %v469, %v468
        %v475 = vpack.c.b16 %v471, %v470
        %v480 = vunpack.c.l.b16 %v223
        %v481 = vunpack.c.l.b16 %v224
        %v482 = vunpack.c.l.b16 %v225
        %v483 = vunpack.c.l.b16 %v226
        %v484 = vpack.c.b16 %v481, %v480
        %v485 = vpack.c.b16 %v483, %v482
        %v489 = vsel %vm378, %v472, 0
        %v492 = vsel %vm378, %v473, 0
        %v495 = vsel %vm378, %v474, 0
        %v498 = vsel %vm378, %v475, 0
        %500 = vmatprep.subr.bf16.mxu0 0
        %501 = vmatpush1.bf16.msra.mxu0 %v484
        %502 = vmatprep.subr.bf16.mxu0 0
        %503 = vmatpush1.bf16.msra.mxu0 %v485
        %504 = vmatprep.subr.bf16.mxu0 0
        %505 = vmatpush1.bf16.msra.mxu0 0
        %506 = vmatprep.subr.bf16.mxu0 0
        %507 = vmatpush1.bf16.msra.mxu0 0
        %508 = vmatprep.subr.bf16.mxu0 0
        %509 = vmatpush1.bf16.msra.mxu0 0
        %510 = vmatprep.subr.bf16.mxu0 0
        %511 = vmatpush1.bf16.msra.mxu0 0
        %512 = vmatprep.subr.bf16.mxu0 0
        %513 = vmatpush1.bf16.msra.mxu0 0
        %514 = vmatprep.subr.bf16.mxu0 0
        %515 = vmatpush1.bf16.msra.mxu0 0
        %516 = vmatprep.subr.bf16.mxu0 0
        %517 = vmatpush1.bf16.msra.mxu0 0
        %518 = vmatprep.subr.bf16.mxu0 0
        %519 = vmatpush1.bf16.msra.mxu0 0
        %520 = vmatprep.subr.bf16.mxu0 0
        %521 = vmatpush1.bf16.msra.mxu0 0
        %522 = vmatprep.subr.bf16.mxu0 0
        %523 = vmatpush1.bf16.msra.mxu0 0
        %524 = vmatprep.subr.bf16.mxu0 0
        %525 = vmatpush1.bf16.msra.mxu0 0
        %526 = vmatprep.subr.bf16.mxu0 0
        %527 = vmatpush1.bf16.msra.mxu0 0
        %528 = vmatprep.subr.bf16.mxu0 0
        %529 = vmatpush1.bf16.msra.mxu0 0
        %530 = vmatprep.subr.bf16.mxu0 0
        %531 = vmatpush1.bf16.msra.mxu0 0
        %532 = vmatprep.mubr.bf16.mxu0 0
        %533 = vmatmul.mubr.bf16.gmra.mrb[0].mxu0 %v489
        %v534 = vpop.f32.mrb[0].mxu0
        %v535 = vadd.f32 %v426, %v534
        %v536 = vpop.f32.mrb[0].mxu0
        %v537 = vpop.f32.mrb[0].mxu0
        %v538 = vadd.f32 %v429, %v537
        %v539 = vpop.f32.mrb[0].mxu0
        %540 = vmatprep.mubr.bf16.mxu0 0
        %541 = vmatmul.mubr.bf16.gmra.mrb[0].mxu0 %v492
        %v542 = vpop.f32.mrb[0].mxu0
        %v543 = vadd.f32 %v434, %v542
        %v544 = vpop.f32.mrb[0].mxu0
        %v545 = vpop.f32.mrb[0].mxu0
        %v546 = vadd.f32 %v437, %v545
        %v547 = vpop.f32.mrb[0].mxu0
        %548 = vmatprep.mubr.bf16.mxu0 0
        %549 = vmatmul.mubr.bf16.gmra.mrb[0].mxu0 %v495
        %v550 = vpop.f32.mrb[0].mxu0
        %v551 = vadd.f32 %v442, %v550
        %v552 = vpop.f32.mrb[0].mxu0
        %v553 = vpop.f32.mrb[0].mxu0
        %v554 = vadd.f32 %v445, %v553
        %v555 = vpop.f32.mrb[0].mxu0
        %556 = vmatprep.mubr.bf16.mxu0 0
        %557 = vmatmul.mubr.bf16.gmra.mrb[0].mxu0 %v498
        %v558 = vpop.f32.mrb[0].mxu0
        %v559 = vadd.f32 %v450, %v558
        %v560 = vpop.f32.mrb[0].mxu0
        %v561 = vpop.f32.mrb[0].mxu0
        %v562 = vadd.f32 %v453, %v561
        %v563 = vpop.f32.mrb[0].mxu0
        %564 = vdwg.mxu0
        %v565 = vld [vmem:[%s206] sm:$0xe]
        %v566 = vld [vmem:[%s206 + $0x8] sm:$0xe]
        %v567 = vld [vmem:[%s206 + $0x10] sm:$0xe]
        %v568 = vld [vmem:[%s206 + $0x18] sm:$0xe]
        %v569 = vld [vmem:[%s206 + $0x20] sm:$0xe]
        %v570 = vld [vmem:[%s206 + $0x28] sm:$0xe]
        %v571 = vld [vmem:[%s206 + $0x30] sm:$0xe]
        %v572 = vld [vmem:[%s206 + $0x38] sm:$0xe]
        %vm589 = vcmask 1042432
        %vm590 = vcmask 1046532
        %vm591 = vmor %vm589, %vm590
        %v592 = vrot.slane %v565, 5
        %v593 = vrot.slane %v592, 4
        %v594 = vrot.slane %v227, 5
        %v595 = vsel %vm591, %v593, %v594
        %v596 = vrot.slane %v566, 5
        %v597 = vrot.slane %v596, 4
        %v598 = vrot.slane %v228, 5
        %v599 = vsel %vm591, %v597, %v598
        %v600 = vrot.slane %v567, 5
        %v601 = vrot.slane %v600, 4
        %v602 = vrot.slane %v229, 5
        %v603 = vsel %vm591, %v601, %v602
        %v604 = vrot.slane %v568, 5
        %v605 = vrot.slane %v604, 4
        %v606 = vrot.slane %v230, 5
        %v607 = vsel %vm591, %v605, %v606
        %v608 = vrot.slane %v569, 5
        %v609 = vrot.slane %v608, 4
        %v610 = vrot.slane %v231, 5
        %v611 = vsel %vm591, %v609, %v610
        %v612 = vrot.slane %v570, 5
        %v613 = vrot.slane %v612, 4
        %v614 = vrot.slane %v232, 5
        %v615 = vsel %vm591, %v613, %v614
        %v616 = vrot.slane %v571, 5
        %v617 = vrot.slane %v616, 4
        %v618 = vrot.slane %v233, 5
        %v619 = vsel %vm591, %v617, %v618
        %v620 = vrot.slane %v572, 5
        %v621 = vrot.slane %v620, 4
        %v622 = vrot.slane %v234, 5
        %v623 = vsel %vm591, %v621, %v622
        %v624 = vld [vmem:[%s210 + $0x20] sm:$0xf]
        %v625 = vld [vmem:[%s210 + $0x24] sm:$0xf]
        %v626 = vld [vmem:[%s210 + $0x28] sm:$0xf]
        %v627 = vld [vmem:[%s210 + $0x2c] sm:$0xf]
        %v628 = vunpack.c.l.b16 %v595
        %v629 = vunpack.c.l.b16 %v599
        %v630 = vunpack.c.l.b16 %v603
        %v631 = vunpack.c.l.b16 %v607
        %v632 = vunpack.c.l.b16 %v611
        %v633 = vunpack.c.l.b16 %v615
        %v634 = vunpack.c.l.b16 %v619
        %v635 = vunpack.c.l.b16 %v623
        %v636 = vpack.c.b16 %v629, %v628
        %v637 = vpack.c.b16 %v631, %v630
        %v638 = vpack.c.b16 %v633, %v632
        %v639 = vpack.c.b16 %v635, %v634
        %v644 = vunpack.c.l.b16 %v624
        %v645 = vunpack.c.l.b16 %v625
        %v646 = vunpack.c.l.b16 %v626
        %v647 = vunpack.c.l.b16 %v627
        %v648 = vpack.c.b16 %v645, %v644
        %v649 = vpack.c.b16 %v647, %v646
        %v653 = vsel %vm378, %v636, 0
        %v656 = vsel %vm378, %v637, 0
        %v659 = vsel %vm378, %v638, 0
        %v662 = vsel %vm378, %v639, 0
        %664 = vmatprep.subr.bf16.mxu0 0
        %665 = vmatpush1.bf16.msra.mxu0 %v648
        %666 = vmatprep.subr.bf16.mxu0 0
        %667 = vmatpush1.bf16.msra.mxu0 %v649
        %668 = vmatprep.subr.bf16.mxu0 0
        %669 = vmatpush1.bf16.msra.mxu0 0
        %670 = vmatprep.subr.bf16.mxu0 0
        %671 = vmatpush1.bf16.msra.mxu0 0
        %672 = vmatprep.subr.bf16.mxu0 0
        %673 = vmatpush1.bf16.msra.mxu0 0
        %674 = vmatprep.subr.bf16.mxu0 0
        %675 = vmatpush1.bf16.msra.mxu0 0
        %676 = vmatprep.subr.bf16.mxu0 0
        %677 = vmatpush1.bf16.msra.mxu0 0
        %678 = vmatprep.subr.bf16.mxu0 0
        %679 = vmatpush1.bf16.msra.mxu0 0
        %680 = vmatprep.subr.bf16.mxu0 0
        %681 = vmatpush1.bf16.msra.mxu0 0
        %682 = vmatprep.subr.bf16.mxu0 0
        %683 = vmatpush1.bf16.msra.mxu0 0
        %684 = vmatprep.subr.bf16.mxu0 0
        %685 = vmatpush1.bf16.msra.mxu0 0
        %686 = vmatprep.subr.bf16.mxu0 0
        %687 = vmatpush1.bf16.msra.mxu0 0
        %688 = vmatprep.subr.bf16.mxu0 0
        %689 = vmatpush1.bf16.msra.mxu0 0
        %690 = vmatprep.subr.bf16.mxu0 0
        %691 = vmatpush1.bf16.msra.mxu0 0
        %692 = vmatprep.subr.bf16.mxu0 0
        %693 = vmatpush1.bf16.msra.mxu0 0
        %694 = vmatprep.subr.bf16.mxu0 0
        %695 = vmatpush1.bf16.msra.mxu0 0
        %696 = vmatprep.mubr.bf16.mxu0 0
        %697 = vmatmul.mubr.bf16.gmra.mrb[0].mxu0 %v653
        %v698 = vpop.f32.mrb[0].mxu0
        %v699 = vadd.f32 0.0, %v698
        %v700 = vpop.f32.mrb[0].mxu0
        %v701 = vpop.f32.mrb[0].mxu0
        %v702 = vadd.f32 0.0, %v701
        %v703 = vpop.f32.mrb[0].mxu0
        %704 = vmatprep.mubr.bf16.mxu0 0
        %705 = vmatmul.mubr.bf16.gmra.mrb[0].mxu0 %v656
        %v706 = vpop.f32.mrb[0].mxu0
        %v707 = vadd.f32 0.0, %v706
        %v708 = vpop.f32.mrb[0].mxu0
        %v709 = vpop.f32.mrb[0].mxu0
        %v710 = vadd.f32 0.0, %v709
        %v711 = vpop.f32.mrb[0].mxu0
        %712 = vmatprep.mubr.bf16.mxu0 0
        %713 = vmatmul.mubr.bf16.gmra.mrb[0].mxu0 %v659
        %v714 = vpop.f32.mrb[0].mxu0
        %v715 = vadd.f32 0.0, %v714
        %v716 = vpop.f32.mrb[0].mxu0
        %v717 = vpop.f32.mrb[0].mxu0
        %v718 = vadd.f32 0.0, %v717
        %v719 = vpop.f32.mrb[0].mxu0
        %720 = vmatprep.mubr.bf16.mxu0 0
        %721 = vmatmul.mubr.bf16.gmra.mrb[0].mxu0 %v662
        %v722 = vpop.f32.mrb[0].mxu0
        %v723 = vadd.f32 0.0, %v722
        %v724 = vpop.f32.mrb[0].mxu0
        %v725 = vpop.f32.mrb[0].mxu0
        %v726 = vadd.f32 0.0, %v725
        %v727 = vpop.f32.mrb[0].mxu0
        %728 = vdwg.mxu0
        %v729 = vadd.f32 %v535, %v699
        %v730 = vadd.f32 %v538, %v702
        %v731 = vadd.f32 %v543, %v707
        %v732 = vadd.f32 %v546, %v710
        %v733 = vadd.f32 %v551, %v715
        %v734 = vadd.f32 %v554, %v718
        %v735 = vadd.f32 %v559, %v723
        %v736 = vadd.f32 %v562, %v726
        %s737 = scalar_lea.vmem %s206, 8
        %v738 = vld [vmem:[%s737] sm:$0xf]
        %v739 = vld [vmem:[%s737 + $0x8] sm:$0xf]
        %v740 = vld [vmem:[%s737 + $0x10] sm:$0xf]
        %v741 = vld [vmem:[%s737 + $0x18] sm:$0xf]
        %v742 = vld [vmem:[%s737 + $0x20] sm:$0xf]
        %v743 = vld [vmem:[%s737 + $0x28] sm:$0xf]
        %v744 = vld [vmem:[%s737 + $0x30] sm:$0xf]
        %v745 = vld [vmem:[%s737 + $0x38] sm:$0xf]
        %v746 = vld [vmem:[%s210 + $0x30] sm:$0xf]
        %v747 = vld [vmem:[%s210 + $0x34] sm:$0xf]
        %v748 = vld [vmem:[%s210 + $0x38] sm:$0xf]
        %v749 = vld [vmem:[%s210 + $0x3c] sm:$0xf]
        %v758 = vunpack.c.l.b16 %v738
        %v759 = vunpack.c.l.b16 %v739
        %v760 = vunpack.c.l.b16 %v740
        %v761 = vunpack.c.l.b16 %v741
        %v762 = vunpack.c.l.b16 %v742
        %v763 = vunpack.c.l.b16 %v743
        %v764 = vunpack.c.l.b16 %v744
        %v765 = vunpack.c.l.b16 %v745
        %v766 = vpack.c.b16 %v759, %v758
        %v767 = vpack.c.b16 %v761, %v760
        %v768 = vpack.c.b16 %v763, %v762
        %v769 = vpack.c.b16 %v765, %v764
        %v774 = vunpack.c.l.b16 %v746
        %v775 = vunpack.c.l.b16 %v747
        %v776 = vunpack.c.l.b16 %v748
        %v777 = vunpack.c.l.b16 %v749
        %v778 = vpack.c.b16 %v775, %v774
        %v779 = vpack.c.b16 %v777, %v776
        %v783 = vsel %vm378, %v766, 0
        %v786 = vsel %vm378, %v767, 0
        %v789 = vsel %vm378, %v768, 0
        %v792 = vsel %vm378, %v769, 0
        %794 = vmatprep.subr.bf16.mxu0 0
        %795 = vmatpush1.bf16.msra.mxu0 %v778
        %796 = vmatprep.subr.bf16.mxu0 0
        %797 = vmatpush1.bf16.msra.mxu0 %v779
        %798 = vmatprep.subr.bf16.mxu0 0
        %799 = vmatpush1.bf16.msra.mxu0 0
        %800 = vmatprep.subr.bf16.mxu0 0
        %801 = vmatpush1.bf16.msra.mxu0 0
        %802 = vmatprep.subr.bf16.mxu0 0
        %803 = vmatpush1.bf16.msra.mxu0 0
        %804 = vmatprep.subr.bf16.mxu0 0
        %805 = vmatpush1.bf16.msra.mxu0 0
        %806 = vmatprep.subr.bf16.mxu0 0
        %807 = vmatpush1.bf16.msra.mxu0 0
        %808 = vmatprep.subr.bf16.mxu0 0
        %809 = vmatpush1.bf16.msra.mxu0 0
        %810 = vmatprep.subr.bf16.mxu0 0
        %811 = vmatpush1.bf16.msra.mxu0 0
        %812 = vmatprep.subr.bf16.mxu0 0
        %813 = vmatpush1.bf16.msra.mxu0 0
        %814 = vmatprep.subr.bf16.mxu0 0
        %815 = vmatpush1.bf16.msra.mxu0 0
        %816 = vmatprep.subr.bf16.mxu0 0
        %817 = vmatpush1.bf16.msra.mxu0 0
        %818 = vmatprep.subr.bf16.mxu0 0
        %819 = vmatpush1.bf16.msra.mxu0 0
        %820 = vmatprep.subr.bf16.mxu0 0
        %821 = vmatpush1.bf16.msra.mxu0 0
        %822 = vmatprep.subr.bf16.mxu0 0
        %823 = vmatpush1.bf16.msra.mxu0 0
        %824 = vmatprep.subr.bf16.mxu0 0
        %825 = vmatpush1.bf16.msra.mxu0 0
        %826 = vmatprep.mubr.bf16.mxu0 0
        %827 = vmatmul.mubr.bf16.gmra.mrb[0].mxu0 %v783
        %v828 = vpop.f32.mrb[0].mxu0
        %v829 = vadd.f32 0.0, %v828
        %v830 = vpop.f32.mrb[0].mxu0
        %v831 = vpop.f32.mrb[0].mxu0
        %v832 = vadd.f32 0.0, %v831
        %v833 = vpop.f32.mrb[0].mxu0
        %834 = vmatprep.mubr.bf16.mxu0 0
        %835 = vmatmul.mubr.bf16.gmra.mrb[0].mxu0 %v786
        %v836 = vpop.f32.mrb[0].mxu0
        %v837 = vadd.f32 0.0, %v836
        %v838 = vpop.f32.mrb[0].mxu0
        %v839 = vpop.f32.mrb[0].mxu0
        %v840 = vadd.f32 0.0, %v839
        %v841 = vpop.f32.mrb[0].mxu0
        %842 = vmatprep.mubr.bf16.mxu0 0
        %843 = vmatmul.mubr.bf16.gmra.mrb[0].mxu0 %v789
        %v844 = vpop.f32.mrb[0].mxu0
        %v845 = vadd.f32 0.0, %v844
        %v846 = vpop.f32.mrb[0].mxu0
        %v847 = vpop.f32.mrb[0].mxu0
        %v848 = vadd.f32 0.0, %v847
        %v849 = vpop.f32.mrb[0].mxu0
        %850 = vmatprep.mubr.bf16.mxu0 0
        %851 = vmatmul.mubr.bf16.gmra.mrb[0].mxu0 %v792
        %v852 = vpop.f32.mrb[0].mxu0
        %v853 = vadd.f32 0.0, %v852
        %v854 = vpop.f32.mrb[0].mxu0
        %v855 = vpop.f32.mrb[0].mxu0
        %v856 = vadd.f32 0.0, %v855
        %v857 = vpop.f32.mrb[0].mxu0
        %858 = vdwg.mxu0
        %v859 = vadd.f32 %v729, %v829
        %v860 = vadd.f32 %v730, %v832
        %v861 = vadd.f32 %v731, %v837
        %v862 = vadd.f32 %v732, %v840
        %v863 = vadd.f32 %v733, %v845
        %v864 = vadd.f32 %v734, %v848
        %v865 = vadd.f32 %v735, %v853
        %v866 = vadd.f32 %v736, %v856
        %v867 = vld [vmem:[%s737] sm:$0xf]
        %v868 = vld [vmem:[%s737 + $0x4] sm:$0x1]
        %v869 = vld [vmem:[%s737 + $0x8] sm:$0xf]
        %v870 = vld [vmem:[%s737 + $0xc] sm:$0x1]
        %v871 = vld [vmem:[%s737 + $0x10] sm:$0xf]
        %v872 = vld [vmem:[%s737 + $0x14] sm:$0x1]
        %v873 = vld [vmem:[%s737 + $0x18] sm:$0xf]
        %v874 = vld [vmem:[%s737 + $0x1c] sm:$0x1]
        %v875 = vld [vmem:[%s737 + $0x20] sm:$0xf]
        %v876 = vld [vmem:[%s737 + $0x24] sm:$0x1]
        %v877 = vld [vmem:[%s737 + $0x28] sm:$0xf]
        %v878 = vld [vmem:[%s737 + $0x2c] sm:$0x1]
        %v879 = vld [vmem:[%s737 + $0x30] sm:$0xf]
        %v880 = vld [vmem:[%s737 + $0x34] sm:$0x1]
        %v881 = vld [vmem:[%s737 + $0x38] sm:$0xf]
        %v882 = vld [vmem:[%s737 + $0x3c] sm:$0x1]
        %v884 = vshrl.u32 %v867, 16
        %v886 = vrot.slane %v884, 4
        %v887 = vshll.u32 %v867, 16
        %v889 = vrot.slane %v887, 5
        %v890 = vor.u32 %v886, %v889
        %v891 = vrot.slane %v890, 4
        %v893 = vshll.u32 %v868, 16
        %v895 = vrot.slane %v893, 5
        %v896 = vsel %vm237, %v891, %v895
        %v898 = vshrl.u32 %v869, 16
        %v900 = vrot.slane %v898, 4
        %v901 = vshll.u32 %v869, 16
        %v903 = vrot.slane %v901, 5
        %v904 = vor.u32 %v900, %v903
        %v905 = vrot.slane %v904, 4
        %v907 = vshll.u32 %v870, 16
        %v909 = vrot.slane %v907, 5
        %v910 = vsel %vm237, %v905, %v909
        %v912 = vshrl.u32 %v871, 16
        %v914 = vrot.slane %v912, 4
        %v915 = vshll.u32 %v871, 16
        %v917 = vrot.slane %v915, 5
        %v918 = vor.u32 %v914, %v917
        %v919 = vrot.slane %v918, 4
        %v921 = vshll.u32 %v872, 16
        %v923 = vrot.slane %v921, 5
        %v924 = vsel %vm237, %v919, %v923
        %v926 = vshrl.u32 %v873, 16
        %v928 = vrot.slane %v926, 4
        %v929 = vshll.u32 %v873, 16
        %v931 = vrot.slane %v929, 5
        %v932 = vor.u32 %v928, %v931
        %v933 = vrot.slane %v932, 4
        %v935 = vshll.u32 %v874, 16
        %v937 = vrot.slane %v935, 5
        %v938 = vsel %vm237, %v933, %v937
        %v940 = vshrl.u32 %v875, 16
        %v942 = vrot.slane %v940, 4
        %v943 = vshll.u32 %v875, 16
        %v945 = vrot.slane %v943, 5
        %v946 = vor.u32 %v942, %v945
        %v947 = vrot.slane %v946, 4
        %v949 = vshll.u32 %v876, 16
        %v951 = vrot.slane %v949, 5
        %v952 = vsel %vm237, %v947, %v951
        %v954 = vshrl.u32 %v877, 16
        %v956 = vrot.slane %v954, 4
        %v957 = vshll.u32 %v877, 16
        %v959 = vrot.slane %v957, 5
        %v960 = vor.u32 %v956, %v959
        %v961 = vrot.slane %v960, 4
        %v963 = vshll.u32 %v878, 16
        %v965 = vrot.slane %v963, 5
        %v966 = vsel %vm237, %v961, %v965
        %v968 = vshrl.u32 %v879, 16
        %v970 = vrot.slane %v968, 4
        %v971 = vshll.u32 %v879, 16
        %v973 = vrot.slane %v971, 5
        %v974 = vor.u32 %v970, %v973
        %v975 = vrot.slane %v974, 4
        %v977 = vshll.u32 %v880, 16
        %v979 = vrot.slane %v977, 5
        %v980 = vsel %vm237, %v975, %v979
        %v982 = vshrl.u32 %v881, 16
        %v984 = vrot.slane %v982, 4
        %v985 = vshll.u32 %v881, 16
        %v987 = vrot.slane %v985, 5
        %v988 = vor.u32 %v984, %v987
        %v989 = vrot.slane %v988, 4
        %v991 = vshll.u32 %v882, 16
        %v993 = vrot.slane %v991, 5
        %v994 = vsel %vm237, %v989, %v993
        %v995 = vld [vmem:[%s210 + $0x40] sm:$0xf]
        %v996 = vld [vmem:[%s210 + $0x44] sm:$0xf]
        %v997 = vld [vmem:[%s210 + $0x48] sm:$0xf]
        %v998 = vld [vmem:[%s210 + $0x4c] sm:$0xf]
        %v999 = vunpack.c.l.b16 %v896
        %v1000 = vunpack.c.l.b16 %v910
        %v1001 = vunpack.c.l.b16 %v924
        %v1002 = vunpack.c.l.b16 %v938
        %v1003 = vunpack.c.l.b16 %v952
        %v1004 = vunpack.c.l.b16 %v966
        %v1005 = vunpack.c.l.b16 %v980
        %v1006 = vunpack.c.l.b16 %v994
        %v1007 = vpack.c.b16 %v1000, %v999
        %v1008 = vpack.c.b16 %v1002, %v1001
        %v1009 = vpack.c.b16 %v1004, %v1003
        %v1010 = vpack.c.b16 %v1006, %v1005
        %v1015 = vunpack.c.l.b16 %v995
        %v1016 = vunpack.c.l.b16 %v996
        %v1017 = vunpack.c.l.b16 %v997
        %v1018 = vunpack.c.l.b16 %v998
        %v1019 = vpack.c.b16 %v1016, %v1015
        %v1020 = vpack.c.b16 %v1018, %v1017
        %v1024 = vsel %vm378, %v1007, 0
        %v1027 = vsel %vm378, %v1008, 0
        %v1030 = vsel %vm378, %v1009, 0
        %v1033 = vsel %vm378, %v1010, 0
        %1035 = vmatprep.subr.bf16.mxu0 0
        %1036 = vmatpush1.bf16.msra.mxu0 %v1019
        %1037 = vmatprep.subr.bf16.mxu0 0
        %1038 = vmatpush1.bf16.msra.mxu0 %v1020
        %1039 = vmatprep.subr.bf16.mxu0 0
        %1040 = vmatpush1.bf16.msra.mxu0 0
        %1041 = vmatprep.subr.bf16.mxu0 0
        %1042 = vmatpush1.bf16.msra.mxu0 0
        %1043 = vmatprep.subr.bf16.mxu0 0
        %1044 = vmatpush1.bf16.msra.mxu0 0
        %1045 = vmatprep.subr.bf16.mxu0 0
        %1046 = vmatpush1.bf16.msra.mxu0 0
        %1047 = vmatprep.subr.bf16.mxu0 0
        %1048 = vmatpush1.bf16.msra.mxu0 0
        %1049 = vmatprep.subr.bf16.mxu0 0
        %1050 = vmatpush1.bf16.msra.mxu0 0
        %1051 = vmatprep.subr.bf16.mxu0 0
        %1052 = vmatpush1.bf16.msra.mxu0 0
        %1053 = vmatprep.subr.bf16.mxu0 0
        %1054 = vmatpush1.bf16.msra.mxu0 0
        %1055 = vmatprep.subr.bf16.mxu0 0
        %1056 = vmatpush1.bf16.msra.mxu0 0
        %1057 = vmatprep.subr.bf16.mxu0 0
        %1058 = vmatpush1.bf16.msra.mxu0 0
        %1059 = vmatprep.subr.bf16.mxu0 0
        %1060 = vmatpush1.bf16.msra.mxu0 0
        %1061 = vmatprep.subr.bf16.mxu0 0
        %1062 = vmatpush1.bf16.msra.mxu0 0
        %1063 = vmatprep.subr.bf16.mxu0 0
        %1064 = vmatpush1.bf16.msra.mxu0 0
        %1065 = vmatprep.subr.bf16.mxu0 0
        %1066 = vmatpush1.bf16.msra.mxu0 0
        %1067 = vmatprep.mubr.bf16.mxu0 0
        %1068 = vmatmul.mubr.bf16.gmra.mrb[0].mxu0 %v1024
        %v1069 = vpop.f32.mrb[0].mxu0
        %v1070 = vadd.f32 0.0, %v1069
        %v1071 = vpop.f32.mrb[0].mxu0
        %v1072 = vpop.f32.mrb[0].mxu0
        %v1073 = vadd.f32 0.0, %v1072
        %v1074 = vpop.f32.mrb[0].mxu0
        %1075 = vmatprep.mubr.bf16.mxu0 0
        %1076 = vmatmul.mubr.bf16.gmra.mrb[0].mxu0 %v1027
        %v1077 = vpop.f32.mrb[0].mxu0
        %v1078 = vadd.f32 0.0, %v1077
        %v1079 = vpop.f32.mrb[0].mxu0
        %v1080 = vpop.f32.mrb[0].mxu0
        %v1081 = vadd.f32 0.0, %v1080
        %v1082 = vpop.f32.mrb[0].mxu0
        %1083 = vmatprep.mubr.bf16.mxu0 0
        %1084 = vmatmul.mubr.bf16.gmra.mrb[0].mxu0 %v1030
        %v1085 = vpop.f32.mrb[0].mxu0
        %v1086 = vadd.f32 0.0, %v1085
        %v1087 = vpop.f32.mrb[0].mxu0
        %v1088 = vpop.f32.mrb[0].mxu0
        %v1089 = vadd.f32 0.0, %v1088
        %v1090 = vpop.f32.mrb[0].mxu0
        %1091 = vmatprep.mubr.bf16.mxu0 0
        %1092 = vmatmul.mubr.bf16.gmra.mrb[0].mxu0 %v1033
        %v1093 = vpop.f32.mrb[0].mxu0
        %v1094 = vadd.f32 0.0, %v1093
        %v1095 = vpop.f32.mrb[0].mxu0
        %v1096 = vpop.f32.mrb[0].mxu0
        %v1097 = vadd.f32 0.0, %v1096
        %v1098 = vpop.f32.mrb[0].mxu0
        %1099 = vdwg.mxu0
        %v1100 = vadd.f32 %v859, %v1070
        %v1101 = vadd.f32 %v860, %v1073
        %v1102 = vadd.f32 %v861, %v1078
        %v1103 = vadd.f32 %v862, %v1081
        %v1104 = vadd.f32 %v863, %v1086
        %v1105 = vadd.f32 %v864, %v1089
        %v1106 = vadd.f32 %v865, %v1094
        %v1107 = vadd.f32 %v866, %v1097
        %v1108 = vld [vmem:[%s737] sm:$0xe]
        %v1109 = vld [vmem:[%s737 + $0x8] sm:$0xe]
        %v1110 = vld [vmem:[%s737 + $0x10] sm:$0xe]
        %v1111 = vld [vmem:[%s737 + $0x18] sm:$0xe]
        %v1112 = vld [vmem:[%s737 + $0x20] sm:$0xe]
        %v1113 = vld [vmem:[%s737 + $0x28] sm:$0xe]
        %v1114 = vld [vmem:[%s737 + $0x30] sm:$0xe]
        %v1115 = vld [vmem:[%s737 + $0x38] sm:$0xe]
        %v1132 = vrot.slane %v1108, 5
        %v1133 = vrot.slane %v1132, 4
        %v1134 = vrot.slane %v868, 5
        %v1135 = vsel %vm591, %v1133, %v1134
        %v1136 = vrot.slane %v1109, 5
        %v1137 = vrot.slane %v1136, 4
        %v1138 = vrot.slane %v870, 5
        %v1139 = vsel %vm591, %v1137, %v1138
        %v1140 = vrot.slane %v1110, 5
        %v1141 = vrot.slane %v1140, 4
        %v1142 = vrot.slane %v872, 5
        %v1143 = vsel %vm591, %v1141, %v1142
        %v1144 = vrot.slane %v1111, 5
        %v1145 = vrot.slane %v1144, 4
        %v1146 = vrot.slane %v874, 5
        %v1147 = vsel %vm591, %v1145, %v1146
        %v1148 = vrot.slane %v1112, 5
        %v1149 = vrot.slane %v1148, 4
        %v1150 = vrot.slane %v876, 5
        %v1151 = vsel %vm591, %v1149, %v1150
        %v1152 = vrot.slane %v1113, 5
        %v1153 = vrot.slane %v1152, 4
        %v1154 = vrot.slane %v878, 5
        %v1155 = vsel %vm591, %v1153, %v1154
        %v1156 = vrot.slane %v1114, 5
        %v1157 = vrot.slane %v1156, 4
        %v1158 = vrot.slane %v880, 5
        %v1159 = vsel %vm591, %v1157, %v1158
        %v1160 = vrot.slane %v1115, 5
        %v1161 = vrot.slane %v1160, 4
        %v1162 = vrot.slane %v882, 5
        %v1163 = vsel %vm591, %v1161, %v1162
        %v1164 = vld [vmem:[%s210 + $0x50] sm:$0xf]
        %v1165 = vld [vmem:[%s210 + $0x54] sm:$0xf]
        %v1166 = vld [vmem:[%s210 + $0x58] sm:$0xf]
        %v1167 = vld [vmem:[%s210 + $0x5c] sm:$0xf]
        %v1168 = vunpack.c.l.b16 %v1135
        %v1169 = vunpack.c.l.b16 %v1139
        %v1170 = vunpack.c.l.b16 %v1143
        %v1171 = vunpack.c.l.b16 %v1147
        %v1172 = vunpack.c.l.b16 %v1151
        %v1173 = vunpack.c.l.b16 %v1155
        %v1174 = vunpack.c.l.b16 %v1159
        %v1175 = vunpack.c.l.b16 %v1163
        %v1176 = vpack.c.b16 %v1169, %v1168
        %v1177 = vpack.c.b16 %v1171, %v1170
        %v1178 = vpack.c.b16 %v1173, %v1172
        %v1179 = vpack.c.b16 %v1175, %v1174
        %v1184 = vunpack.c.l.b16 %v1164
        %v1185 = vunpack.c.l.b16 %v1165
        %v1186 = vunpack.c.l.b16 %v1166
        %v1187 = vunpack.c.l.b16 %v1167
        %v1188 = vpack.c.b16 %v1185, %v1184
        %v1189 = vpack.c.b16 %v1187, %v1186
        %v1193 = vsel %vm378, %v1176, 0
        %v1196 = vsel %vm378, %v1177, 0
        %v1199 = vsel %vm378, %v1178, 0
        %v1202 = vsel %vm378, %v1179, 0
        %1204 = vmatprep.subr.bf16.mxu0 0
        %1205 = vmatpush1.bf16.msra.mxu0 %v1188
        %1206 = vmatprep.subr.bf16.mxu0 0
        %1207 = vmatpush1.bf16.msra.mxu0 %v1189
        %1208 = vmatprep.subr.bf16.mxu0 0
        %1209 = vmatpush1.bf16.msra.mxu0 0
        %1210 = vmatprep.subr.bf16.mxu0 0
        %1211 = vmatpush1.bf16.msra.mxu0 0
        %1212 = vmatprep.subr.bf16.mxu0 0
        %1213 = vmatpush1.bf16.msra.mxu0 0
        %1214 = vmatprep.subr.bf16.mxu0 0
        %1215 = vmatpush1.bf16.msra.mxu0 0
        %1216 = vmatprep.subr.bf16.mxu0 0
        %1217 = vmatpush1.bf16.msra.mxu0 0
        %1218 = vmatprep.subr.bf16.mxu0 0
        %1219 = vmatpush1.bf16.msra.mxu0 0
        %1220 = vmatprep.subr.bf16.mxu0 0
        %1221 = vmatpush1.bf16.msra.mxu0 0
        %1222 = vmatprep.subr.bf16.mxu0 0
        %1223 = vmatpush1.bf16.msra.mxu0 0
        %1224 = vmatprep.subr.bf16.mxu0 0
        %1225 = vmatpush1.bf16.msra.mxu0 0
        %1226 = vmatprep.subr.bf16.mxu0 0
        %1227 = vmatpush1.bf16.msra.mxu0 0
        %1228 = vmatprep.subr.bf16.mxu0 0
        %1229 = vmatpush1.bf16.msra.mxu0 0
        %1230 = vmatprep.subr.bf16.mxu0 0
        %1231 = vmatpush1.bf16.msra.mxu0 0
        %1232 = vmatprep.subr.bf16.mxu0 0
        %1233 = vmatpush1.bf16.msra.mxu0 0
        %1234 = vmatprep.subr.bf16.mxu0 0
        %1235 = vmatpush1.bf16.msra.mxu0 0
        %1236 = vmatprep.mubr.bf16.mxu0 0
        %1237 = vmatmul.mubr.bf16.gmra.mrb[0].mxu0 %v1193
        %v1238 = vpop.f32.mrb[0].mxu0
        %v1239 = vadd.f32 0.0, %v1238
        %v1240 = vpop.f32.mrb[0].mxu0
        %v1241 = vpop.f32.mrb[0].mxu0
        %v1242 = vadd.f32 0.0, %v1241
        %v1243 = vpop.f32.mrb[0].mxu0
        %1244 = vmatprep.mubr.bf16.mxu0 0
        %1245 = vmatmul.mubr.bf16.gmra.mrb[0].mxu0 %v1196
        %v1246 = vpop.f32.mrb[0].mxu0
        %v1247 = vadd.f32 0.0, %v1246
        %v1248 = vpop.f32.mrb[0].mxu0
        %v1249 = vpop.f32.mrb[0].mxu0
        %v1250 = vadd.f32 0.0, %v1249
        %v1251 = vpop.f32.mrb[0].mxu0
        %1252 = vmatprep.mubr.bf16.mxu0 0
        %1253 = vmatmul.mubr.bf16.gmra.mrb[0].mxu0 %v1199
        %v1254 = vpop.f32.mrb[0].mxu0
        %v1255 = vadd.f32 0.0, %v1254
        %v1256 = vpop.f32.mrb[0].mxu0
        %v1257 = vpop.f32.mrb[0].mxu0
        %v1258 = vadd.f32 0.0, %v1257
        %v1259 = vpop.f32.mrb[0].mxu0
        %1260 = vmatprep.mubr.bf16.mxu0 0
        %1261 = vmatmul.mubr.bf16.gmra.mrb[0].mxu0 %v1202
        %v1262 = vpop.f32.mrb[0].mxu0
        %v1263 = vadd.f32 0.0, %v1262
        %v1264 = vpop.f32.mrb[0].mxu0
        %v1265 = vpop.f32.mrb[0].mxu0
        %v1266 = vadd.f32 0.0, %v1265
        %v1267 = vpop.f32.mrb[0].mxu0
        %1268 = vdwg.mxu0
        %v1269 = vadd.f32 %v1100, %v1239
        %v1270 = vadd.f32 %v1101, %v1242
        %v1271 = vadd.f32 %v1102, %v1247
        %v1272 = vadd.f32 %v1103, %v1250
        %v1273 = vadd.f32 %v1104, %v1255
        %v1274 = vadd.f32 %v1105, %v1258
        %v1275 = vadd.f32 %v1106, %v1263
        %v1276 = vadd.f32 %v1107, %v1266
        %s1277 = scalar_lea.vmem %s206, 16
        %v1278 = vld [vmem:[%s1277] sm:$0xf]
        %v1279 = vld [vmem:[%s1277 + $0x8] sm:$0xf]
        %v1280 = vld [vmem:[%s1277 + $0x10] sm:$0xf]
        %v1281 = vld [vmem:[%s1277 + $0x18] sm:$0xf]
        %v1282 = vld [vmem:[%s1277 + $0x20] sm:$0xf]
        %v1283 = vld [vmem:[%s1277 + $0x28] sm:$0xf]
        %v1284 = vld [vmem:[%s1277 + $0x30] sm:$0xf]
        %v1285 = vld [vmem:[%s1277 + $0x38] sm:$0xf]
        %v1286 = vld [vmem:[%s210 + $0x60] sm:$0xf]
        %v1287 = vld [vmem:[%s210 + $0x64] sm:$0xf]
        %v1288 = vld [vmem:[%s210 + $0x68] sm:$0xf]
        %v1289 = vld [vmem:[%s210 + $0x6c] sm:$0xf]
        %v1298 = vunpack.c.l.b16 %v1278
        %v1299 = vunpack.c.l.b16 %v1279
        %v1300 = vunpack.c.l.b16 %v1280
        %v1301 = vunpack.c.l.b16 %v1281
        %v1302 = vunpack.c.l.b16 %v1282
        %v1303 = vunpack.c.l.b16 %v1283
        %v1304 = vunpack.c.l.b16 %v1284
        %v1305 = vunpack.c.l.b16 %v1285
        %v1306 = vpack.c.b16 %v1299, %v1298
        %v1307 = vpack.c.b16 %v1301, %v1300
        %v1308 = vpack.c.b16 %v1303, %v1302
        %v1309 = vpack.c.b16 %v1305, %v1304
        %v1314 = vunpack.c.l.b16 %v1286
        %v1315 = vunpack.c.l.b16 %v1287
        %v1316 = vunpack.c.l.b16 %v1288
        %v1317 = vunpack.c.l.b16 %v1289
        %v1318 = vpack.c.b16 %v1315, %v1314
        %v1319 = vpack.c.b16 %v1317, %v1316
        %v1323 = vsel %vm378, %v1306, 0
        %v1326 = vsel %vm378, %v1307, 0
        %v1329 = vsel %vm378, %v1308, 0
        %v1332 = vsel %vm378, %v1309, 0
        %1334 = vmatprep.subr.bf16.mxu0 0
        %1335 = vmatpush1.bf16.msra.mxu0 %v1318
        %1336 = vmatprep.subr.bf16.mxu0 0
        %1337 = vmatpush1.bf16.msra.mxu0 %v1319
        %1338 = vmatprep.subr.bf16.mxu0 0
        %1339 = vmatpush1.bf16.msra.mxu0 0
        %1340 = vmatprep.subr.bf16.mxu0 0
        %1341 = vmatpush1.bf16.msra.mxu0 0
        %1342 = vmatprep.subr.bf16.mxu0 0
        %1343 = vmatpush1.bf16.msra.mxu0 0
        %1344 = vmatprep.subr.bf16.mxu0 0
        %1345 = vmatpush1.bf16.msra.mxu0 0
        %1346 = vmatprep.subr.bf16.mxu0 0
        %1347 = vmatpush1.bf16.msra.mxu0 0
        %1348 = vmatprep.subr.bf16.mxu0 0
        %1349 = vmatpush1.bf16.msra.mxu0 0
        %1350 = vmatprep.subr.bf16.mxu0 0
        %1351 = vmatpush1.bf16.msra.mxu0 0
        %1352 = vmatprep.subr.bf16.mxu0 0
        %1353 = vmatpush1.bf16.msra.mxu0 0
        %1354 = vmatprep.subr.bf16.mxu0 0
        %1355 = vmatpush1.bf16.msra.mxu0 0
        %1356 = vmatprep.subr.bf16.mxu0 0
        %1357 = vmatpush1.bf16.msra.mxu0 0
        %1358 = vmatprep.subr.bf16.mxu0 0
        %1359 = vmatpush1.bf16.msra.mxu0 0
        %1360 = vmatprep.subr.bf16.mxu0 0
        %1361 = vmatpush1.bf16.msra.mxu0 0
        %1362 = vmatprep.subr.bf16.mxu0 0
        %1363 = vmatpush1.bf16.msra.mxu0 0
        %1364 = vmatprep.subr.bf16.mxu0 0
        %1365 = vmatpush1.bf16.msra.mxu0 0
        %1366 = vmatprep.mubr.bf16.mxu0 0
        %1367 = vmatmul.mubr.bf16.gmra.mrb[0].mxu0 %v1323
        %v1368 = vpop.f32.mrb[0].mxu0
        %v1369 = vadd.f32 0.0, %v1368
        %v1370 = vpop.f32.mrb[0].mxu0
        %v1371 = vpop.f32.mrb[0].mxu0
        %v1372 = vadd.f32 0.0, %v1371
        %v1373 = vpop.f32.mrb[0].mxu0
        %1374 = vmatprep.mubr.bf16.mxu0 0
        %1375 = vmatmul.mubr.bf16.gmra.mrb[0].mxu0 %v1326
        %v1376 = vpop.f32.mrb[0].mxu0
        %v1377 = vadd.f32 0.0, %v1376
        %v1378 = vpop.f32.mrb[0].mxu0
        %v1379 = vpop.f32.mrb[0].mxu0
        %v1380 = vadd.f32 0.0, %v1379
        %v1381 = vpop.f32.mrb[0].mxu0
        %1382 = vmatprep.mubr.bf16.mxu0 0
        %1383 = vmatmul.mubr.bf16.gmra.mrb[0].mxu0 %v1329
        %v1384 = vpop.f32.mrb[0].mxu0
        %v1385 = vadd.f32 0.0, %v1384
        %v1386 = vpop.f32.mrb[0].mxu0
        %v1387 = vpop.f32.mrb[0].mxu0
        %v1388 = vadd.f32 0.0, %v1387
        %v1389 = vpop.f32.mrb[0].mxu0
        %1390 = vmatprep.mubr.bf16.mxu0 0
        %1391 = vmatmul.mubr.bf16.gmra.mrb[0].mxu0 %v1332
        %v1392 = vpop.f32.mrb[0].mxu0
        %v1393 = vadd.f32 0.0, %v1392
        %v1394 = vpop.f32.mrb[0].mxu0
        %v1395 = vpop.f32.mrb[0].mxu0
        %v1396 = vadd.f32 0.0, %v1395
        %v1397 = vpop.f32.mrb[0].mxu0
        %1398 = vdwg.mxu0
        %v1399 = vadd.f32 %v1269, %v1369
        %v1400 = vadd.f32 %v1270, %v1372
        %v1401 = vadd.f32 %v1271, %v1377
        %v1402 = vadd.f32 %v1272, %v1380
        %v1403 = vadd.f32 %v1273, %v1385
        %v1404 = vadd.f32 %v1274, %v1388
        %v1405 = vadd.f32 %v1275, %v1393
        %v1406 = vadd.f32 %v1276, %v1396
        %v1407 = vld [vmem:[%s1277] sm:$0xf]
        %v1408 = vld [vmem:[%s1277 + $0x4] sm:$0x1]
        %v1409 = vld [vmem:[%s1277 + $0x8] sm:$0xf]
        %v1410 = vld [vmem:[%s1277 + $0xc] sm:$0x1]
        %v1411 = vld [vmem:[%s1277 + $0x10] sm:$0xf]
        %v1412 = vld [vmem:[%s1277 + $0x14] sm:$0x1]
        %v1413 = vld [vmem:[%s1277 + $0x18] sm:$0xf]
        %v1414 = vld [vmem:[%s1277 + $0x1c] sm:$0x1]
        %v1415 = vld [vmem:[%s1277 + $0x20] sm:$0xf]
        %v1416 = vld [vmem:[%s1277 + $0x24] sm:$0x1]
        %v1417 = vld [vmem:[%s1277 + $0x28] sm:$0xf]
        %v1418 = vld [vmem:[%s1277 + $0x2c] sm:$0x1]
        %v1419 = vld [vmem:[%s1277 + $0x30] sm:$0xf]
        %v1420 = vld [vmem:[%s1277 + $0x34] sm:$0x1]
        %v1421 = vld [vmem:[%s1277 + $0x38] sm:$0xf]
        %v1422 = vld [vmem:[%s1277 + $0x3c] sm:$0x1]
        %v1424 = vshrl.u32 %v1407, 16
        %v1426 = vrot.slane %v1424, 4
        %v1427 = vshll.u32 %v1407, 16
        %v1429 = vrot.slane %v1427, 5
        %v1430 = vor.u32 %v1426, %v1429
        %v1431 = vrot.slane %v1430, 4
        %v1433 = vshll.u32 %v1408, 16
        %v1435 = vrot.slane %v1433, 5
        %v1436 = vsel %vm237, %v1431, %v1435
        %v1438 = vshrl.u32 %v1409, 16
        %v1440 = vrot.slane %v1438, 4
        %v1441 = vshll.u32 %v1409, 16
        %v1443 = vrot.slane %v1441, 5
        %v1444 = vor.u32 %v1440, %v1443
        %v1445 = vrot.slane %v1444, 4
        %v1447 = vshll.u32 %v1410, 16
        %v1449 = vrot.slane %v1447, 5
        %v1450 = vsel %vm237, %v1445, %v1449
        %v1452 = vshrl.u32 %v1411, 16
        %v1454 = vrot.slane %v1452, 4
        %v1455 = vshll.u32 %v1411, 16
        %v1457 = vrot.slane %v1455, 5
        %v1458 = vor.u32 %v1454, %v1457
        %v1459 = vrot.slane %v1458, 4
        %v1461 = vshll.u32 %v1412, 16
        %v1463 = vrot.slane %v1461, 5
        %v1464 = vsel %vm237, %v1459, %v1463
        %v1466 = vshrl.u32 %v1413, 16
        %v1468 = vrot.slane %v1466, 4
        %v1469 = vshll.u32 %v1413, 16
        %v1471 = vrot.slane %v1469, 5
        %v1472 = vor.u32 %v1468, %v1471
        %v1473 = vrot.slane %v1472, 4
        %v1475 = vshll.u32 %v1414, 16
        %v1477 = vrot.slane %v1475, 5
        %v1478 = vsel %vm237, %v1473, %v1477
        %v1480 = vshrl.u32 %v1415, 16
        %v1482 = vrot.slane %v1480, 4
        %v1483 = vshll.u32 %v1415, 16
        %v1485 = vrot.slane %v1483, 5
        %v1486 = vor.u32 %v1482, %v1485
        %v1487 = vrot.slane %v1486, 4
        %v1489 = vshll.u32 %v1416, 16
        %v1491 = vrot.slane %v1489, 5
        %v1492 = vsel %vm237, %v1487, %v1491
        %v1494 = vshrl.u32 %v1417, 16
        %v1496 = vrot.slane %v1494, 4
        %v1497 = vshll.u32 %v1417, 16
        %v1499 = vrot.slane %v1497, 5
        %v1500 = vor.u32 %v1496, %v1499
        %v1501 = vrot.slane %v1500, 4
        %v1503 = vshll.u32 %v1418, 16
        %v1505 = vrot.slane %v1503, 5
        %v1506 = vsel %vm237, %v1501, %v1505
        %v1508 = vshrl.u32 %v1419, 16
        %v1510 = vrot.slane %v1508, 4
        %v1511 = vshll.u32 %v1419, 16
        %v1513 = vrot.slane %v1511, 5
        %v1514 = vor.u32 %v1510, %v1513
        %v1515 = vrot.slane %v1514, 4
        %v1517 = vshll.u32 %v1420, 16
        %v1519 = vrot.slane %v1517, 5
        %v1520 = vsel %vm237, %v1515, %v1519
        %v1522 = vshrl.u32 %v1421, 16
        %v1524 = vrot.slane %v1522, 4
        %v1525 = vshll.u32 %v1421, 16
        %v1527 = vrot.slane %v1525, 5
        %v1528 = vor.u32 %v1524, %v1527
        %v1529 = vrot.slane %v1528, 4
        %v1531 = vshll.u32 %v1422, 16
        %v1533 = vrot.slane %v1531, 5
        %v1534 = vsel %vm237, %v1529, %v1533
        %v1535 = vld [vmem:[%s210 + $0x70] sm:$0xf]
        %v1536 = vld [vmem:[%s210 + $0x74] sm:$0xf]
        %v1537 = vld [vmem:[%s210 + $0x78] sm:$0xf]
        %v1538 = vld [vmem:[%s210 + $0x7c] sm:$0xf]
        %v1539 = vunpack.c.l.b16 %v1436
        %v1540 = vunpack.c.l.b16 %v1450
        %v1541 = vunpack.c.l.b16 %v1464
        %v1542 = vunpack.c.l.b16 %v1478
        %v1543 = vunpack.c.l.b16 %v1492
        %v1544 = vunpack.c.l.b16 %v1506
        %v1545 = vunpack.c.l.b16 %v1520
        %v1546 = vunpack.c.l.b16 %v1534
        %v1547 = vpack.c.b16 %v1540, %v1539
        %v1548 = vpack.c.b16 %v1542, %v1541
        %v1549 = vpack.c.b16 %v1544, %v1543
        %v1550 = vpack.c.b16 %v1546, %v1545
        %v1555 = vunpack.c.l.b16 %v1535
        %v1556 = vunpack.c.l.b16 %v1536
        %v1557 = vunpack.c.l.b16 %v1537
        %v1558 = vunpack.c.l.b16 %v1538
        %v1559 = vpack.c.b16 %v1556, %v1555
        %v1560 = vpack.c.b16 %v1558, %v1557
        %v1564 = vsel %vm378, %v1547, 0
        %v1567 = vsel %vm378, %v1548, 0
        %v1570 = vsel %vm378, %v1549, 0
        %v1573 = vsel %vm378, %v1550, 0
        %1575 = vmatprep.subr.bf16.mxu0 0
        %1576 = vmatpush1.bf16.msra.mxu0 %v1559
        %1577 = vmatprep.subr.bf16.mxu0 0
        %1578 = vmatpush1.bf16.msra.mxu0 %v1560
        %1579 = vmatprep.subr.bf16.mxu0 0
        %1580 = vmatpush1.bf16.msra.mxu0 0
        %1581 = vmatprep.subr.bf16.mxu0 0
        %1582 = vmatpush1.bf16.msra.mxu0 0
        %1583 = vmatprep.subr.bf16.mxu0 0
        %1584 = vmatpush1.bf16.msra.mxu0 0
        %1585 = vmatprep.subr.bf16.mxu0 0
        %1586 = vmatpush1.bf16.msra.mxu0 0
        %1587 = vmatprep.subr.bf16.mxu0 0
        %1588 = vmatpush1.bf16.msra.mxu0 0
        %1589 = vmatprep.subr.bf16.mxu0 0
        %1590 = vmatpush1.bf16.msra.mxu0 0
        %1591 = vmatprep.subr.bf16.mxu0 0
        %1592 = vmatpush1.bf16.msra.mxu0 0
        %1593 = vmatprep.subr.bf16.mxu0 0
        %1594 = vmatpush1.bf16.msra.mxu0 0
        %1595 = vmatprep.subr.bf16.mxu0 0
        %1596 = vmatpush1.bf16.msra.mxu0 0
        %1597 = vmatprep.subr.bf16.mxu0 0
        %1598 = vmatpush1.bf16.msra.mxu0 0
        %1599 = vmatprep.subr.bf16.mxu0 0
        %1600 = vmatpush1.bf16.msra.mxu0 0
        %1601 = vmatprep.subr.bf16.mxu0 0
        %1602 = vmatpush1.bf16.msra.mxu0 0
        %1603 = vmatprep.subr.bf16.mxu0 0
        %1604 = vmatpush1.bf16.msra.mxu0 0
        %1605 = vmatprep.subr.bf16.mxu0 0
        %1606 = vmatpush1.bf16.msra.mxu0 0
        %1607 = vmatprep.mubr.bf16.mxu0 0
        %1608 = vmatmul.mubr.bf16.gmra.mrb[0].mxu0 %v1564
        %v1609 = vpop.f32.mrb[0].mxu0
        %v1610 = vadd.f32 0.0, %v1609
        %v1611 = vpop.f32.mrb[0].mxu0
        %v1612 = vpop.f32.mrb[0].mxu0
        %v1613 = vadd.f32 0.0, %v1612
        %v1614 = vpop.f32.mrb[0].mxu0
        %1615 = vmatprep.mubr.bf16.mxu0 0
        %1616 = vmatmul.mubr.bf16.gmra.mrb[0].mxu0 %v1567
        %v1617 = vpop.f32.mrb[0].mxu0
        %v1618 = vadd.f32 0.0, %v1617
        %v1619 = vpop.f32.mrb[0].mxu0
        %v1620 = vpop.f32.mrb[0].mxu0
        %v1621 = vadd.f32 0.0, %v1620
        %v1622 = vpop.f32.mrb[0].mxu0
        %1623 = vmatprep.mubr.bf16.mxu0 0
        %1624 = vmatmul.mubr.bf16.gmra.mrb[0].mxu0 %v1570
        %v1625 = vpop.f32.mrb[0].mxu0
        %v1626 = vadd.f32 0.0, %v1625
        %v1627 = vpop.f32.mrb[0].mxu0
        %v1628 = vpop.f32.mrb[0].mxu0
        %v1629 = vadd.f32 0.0, %v1628
        %v1630 = vpop.f32.mrb[0].mxu0
        %1631 = vmatprep.mubr.bf16.mxu0 0
        %1632 = vmatmul.mubr.bf16.gmra.mrb[0].mxu0 %v1573
        %v1633 = vpop.f32.mrb[0].mxu0
        %v1634 = vadd.f32 0.0, %v1633
        %v1635 = vpop.f32.mrb[0].mxu0
        %v1636 = vpop.f32.mrb[0].mxu0
        %v1637 = vadd.f32 0.0, %v1636
        %v1638 = vpop.f32.mrb[0].mxu0
        %1639 = vdwg.mxu0
        %v1640 = vadd.f32 %v1399, %v1610
        %v1641 = vadd.f32 %v1400, %v1613
        %v1642 = vadd.f32 %v1401, %v1618
        %v1643 = vadd.f32 %v1402, %v1621
        %v1644 = vadd.f32 %v1403, %v1626
        %v1645 = vadd.f32 %v1404, %v1629
        %v1646 = vadd.f32 %v1405, %v1634
        %v1647 = vadd.f32 %v1406, %v1637
        %v1648 = vld [vmem:[%s1277] sm:$0xe]
        %v1649 = vld [vmem:[%s1277 + $0x8] sm:$0xe]
        %v1650 = vld [vmem:[%s1277 + $0x10] sm:$0xe]
        %v1651 = vld [vmem:[%s1277 + $0x18] sm:$0xe]
        %v1652 = vld [vmem:[%s1277 + $0x20] sm:$0xe]
        %v1653 = vld [vmem:[%s1277 + $0x28] sm:$0xe]
        %v1654 = vld [vmem:[%s1277 + $0x30] sm:$0xe]
        %v1655 = vld [vmem:[%s1277 + $0x38] sm:$0xe]
        %v1672 = vrot.slane %v1648, 5
        %v1673 = vrot.slane %v1672, 4
        %v1674 = vrot.slane %v1408, 5
        %v1675 = vsel %vm591, %v1673, %v1674
        %v1676 = vrot.slane %v1649, 5
        %v1677 = vrot.slane %v1676, 4
        %v1678 = vrot.slane %v1410, 5
        %v1679 = vsel %vm591, %v1677, %v1678
        %v1680 = vrot.slane %v1650, 5
        %v1681 = vrot.slane %v1680, 4
        %v1682 = vrot.slane %v1412, 5
        %v1683 = vsel %vm591, %v1681, %v1682
        %v1684 = vrot.slane %v1651, 5
        %v1685 = vrot.slane %v1684, 4
        %v1686 = vrot.slane %v1414, 5
        %v1687 = vsel %vm591, %v1685, %v1686
        %v1688 = vrot.slane %v1652, 5
        %v1689 = vrot.slane %v1688, 4
        %v1690 = vrot.slane %v1416, 5
        %v1691 = vsel %vm591, %v1689, %v1690
        %v1692 = vrot.slane %v1653, 5
        %v1693 = vrot.slane %v1692, 4
        %v1694 = vrot.slane %v1418, 5
        %v1695 = vsel %vm591, %v1693, %v1694
        %v1696 = vrot.slane %v1654, 5
        %v1697 = vrot.slane %v1696, 4
        %v1698 = vrot.slane %v1420, 5
        %v1699 = vsel %vm591, %v1697, %v1698
        %v1700 = vrot.slane %v1655, 5
        %v1701 = vrot.slane %v1700, 4
        %v1702 = vrot.slane %v1422, 5
        %v1703 = vsel %vm591, %v1701, %v1702
        %v1704 = vld [vmem:[%s210 + $0x80] sm:$0xf]
        %v1705 = vld [vmem:[%s210 + $0x84] sm:$0xf]
        %v1706 = vld [vmem:[%s210 + $0x88] sm:$0xf]
        %v1707 = vld [vmem:[%s210 + $0x8c] sm:$0xf]
        %v1708 = vunpack.c.l.b16 %v1675
        %v1709 = vunpack.c.l.b16 %v1679
        %v1710 = vunpack.c.l.b16 %v1683
        %v1711 = vunpack.c.l.b16 %v1687
        %v1712 = vunpack.c.l.b16 %v1691
        %v1713 = vunpack.c.l.b16 %v1695
        %v1714 = vunpack.c.l.b16 %v1699
        %v1715 = vunpack.c.l.b16 %v1703
        %v1716 = vpack.c.b16 %v1709, %v1708
        %v1717 = vpack.c.b16 %v1711, %v1710
        %v1718 = vpack.c.b16 %v1713, %v1712
        %v1719 = vpack.c.b16 %v1715, %v1714
        %v1724 = vunpack.c.l.b16 %v1704
        %v1725 = vunpack.c.l.b16 %v1705
        %v1726 = vunpack.c.l.b16 %v1706
        %v1727 = vunpack.c.l.b16 %v1707
        %v1728 = vpack.c.b16 %v1725, %v1724
        %v1729 = vpack.c.b16 %v1727, %v1726
        %v1733 = vsel %vm378, %v1716, 0
        %v1736 = vsel %vm378, %v1717, 0
        %v1739 = vsel %vm378, %v1718, 0
        %v1742 = vsel %vm378, %v1719, 0
        %1744 = vmatprep.subr.bf16.mxu0 0
        %1745 = vmatpush1.bf16.msra.mxu0 %v1728
        %1746 = vmatprep.subr.bf16.mxu0 0
        %1747 = vmatpush1.bf16.msra.mxu0 %v1729
        %1748 = vmatprep.subr.bf16.mxu0 0
        %1749 = vmatpush1.bf16.msra.mxu0 0
        %1750 = vmatprep.subr.bf16.mxu0 0
        %1751 = vmatpush1.bf16.msra.mxu0 0
        %1752 = vmatprep.subr.bf16.mxu0 0
        %1753 = vmatpush1.bf16.msra.mxu0 0
        %1754 = vmatprep.subr.bf16.mxu0 0
        %1755 = vmatpush1.bf16.msra.mxu0 0
        %1756 = vmatprep.subr.bf16.mxu0 0
        %1757 = vmatpush1.bf16.msra.mxu0 0
        %1758 = vmatprep.subr.bf16.mxu0 0
        %1759 = vmatpush1.bf16.msra.mxu0 0
        %1760 = vmatprep.subr.bf16.mxu0 0
        %1761 = vmatpush1.bf16.msra.mxu0 0
        %1762 = vmatprep.subr.bf16.mxu0 0
        %1763 = vmatpush1.bf16.msra.mxu0 0
        %1764 = vmatprep.subr.bf16.mxu0 0
        %1765 = vmatpush1.bf16.msra.mxu0 0
        %1766 = vmatprep.subr.bf16.mxu0 0
        %1767 = vmatpush1.bf16.msra.mxu0 0
        %1768 = vmatprep.subr.bf16.mxu0 0
        %1769 = vmatpush1.bf16.msra.mxu0 0
        %1770 = vmatprep.subr.bf16.mxu0 0
        %1771 = vmatpush1.bf16.msra.mxu0 0
        %1772 = vmatprep.subr.bf16.mxu0 0
        %1773 = vmatpush1.bf16.msra.mxu0 0
        %1774 = vmatprep.subr.bf16.mxu0 0
        %1775 = vmatpush1.bf16.msra.mxu0 0
        %1776 = vmatprep.mubr.bf16.mxu0 0
        %1777 = vmatmul.mubr.bf16.gmra.mrb[0].mxu0 %v1733
        %v1778 = vpop.f32.mrb[0].mxu0
        %v1779 = vadd.f32 0.0, %v1778
        %v1780 = vpop.f32.mrb[0].mxu0
        %v1781 = vpop.f32.mrb[0].mxu0
        %v1782 = vadd.f32 0.0, %v1781
        %v1783 = vpop.f32.mrb[0].mxu0
        %1784 = vmatprep.mubr.bf16.mxu0 0
        %1785 = vmatmul.mubr.bf16.gmra.mrb[0].mxu0 %v1736
        %v1786 = vpop.f32.mrb[0].mxu0
        %v1787 = vadd.f32 0.0, %v1786
        %v1788 = vpop.f32.mrb[0].mxu0
        %v1789 = vpop.f32.mrb[0].mxu0
        %v1790 = vadd.f32 0.0, %v1789
        %v1791 = vpop.f32.mrb[0].mxu0
        %1792 = vmatprep.mubr.bf16.mxu0 0
        %1793 = vmatmul.mubr.bf16.gmra.mrb[0].mxu0 %v1739
        %v1794 = vpop.f32.mrb[0].mxu0
        %v1795 = vadd.f32 0.0, %v1794
        %v1796 = vpop.f32.mrb[0].mxu0
        %v1797 = vpop.f32.mrb[0].mxu0
        %v1798 = vadd.f32 0.0, %v1797
        %v1799 = vpop.f32.mrb[0].mxu0
        %1800 = vmatprep.mubr.bf16.mxu0 0
        %1801 = vmatmul.mubr.bf16.gmra.mrb[0].mxu0 %v1742
        %v1802 = vpop.f32.mrb[0].mxu0
        %v1803 = vadd.f32 0.0, %v1802
        %v1804 = vpop.f32.mrb[0].mxu0
        %v1805 = vpop.f32.mrb[0].mxu0
        %v1806 = vadd.f32 0.0, %v1805
        %v1807 = vpop.f32.mrb[0].mxu0
        %1808 = vdwg.mxu0
        %v1809 = vadd.f32 %v1640, %v1779
        %v1810 = vadd.f32 %v1641, %v1782
        %v1811 = vadd.f32 %v1642, %v1787
        %v1812 = vadd.f32 %v1643, %v1790
        %v1813 = vadd.f32 %v1644, %v1795
        %v1814 = vadd.f32 %v1645, %v1798
        %v1815 = vadd.f32 %v1646, %v1803
        %v1816 = vadd.f32 %v1647, %v1806
        %v1817 = vld [vmem:[%s213] sm:$0x1]
        %v1819 = vlaneseq
        %v1820 = vshrl.u32 %v1819, 7
        %v1821 = vsub.s32 0, %v1820
        %v1822 = vrot.slane %v1817, %v1821
        %v1824 = vadd.f32 %v1809, %v1822
        %v1825 = vadd.f32 %v1810, %v1822
        %v1826 = vadd.f32 %v1811, %v1822
        %v1827 = vadd.f32 %v1812, %v1822
        %v1828 = vadd.f32 %v1813, %v1822
        %v1829 = vadd.f32 %v1814, %v1822
        %v1830 = vadd.f32 %v1815, %v1822
        %v1831 = vadd.f32 %v1816, %v1822
        %vm1832 = vcmp.ge.f32.partialorder %v1824, 0.0
        %vm1833 = vcmp.ge.f32.partialorder %v1825, 0.0
        %vm1834 = vcmp.ge.f32.partialorder %v1826, 0.0
        %vm1835 = vcmp.ge.f32.partialorder %v1827, 0.0
        %vm1836 = vcmp.ge.f32.partialorder %v1828, 0.0
        %vm1837 = vcmp.ge.f32.partialorder %v1829, 0.0
        %vm1838 = vcmp.ge.f32.partialorder %v1830, 0.0
        %vm1839 = vcmp.ge.f32.partialorder %v1831, 0.0
        %v1840 = vmul.f32 %v1824, 0.01
        %v1841 = vmul.f32 %v1825, 0.01
        %v1842 = vmul.f32 %v1826, 0.01
        %v1843 = vmul.f32 %v1827, 0.01
        %v1844 = vmul.f32 %v1828, 0.01
        %v1845 = vmul.f32 %v1829, 0.01
        %v1846 = vmul.f32 %v1830, 0.01
        %v1847 = vmul.f32 %v1831, 0.01
        %v1848 = vsel %vm1832, %v1824, %v1840
        %v1849 = vsel %vm1833, %v1825, %v1841
        %v1850 = vsel %vm1834, %v1826, %v1842
        %v1851 = vsel %vm1835, %v1827, %v1843
        %v1852 = vsel %vm1836, %v1828, %v1844
        %v1853 = vsel %vm1837, %v1829, %v1845
        %v1854 = vsel %vm1838, %v1830, %v1846
        %v1855 = vsel %vm1839, %v1831, %v1847
        %v1856 = vpack.c.bf16 %v1848, %v1848
        %v1857 = vpack.c.bf16 %v1849, %v1849
        %v1858 = vpack.c.bf16 %v1850, %v1850
        %v1859 = vpack.c.bf16 %v1851, %v1851
        %v1860 = vpack.c.bf16 %v1852, %v1852
        %v1861 = vpack.c.bf16 %v1853, %v1853
        %v1862 = vpack.c.bf16 %v1854, %v1854
        %v1863 = vpack.c.bf16 %v1855, %v1855
        %vm1864 = vcmask 125952
        %1865 = vst.msk [vmem:[%s201] sm:$0xf] %vm1864, %v1856
        %1866 = vst.msk [vmem:[%s201 + $0x4] sm:$0xf] %vm1864, %v1857
        %1867 = vst.msk [vmem:[%s201 + $0x8] sm:$0xf] %vm1864, %v1858
        %1868 = vst.msk [vmem:[%s201 + $0xc] sm:$0xf] %vm1864, %v1859
        %1869 = vst.msk [vmem:[%s201 + $0x10] sm:$0xf] %vm1864, %v1860
        %1870 = vst.msk [vmem:[%s201 + $0x14] sm:$0xf] %vm1864, %v1861
        %1871 = vst.msk [vmem:[%s201 + $0x18] sm:$0xf] %vm1864, %v1862
        %1872 = vst.msk [vmem:[%s201 + $0x1c] sm:$0xf] %vm1864, %v1863
        %s1873 = sand.u32 %s117, 1
        %s1874 = scalar_lea.sflag [#allocation3], %s1873
        %s1875 = sand.u32 %s117, 1
        %s1876 = smul.addr %s1875, 32
        %s1877 = scalar_lea.vmem [#allocation2], %s1876
        // Predicated region
        $region33: #{tpu_custom_call.1} parent=31 // pred_check
          %p1878 = pneg %p127
        $region34: #{tpu_custom_call.1} parent=31 // pred_check_branch
          %1880 = sbr.rel (%p1878) target = $region36
        $region35: #{tpu_custom_call.1} parent=31 // pred_region
          %s1882 = ssub.s32 512, 512
          %1883 = vsyncadd %s1874, %s1882
          %s1884 = smul.addr %s21, 8
          %s1885 = sadd.s32 %s22, %s1884
          %s1886 = smul.addr %s1885, 64
          %s1887 = scalar_lea.hbm %s3, %s1886
          %s1888 = sshll.u32 %s1877, 4
          %s1889 = int_to_ptr.vmem [resolvable:$true] %s1888
          %1894 = dma.vmem_to_hbm [thread:$0]  %s1889, 512, %s1887, %s1874, 64, 64, 4
        $region36: #{tpu_custom_call.1} parent=31 // pred_fallthru
          _
      $region32: #{tpu_custom_call.1} parent=5 // pred_fallthru
        _
      %p1895 = scmp.le.s32.totalorder 2, %s12
      // Predicated region
      $region37: #{tpu_custom_call.1} parent=5 // pred_check
        %p1896 = pneg %p1895
      $region38: #{tpu_custom_call.1} parent=5 // pred_check_branch
        %1898 = sbr.rel (%p1896) target = $region40
      $region39: #{tpu_custom_call.1} parent=5 // pred_region
        %s1899 = ssub.s32 %s12, 2
        // Predicated region
        $region41: #{tpu_custom_call.1} parent=39 // pred_check
          %p1900 = pneg %p133
        $region42: #{tpu_custom_call.1} parent=39 // pred_check_branch
          %1902 = sbr.rel (%p1900) target = $region44
        $region43: #{tpu_custom_call.1} parent=39 // pred_region
          %s1903 = sand.u32 %s118, 1
          %s1904 = scalar_lea.sflag [#allocation3], %s1903
          %s1905 = sand.u32 %s118, 1
          %s1906 = smul.addr %s1905, 32
          %s1907 = scalar_lea.vmem [#allocation2], %s1906
          %1908 = dma.done %s1904, 512
        $region44: #{tpu_custom_call.1} parent=39 // pred_fallthru
          _
      $region40: #{tpu_custom_call.1} parent=5 // pred_fallthru
        _
    $region6: #{tpu_custom_call.1} parent=1 // loop_footer
      %s16 = sadd.s32 1, %s12
    $region7: #{tpu_custom_call.1} parent=1 // loop_footer_branch
      %11 = sbr.rel target = $region3
    $region8: #{tpu_custom_call.1} parent=1 // loop_exit
      _
    %1909 = vsyncpa [#allocation3], 1
    %s1910 = scalar_lea.sflag [#allocation3], 1
    %1911 = vsyncpa %s1910, 1

</llo_original>
